<compile_context>
chip_gen: v6e
topology: v6e:2x2x1
jax: 0.10.0
libtpu: 0.0.40
codegen_flags: <defaults>
</compile_context>

<pallas_src>
import functools

import jax
import jax.numpy as jnp
from jax.experimental import pallas as pl
from jax.experimental.pallas import tpu as pltpu


def _layer_norm(v, w, b, eps=1e-5):
    # LayerNorm in fp32 (matches the LayerNorm subclass casting to fp32).
    v32 = v.astype(jnp.float32)
    mu = jnp.mean(v32, axis=-1, keepdims=True)
    var = jnp.mean((v32 - mu) ** 2, axis=-1, keepdims=True)
    return (v32 - mu) * jax.lax.rsqrt(var + eps) * w + b


def _block_kernel(x_ref, mask_ref,
                  ln1w_ref, ln1b_ref,
                  w_in_ref, b_in_ref,
                  w_out_ref, b_out_ref,
                  ln2w_ref, ln2b_ref,
                  w_fc_ref, b_fc_ref,
                  w_pj_ref, b_pj_ref,
                  o_ref,
                  attn_slab,              # VMEM scratch (Bt*L, D) bf16
                  *, n_head, mlp_chunk):
    Bt, L, D = x_ref.shape
    hd = D // n_head
    M = Bt * L

    x2d = x_ref[...].reshape(M, D)                       # fp32 residual stream

    # ---- ln_1 + multi-head self-attention ----
    x_ln = _layer_norm(x2d, ln1w_ref[...], ln1b_ref[...])
    # bf16 MXU matmul, fp32 accumulate.  Q rows of w_in / b_in already carry
    # the 1/sqrt(head_dim) scale (folded on the host).
    qkv = jnp.dot(x_ln.astype(jnp.bfloat16), w_in_ref[...],
                  preferred_element_type=jnp.float32) + b_in_ref[...]
    q = qkv[:, 0 * D:1 * D].reshape(Bt, L, D).astype(jnp.bfloat16)
    k = qkv[:, 1 * D:2 * D].reshape(Bt, L, D).astype(jnp.bfloat16)
    v = qkv[:, 2 * D:3 * D].reshape(Bt, L, D).astype(jnp.bfloat16)

    mask = mask_ref[...]                                  # additive (L, L) fp32

    # Per-head attention (softmax fp32, matmuls bf16).  Each head's (M, hd)
    # output is written into its lane slab of the VMEM scratch so the
    # out-projection becomes a single K=D matmul after the loop.
    # (n_head is small and static; heads could be paired for 128-lane-aligned
    #  slab stores when hd == 64.)
    for h in range(n_head):
        sl = slice(h * hd, (h + 1) * hd)
        s = jnp.einsum('bqd,bkd->bqk', q[:, :, sl], k[:, :, sl],
                       preferred_element_type=jnp.float32) + mask
        s = s - jnp.max(s, axis=-1, keepdims=True)
        p = jnp.exp(s)                                    # fp32 (EUP)
        p = p * pl.reciprocal(jnp.sum(p, axis=-1, keepdims=True), approx=True)
        oh = jnp.einsum('bqk,bkd->bqd', p.astype(jnp.bfloat16), v[:, :, sl],
                        preferred_element_type=jnp.float32)
        attn_slab[:, sl] = oh.reshape(M, hd).astype(jnp.bfloat16)

    attn = jnp.dot(attn_slab[...], w_out_ref[...],
                   preferred_element_type=jnp.float32) + b_out_ref[...]
    x2d = x2d + attn                                      # residual 1

    # ---- ln_2 + MLP (c_fc -> QuickGELU -> c_proj), hidden dim chunked ----
    x_ln2 = _layer_norm(x2d, ln2w_ref[...], ln2b_ref[...]).astype(jnp.bfloat16)
    hidden = w_fc_ref.shape[1]
    y = jnp.zeros((M, D), jnp.float32)
    for c0 in range(0, hidden, mlp_chunk):                # static chunk loop
        c1 = min(c0 + mlp_chunk, hidden)
        h1 = jnp.dot(x_ln2, w_fc_ref[:, c0:c1],
                     preferred_element_type=jnp.float32) + b_fc_ref[:, c0:c1]
        h1 = h1 * jax.nn.sigmoid(1.702 * h1)              # QuickGELU (fp32)
        y = y + jnp.dot(h1.astype(jnp.bfloat16), w_pj_ref[c0:c1, :],
                        preferred_element_type=jnp.float32)
    y = y + b_pj_ref[...]

    o_ref[...] = (x2d + y).reshape(Bt, L, D)              # residual 2


def prepare_block_params(params, n_head, weight_dtype=jnp.bfloat16):
    """Host-side weight prep — call ONCE per layer (outside the step).

    K-major transposes, 1/sqrt(head_dim) folded into the Q rows of the
    in-projection weight+bias, biases reshaped to (1, -1), weights cast to
    bf16.  Hoisting this out of the per-call path avoids re-emitting the
    transpose / scale HLOs (and the HBM traffic) on every forward.
    """
    (ln1w, ln1b, inw, inb, outw, outb,
     ln2w, ln2b, fcw, fcb, pw, pb) = params
    D = int(ln1w.shape[0])
    hd = D // n_head
    scale = 1.0 / (hd ** 0.5)
    q_scale = jnp.concatenate([jnp.full((D,), scale, jnp.float32),
                               jnp.ones((2 * D,), jnp.float32)])
    f32 = jnp.float32
    return dict(
        ln1w=ln1w.reshape(1, -1).astype(f32),
        ln1b=ln1b.reshape(1, -1).astype(f32),
        w_in=(inw.astype(f32) * q_scale[:, None]).T.astype(weight_dtype),
        b_in=(inb.astype(f32) * q_scale).reshape(1, -1),
        w_out=outw.T.astype(weight_dtype),
        b_out=outb.reshape(1, -1).astype(f32),
        ln2w=ln2w.reshape(1, -1).astype(f32),
        ln2b=ln2b.reshape(1, -1).astype(f32),
        w_fc=fcw.T.astype(weight_dtype),
        b_fc=fcb.reshape(1, -1).astype(f32),
        w_pj=pw.T.astype(weight_dtype),
        b_pj=pb.reshape(1, -1).astype(f32),
    )


def residual_attention_block_ivlp(x, prepped, attn_mask, *, n_head,
                                  add_prompt=False, text_ctx=None,
                                  block_batch=16, mlp_chunk=2048):
    """x: (L, N, D) fp32; prepped: output of prepare_block_params.
    Returns (L, N, D) fp32."""
    # --- IVLP prompt injection (pure slice/concat -> host-side glue) ---
    if add_prompt:
        n_ctx, Dc = text_ctx.shape
        ctx = jnp.broadcast_to(text_ctx[None, :, :],
                               (x.shape[1], n_ctx, Dc)).transpose(1, 0, 2)
        x = jnp.concatenate([x[:1], ctx, x[1 + n_ctx:]], axis=0)

    L, N, D = x.shape
    xb = jnp.transpose(x, (1, 0, 2)).astype(jnp.float32)      # (N, L, D)

    # ---- pad L to a sublane multiple; padded keys masked with -1e9 ----
    Lp = ((L + 7) // 8) * 8
    mask = jnp.full((Lp, Lp), -1e9, jnp.float32)
    mask = mask.at[:L, :L].set(attn_mask.astype(jnp.float32))
    if Lp != L:
        xb = jnp.concatenate([xb, jnp.zeros((N, Lp - L, D), xb.dtype)], axis=1)

    # ---- sequences per grid step; keep >= 2 grid steps when N >= 2 so v7x
    #      can shard the "parallel" axis across both TensorCores ----
    Bt = max(1, min(block_batch, N))
    if N >= 2:
        Bt = min(Bt, pl.cdiv(N, 2))
    Np = pl.cdiv(N, Bt) * Bt
    if Np != N:           # zero-padded sequences: finite math, rows discarded
        xb = jnp.concatenate([xb, jnp.zeros((Np - N, Lp, D), xb.dtype)], axis=0)

    hd = D // n_head
    hidden = int(prepped['w_fc'].shape[1])
    mlp_chunk = max(1, min(int(mlp_chunk), hidden))

    # VMEM budget with headroom for Mosaic internal scratch
    # (v7x: 64 MiB physical, v5e/v6e: 128 MiB).
    try:
        vmem_cap = int(pltpu.get_tpu_info().vmem_capacity_bytes)
    except Exception:
        vmem_cap = 128 * 1024 * 1024
    vmem_limit = min(100 * 1024 * 1024, int(vmem_cap * 0.85))

    const_args = (mask,
                  prepped['ln1w'], prepped['ln1b'],
                  prepped['w_in'], prepped['b_in'],
                  prepped['w_out'], prepped['b_out'],
                  prepped['ln2w'], prepped['ln2b'],
                  prepped['w_fc'], prepped['b_fc'],
                  prepped['w_pj'], prepped['b_pj'])

    # advisory cost estimate (projections + attention + transcendentals)
    flops = (Np * Lp * 2 * D * (3 * D + D + 2 * hidden)
             + Np * n_head * 4 * Lp * Lp * hd)
    transc = Np * n_head * Lp * Lp + Np * Lp * hidden
    bytes_acc = (2 * Np * Lp * D * 4
                 + (3 * D * D + D * D + 2 * D * hidden) * 2
                 + Lp * Lp * 4)
    cost = pl.CostEstimate(flops=int(flops), transcendentals=int(transc),
                           bytes_accessed=int(bytes_acc))

    kernel = functools.partial(_block_kernel, n_head=n_head,
                               mlp_chunk=mlp_chunk)

    def const_spec(a, single_buffer):
        idx_map = lambda b: (0,) * a.ndim
        if single_buffer:
            # grid-invariant input: single-buffer (halves weight VMEM footprint)
            return pl.BlockSpec(a.shape, idx_map, pipeline_mode=pl.Buffered(1))
        return pl.BlockSpec(a.shape, idx_map)

    def run(single_buffer_weights):
        return pl.pallas_call(
            kernel,
            out_shape=jax.ShapeDtypeStruct((Np, Lp, D), jnp.float32),
            grid_spec=pltpu.PrefetchScalarGridSpec(
                num_scalar_prefetch=0,
                grid=(Np // Bt,),
                in_specs=[pl.BlockSpec((Bt, Lp, D), lambda b: (b, 0, 0))]
                         + [const_spec(a, single_buffer_weights)
                            for a in const_args],
                out_specs=pl.BlockSpec((Bt, Lp, D), lambda b: (b, 0, 0)),
                scratch_shapes=[pltpu.VMEM((Bt * Lp, D), jnp.bfloat16)],
            ),
            compiler_params=pltpu.CompilerParams(
                dimension_semantics=("parallel",),
                vmem_limit_bytes=vmem_limit),
            cost_estimate=cost,
        )(xb, *const_args)

    try:
        out = jax.block_until_ready(run(True))
    except Exception:
        # Fallback for jax versions without pipeline_mode=pl.Buffered support:
        # default double-buffering of the grid-invariant inputs.
        out = run(False)

    out = out[:N, :L]
    return jnp.transpose(out, (1, 0, 2))                  # back to (L, N, D)


def _reference(x, params, attn_mask, n_head, add_prompt, text_ctx):
    """Pure-JAX fp32 reference matching the PyTorch module."""
    if add_prompt:
        n_ctx, D = text_ctx.shape
        ctx = jnp.broadcast_to(text_ctx[None], (x.shape[1], n_ctx, D)).transpose(1, 0, 2)
        x = jnp.concatenate([x[:1], ctx, x[1 + n_ctx:]], axis=0)
    (ln1w, ln1b, inw, inb, outw, outb, ln2w, ln2b, fcw, fcb, pw, pb) = params
    L, N, D = x.shape
    hd = D // n_head

    def ln(v, w, b):
        mu = jnp.mean(v, -1, keepdims=True)
        var = jnp.mean((v - mu) ** 2, -1, keepdims=True)
        return (v - mu) * jax.lax.rsqrt(var + 1e-5) * w + b

    xl = ln(x, ln1w, ln1b)
    qkv = xl @ inw.T + inb
    q, k, v = jnp.split(qkv, 3, axis=-1)

    def heads(t):  # (L, N, D) -> (N, H, L, hd)
        return t.transpose(1, 0, 2).reshape(N, L, n_head, hd).transpose(0, 2, 1, 3)

    q, k, v = heads(q), heads(k), heads(v)
    s = jnp.einsum('nhqd,nhkd->nhqk', q, k) / (hd ** 0.5) + attn_mask
    p = jax.nn.softmax(s, axis=-1)
    o = jnp.einsum('nhqk,nhkd->nhqd', p, v)
    o = o.transpose(0, 2, 1, 3).reshape(N, L, D).transpose(1, 0, 2)
    x = x + (o @ outw.T + outb)
    xl2 = ln(x, ln2w, ln2b)
    h1 = xl2 @ fcw.T + fcb
    h1 = h1 * jax.nn.sigmoid(1.702 * h1)
    return x + (h1 @ pw.T + pb)


if __name__ == "__main__":
    # small, module-consistent shapes
    L, N, D, H = 8, 2, 32, 4
    n_ctx = 3                                   # language_ctx for IVLP prompt

    key = jax.random.PRNGKey(0)
    ks = jax.random.split(key, 16)

    x = jax.random.normal(ks[0], (L, N, D), dtype=jnp.float32)

    ln1_w = jnp.ones((D,), jnp.float32)
    ln1_b = jnp.zeros((D,), jnp.float32)
    in_proj_w = 0.02 * jax.random.normal(ks[1], (3 * D, D), jnp.float32)
    in_proj_b = 0.02 * jax.random.normal(ks[2], (3 * D,), jnp.float32)
    out_proj_w = 0.02 * jax.random.normal(ks[3], (D, D), jnp.float32)
    out_proj_b = 0.02 * jax.random.normal(ks[4], (D,), jnp.float32)
    ln2_w = jnp.ones((D,), jnp.float32)
    ln2_b = jnp.zeros((D,), jnp.float32)
    c_fc_w = 0.02 * jax.random.normal(ks[5], (4 * D, D), jnp.float32)
    c_fc_b = 0.02 * jax.random.normal(ks[6], (4 * D,), jnp.float32)
    c_proj_w = 0.02 * jax.random.normal(ks[7], (D, 4 * D), jnp.float32)
    c_proj_b = 0.02 * jax.random.normal(ks[8], (D,), jnp.float32)
    text_ctx = 0.02 * jax.random.normal(ks[9], (n_ctx, D), jnp.float32)

    # CLIP-style causal additive attention mask
    attn_mask = jnp.triu(jnp.full((L, L), -1e9, jnp.float32), k=1)

    params = (ln1_w, ln1_b, in_proj_w, in_proj_b, out_proj_w, out_proj_b,
              ln2_w, ln2_b, c_fc_w, c_fc_b, c_proj_w, c_proj_b)

    # host-side weight prep runs ONCE per layer, outside the per-call path
    prepped = prepare_block_params(params, n_head=H)

    out = residual_attention_block_ivlp(
        x, prepped, attn_mask, n_head=H, add_prompt=True, text_ctx=text_ctx)
    jax.block_until_ready(out)
    assert out.shape == (L, N, D)

    ref = _reference(x, params, attn_mask, H, True, text_ctx)
    err = float(jnp.max(jnp.abs(out - ref)))
    assert err < 1e-2, f"max abs error vs reference: {err}"

    print("KERNEL_OK")
</pallas_src>

<mosaic_0001>
module attributes {stable_mosaic.version = 11 : i64} {
  func.func @_block_kernel(%arg0: i32, %arg1: memref<1x8x32xf32, #tpu.memory_space<vmem>>, %arg2: memref<8x8xf32, #tpu.memory_space<vmem>>, %arg3: memref<1x32xf32, #tpu.memory_space<vmem>>, %arg4: memref<1x32xf32, #tpu.memory_space<vmem>>, %arg5: memref<32x96xbf16, #tpu.memory_space<vmem>>, %arg6: memref<1x96xf32, #tpu.memory_space<vmem>>, %arg7: memref<32x32xbf16, #tpu.memory_space<vmem>>, %arg8: memref<1x32xf32, #tpu.memory_space<vmem>>, %arg9: memref<1x32xf32, #tpu.memory_space<vmem>>, %arg10: memref<1x32xf32, #tpu.memory_space<vmem>>, %arg11: memref<32x128xbf16, #tpu.memory_space<vmem>>, %arg12: memref<1x128xf32, #tpu.memory_space<vmem>>, %arg13: memref<128x32xbf16, #tpu.memory_space<vmem>>, %arg14: memref<1x32xf32, #tpu.memory_space<vmem>>, %arg15: memref<1x8x32xf32, #tpu.memory_space<vmem>>, %arg16: memref<8x32xbf16, #tpu.memory_space<vmem>>) attributes {dimension_semantics = [#tpu.dimension_semantics<parallel>], iteration_bounds = array<i64: 2>, scalar_prefetch = 0 : i64, scratch_operands = 1 : i64, tpu.core_type = #tpu.core_type<tc>, window_params = [{transform_indices = @transform_0, window_bounds = array<i64: 1, 8, 32>}, {pipeline_mode = #tpu.pipeline_mode<synchronous>, transform_indices = @transform_1, window_bounds = array<i64: 8, 8>}, {pipeline_mode = #tpu.pipeline_mode<synchronous>, transform_indices = @transform_2, window_bounds = array<i64: 1, 32>}, {pipeline_mode = #tpu.pipeline_mode<synchronous>, transform_indices = @transform_3, window_bounds = array<i64: 1, 32>}, {pipeline_mode = #tpu.pipeline_mode<synchronous>, transform_indices = @transform_4, window_bounds = array<i64: 32, 96>}, {pipeline_mode = #tpu.pipeline_mode<synchronous>, transform_indices = @transform_5, window_bounds = array<i64: 1, 96>}, {pipeline_mode = #tpu.pipeline_mode<synchronous>, transform_indices = @transform_6, window_bounds = array<i64: 32, 32>}, {pipeline_mode = #tpu.pipeline_mode<synchronous>, transform_indices = @transform_7, window_bounds = array<i64: 1, 32>}, {pipeline_mode = #tpu.pipeline_mode<synchronous>, transform_indices = @transform_8, window_bounds = array<i64: 1, 32>}, {pipeline_mode = #tpu.pipeline_mode<synchronous>, transform_indices = @transform_9, window_bounds = array<i64: 1, 32>}, {pipeline_mode = #tpu.pipeline_mode<synchronous>, transform_indices = @transform_10, window_bounds = array<i64: 32, 128>}, {pipeline_mode = #tpu.pipeline_mode<synchronous>, transform_indices = @transform_11, window_bounds = array<i64: 1, 128>}, {pipeline_mode = #tpu.pipeline_mode<synchronous>, transform_indices = @transform_12, window_bounds = array<i64: 128, 32>}, {pipeline_mode = #tpu.pipeline_mode<synchronous>, transform_indices = @transform_13, window_bounds = array<i64: 1, 32>}, {transform_indices = @transform_14, window_bounds = array<i64: 1, 8, 32>}]} {
    %c0 = arith.constant 0 : index
    %c0_0 = arith.constant 0 : index
    %c0_1 = arith.constant 0 : index
    %0 = vector.load %arg1[%c0, %c0_0, %c0_1] : memref<1x8x32xf32, #tpu.memory_space<vmem>>, vector<1x8x32xf32>
    %1 = vector.shape_cast %0 : vector<1x8x32xf32> to vector<8x32xf32>
    %c0_2 = arith.constant 0 : index
    %c0_3 = arith.constant 0 : index
    %2 = vector.load %arg3[%c0_2, %c0_3] : memref<1x32xf32, #tpu.memory_space<vmem>>, vector<1x32xf32>
    %c0_4 = arith.constant 0 : index
    %c0_5 = arith.constant 0 : index
    %3 = vector.load %arg4[%c0_4, %c0_5] : memref<1x32xf32, #tpu.memory_space<vmem>>, vector<1x32xf32>
    %cst = arith.constant dense<0.000000e+00> : vector<8xf32>
    %4 = vector.multi_reduction <add>, %1, %cst [1] : vector<8x32xf32> to vector<8xf32>
    %5 = vector.shape_cast %4 : vector<8xf32> to vector<8x1xf32>
    %cst_6 = arith.constant 3.200000e+01 : f32
    %6 = vector.broadcast %cst_6 : f32 to vector<8x1xf32>
    %7 = arith.divf %5, %6 : vector<8x1xf32>
    %8 = vector.broadcast %7 : vector<8x1xf32> to vector<8x32xf32>
    %9 = arith.subf %1, %8 : vector<8x32xf32>
    %10 = arith.mulf %9, %9 : vector<8x32xf32>
    %cst_7 = arith.constant dense<0.000000e+00> : vector<8xf32>
    %11 = vector.multi_reduction <add>, %10, %cst_7 [1] : vector<8x32xf32> to vector<8xf32>
    %12 = vector.shape_cast %11 : vector<8xf32> to vector<8x1xf32>
    %cst_8 = arith.constant 3.200000e+01 : f32
    %13 = vector.broadcast %cst_8 : f32 to vector<8x1xf32>
    %14 = arith.divf %12, %13 : vector<8x1xf32>
    %15 = vector.broadcast %7 : vector<8x1xf32> to vector<8x32xf32>
    %16 = arith.subf %1, %15 : vector<8x32xf32>
    %cst_9 = arith.constant 9.99999974E-6 : f32
    %17 = vector.broadcast %cst_9 : f32 to vector<8x1xf32>
    %18 = arith.addf %14, %17 : vector<8x1xf32>
    %19 = math.rsqrt %18 : vector<8x1xf32>
    %20 = vector.broadcast %19 : vector<8x1xf32> to vector<8x32xf32>
    %21 = arith.mulf %16, %20 : vector<8x32xf32>
    %22 = vector.broadcast %2 : vector<1x32xf32> to vector<8x32xf32>
    %23 = arith.mulf %21, %22 : vector<8x32xf32>
    %24 = vector.broadcast %3 : vector<1x32xf32> to vector<8x32xf32>
    %25 = arith.addf %23, %24 : vector<8x32xf32>
    %26 = arith.truncf %25 : vector<8x32xf32> to vector<8x32xbf16>
    %c0_10 = arith.constant 0 : index
    %c0_11 = arith.constant 0 : index
    %27 = vector.load %arg5[%c0_10, %c0_11] : memref<32x96xbf16, #tpu.memory_space<vmem>>, vector<32x96xbf16>
    %cst_12 = arith.constant dense<0.000000e+00> : vector<8x96xf32>
    %28 = tpu.matmul %26, %27, %cst_12 {dimension_numbers = #tpu.dot_dimension_numbers<[1], [0], [0], [1], [0, 0, 1, 1], [], []>} : vector<8x32xbf16>, vector<32x96xbf16>, vector<8x96xf32> -> vector<8x96xf32>
    %c0_13 = arith.constant 0 : index
    %c0_14 = arith.constant 0 : index
    %29 = vector.load %arg6[%c0_13, %c0_14] : memref<1x96xf32, #tpu.memory_space<vmem>>, vector<1x96xf32>
    %30 = vector.broadcast %29 : vector<1x96xf32> to vector<8x96xf32>
    %31 = arith.addf %28, %30 : vector<8x96xf32>
    %32 = vector.extract_strided_slice %31 {offsets = [0, 0], sizes = [8, 32], strides = [1, 1]} : vector<8x96xf32> to vector<8x32xf32>
    %33 = vector.shape_cast %32 : vector<8x32xf32> to vector<1x8x32xf32>
    %34 = arith.truncf %33 : vector<1x8x32xf32> to vector<1x8x32xbf16>
    %35 = vector.extract_strided_slice %31 {offsets = [0, 32], sizes = [8, 32], strides = [1, 1]} : vector<8x96xf32> to vector<8x32xf32>
    %36 = vector.shape_cast %35 : vector<8x32xf32> to vector<1x8x32xf32>
    %37 = arith.truncf %36 : vector<1x8x32xf32> to vector<1x8x32xbf16>
    %38 = vector.extract_strided_slice %31 {offsets = [0, 64], sizes = [8, 32], strides = [1, 1]} : vector<8x96xf32> to vector<8x32xf32>
    %39 = vector.shape_cast %38 : vector<8x32xf32> to vector<1x8x32xf32>
    %40 = arith.truncf %39 : vector<1x8x32xf32> to vector<1x8x32xbf16>
    %c0_15 = arith.constant 0 : index
    %c0_16 = arith.constant 0 : index
    %41 = vector.load %arg2[%c0_15, %c0_16] : memref<8x8xf32, #tpu.memory_space<vmem>>, vector<8x8xf32>
    %42 = vector.extract_strided_slice %34 {offsets = [0, 0, 0], sizes = [1, 8, 8], strides = [1, 1, 1]} : vector<1x8x32xbf16> to vector<1x8x8xbf16>
    %43 = vector.extract_strided_slice %37 {offsets = [0, 0, 0], sizes = [1, 8, 8], strides = [1, 1, 1]} : vector<1x8x32xbf16> to vector<1x8x8xbf16>
    "tpu.trace_start"() <{level = 10 : i32, message = "bqd,bkd->bqk"}> : () -> ()
    %cst_17 = arith.constant dense<0.000000e+00> : vector<1x8x8xf32>
    %44 = tpu.matmul %42, %43, %cst_17 {dimension_numbers = #tpu.dot_dimension_numbers<[2], [2], [1], [1], [0, 0, 0, 1, 1, 1], [0], [0]>} : vector<1x8x8xbf16>, vector<1x8x8xbf16>, vector<1x8x8xf32> -> vector<1x8x8xf32>
    "tpu.trace_stop"() : () -> ()
    %45 = vector.shape_cast %41 : vector<8x8xf32> to vector<1x8x8xf32>
    %46 = arith.addf %44, %45 : vector<1x8x8xf32>
    %cst_18 = arith.constant dense<0xFF800000> : vector<1x8xf32>
    %47 = vector.multi_reduction <maximumf>, %46, %cst_18 [2] : vector<1x8x8xf32> to vector<1x8xf32>
    %48 = vector.shape_cast %47 : vector<1x8xf32> to vector<1x8x1xf32>
    %49 = vector.broadcast %48 : vector<1x8x1xf32> to vector<1x8x8xf32>
    %50 = arith.subf %46, %49 : vector<1x8x8xf32>
    %51 = math.exp %50 : vector<1x8x8xf32>
    %cst_19 = arith.constant dense<0.000000e+00> : vector<1x8xf32>
    %52 = vector.multi_reduction <add>, %51, %cst_19 [2] : vector<1x8x8xf32> to vector<1x8xf32>
    %53 = vector.shape_cast %52 : vector<1x8xf32> to vector<1x8x1xf32>
    %54 = tpu.reciprocal %53 {approx = true} : vector<1x8x1xf32> -> vector<1x8x1xf32>
    %55 = vector.broadcast %54 : vector<1x8x1xf32> to vector<1x8x8xf32>
    %56 = arith.mulf %51, %55 : vector<1x8x8xf32>
    %57 = arith.truncf %56 : vector<1x8x8xf32> to vector<1x8x8xbf16>
    %58 = vector.extract_strided_slice %40 {offsets = [0, 0, 0], sizes = [1, 8, 8], strides = [1, 1, 1]} : vector<1x8x32xbf16> to vector<1x8x8xbf16>
    "tpu.trace_start"() <{level = 10 : i32, message = "bqk,bkd->bqd"}> : () -> ()
    %cst_20 = arith.constant dense<0.000000e+00> : vector<1x8x8xf32>
    %59 = tpu.matmul %57, %58, %cst_20 {dimension_numbers = #tpu.dot_dimension_numbers<[2], [1], [1], [2], [0, 0, 0, 1, 1, 2], [0], [0]>} : vector<1x8x8xbf16>, vector<1x8x8xbf16>, vector<1x8x8xf32> -> vector<1x8x8xf32>
    "tpu.trace_stop"() : () -> ()
    %60 = vector.shape_cast %59 : vector<1x8x8xf32> to vector<8x8xf32>
    %61 = arith.truncf %60 : vector<8x8xf32> to vector<8x8xbf16>
    %c0_21 = arith.constant 0 : index
    %c0_22 = arith.constant 0 : index
    %62 = vector.load %arg16[%c0_21, %c0_22] : memref<8x32xbf16, #tpu.memory_space<vmem>>, vector<8x8xbf16>
    tpu.vector_store %arg16[%c0_21, %c0_22], %61 {strides = array<i32>} : memref<8x32xbf16, #tpu.memory_space<vmem>>, vector<8x8xbf16>,
    %63 = vector.extract_strided_slice %34 {offsets = [0, 0, 8], sizes = [1, 8, 8], strides = [1, 1, 1]} : vector<1x8x32xbf16> to vector<1x8x8xbf16>
    %64 = vector.extract_strided_slice %37 {offsets = [0, 0, 8], sizes = [1, 8, 8], strides = [1, 1, 1]} : vector<1x8x32xbf16> to vector<1x8x8xbf16>
    "tpu.trace_start"() <{level = 10 : i32, message = "bqd,bkd->bqk"}> : () -> ()
    %cst_23 = arith.constant dense<0.000000e+00> : vector<1x8x8xf32>
    %65 = tpu.matmul %63, %64, %cst_23 {dimension_numbers = #tpu.dot_dimension_numbers<[2], [2], [1], [1], [0, 0, 0, 1, 1, 1], [0], [0]>} : vector<1x8x8xbf16>, vector<1x8x8xbf16>, vector<1x8x8xf32> -> vector<1x8x8xf32>
    "tpu.trace_stop"() : () -> ()
    %66 = vector.shape_cast %41 : vector<8x8xf32> to vector<1x8x8xf32>
    %67 = arith.addf %65, %66 : vector<1x8x8xf32>
    %cst_24 = arith.constant dense<0xFF800000> : vector<1x8xf32>
    %68 = vector.multi_reduction <maximumf>, %67, %cst_24 [2] : vector<1x8x8xf32> to vector<1x8xf32>
    %69 = vector.shape_cast %68 : vector<1x8xf32> to vector<1x8x1xf32>
    %70 = vector.broadcast %69 : vector<1x8x1xf32> to vector<1x8x8xf32>
    %71 = arith.subf %67, %70 : vector<1x8x8xf32>
    %72 = math.exp %71 : vector<1x8x8xf32>
    %cst_25 = arith.constant dense<0.000000e+00> : vector<1x8xf32>
    %73 = vector.multi_reduction <add>, %72, %cst_25 [2] : vector<1x8x8xf32> to vector<1x8xf32>
    %74 = vector.shape_cast %73 : vector<1x8xf32> to vector<1x8x1xf32>
    %75 = tpu.reciprocal %74 {approx = true} : vector<1x8x1xf32> -> vector<1x8x1xf32>
    %76 = vector.broadcast %75 : vector<1x8x1xf32> to vector<1x8x8xf32>
    %77 = arith.mulf %72, %76 : vector<1x8x8xf32>
    %78 = arith.truncf %77 : vector<1x8x8xf32> to vector<1x8x8xbf16>
    %79 = vector.extract_strided_slice %40 {offsets = [0, 0, 8], sizes = [1, 8, 8], strides = [1, 1, 1]} : vector<1x8x32xbf16> to vector<1x8x8xbf16>
    "tpu.trace_start"() <{level = 10 : i32, message = "bqk,bkd->bqd"}> : () -> ()
    %cst_26 = arith.constant dense<0.000000e+00> : vector<1x8x8xf32>
    %80 = tpu.matmul %78, %79, %cst_26 {dimension_numbers = #tpu.dot_dimension_numbers<[2], [1], [1], [2], [0, 0, 0, 1, 1, 2], [0], [0]>} : vector<1x8x8xbf16>, vector<1x8x8xbf16>, vector<1x8x8xf32> -> vector<1x8x8xf32>
    "tpu.trace_stop"() : () -> ()
    %81 = vector.shape_cast %80 : vector<1x8x8xf32> to vector<8x8xf32>
    %82 = arith.truncf %81 : vector<8x8xf32> to vector<8x8xbf16>
    %c0_27 = arith.constant 0 : index
    %c8 = arith.constant 8 : index
    %83 = vector.load %arg16[%c0_27, %c8] : memref<8x32xbf16, #tpu.memory_space<vmem>>, vector<8x8xbf16>
    tpu.vector_store %arg16[%c0_27, %c8], %82 {strides = array<i32>} : memref<8x32xbf16, #tpu.memory_space<vmem>>, vector<8x8xbf16>,
    %84 = vector.extract_strided_slice %34 {offsets = [0, 0, 16], sizes = [1, 8, 8], strides = [1, 1, 1]} : vector<1x8x32xbf16> to vector<1x8x8xbf16>
    %85 = vector.extract_strided_slice %37 {offsets = [0, 0, 16], sizes = [1, 8, 8], strides = [1, 1, 1]} : vector<1x8x32xbf16> to vector<1x8x8xbf16>
    "tpu.trace_start"() <{level = 10 : i32, message = "bqd,bkd->bqk"}> : () -> ()
    %cst_28 = arith.constant dense<0.000000e+00> : vector<1x8x8xf32>
    %86 = tpu.matmul %84, %85, %cst_28 {dimension_numbers = #tpu.dot_dimension_numbers<[2], [2], [1], [1], [0, 0, 0, 1, 1, 1], [0], [0]>} : vector<1x8x8xbf16>, vector<1x8x8xbf16>, vector<1x8x8xf32> -> vector<1x8x8xf32>
    "tpu.trace_stop"() : () -> ()
    %87 = vector.shape_cast %41 : vector<8x8xf32> to vector<1x8x8xf32>
    %88 = arith.addf %86, %87 : vector<1x8x8xf32>
    %cst_29 = arith.constant dense<0xFF800000> : vector<1x8xf32>
    %89 = vector.multi_reduction <maximumf>, %88, %cst_29 [2] : vector<1x8x8xf32> to vector<1x8xf32>
    %90 = vector.shape_cast %89 : vector<1x8xf32> to vector<1x8x1xf32>
    %91 = vector.broadcast %90 : vector<1x8x1xf32> to vector<1x8x8xf32>
    %92 = arith.subf %88, %91 : vector<1x8x8xf32>
    %93 = math.exp %92 : vector<1x8x8xf32>
    %cst_30 = arith.constant dense<0.000000e+00> : vector<1x8xf32>
    %94 = vector.multi_reduction <add>, %93, %cst_30 [2] : vector<1x8x8xf32> to vector<1x8xf32>
    %95 = vector.shape_cast %94 : vector<1x8xf32> to vector<1x8x1xf32>
    %96 = tpu.reciprocal %95 {approx = true} : vector<1x8x1xf32> -> vector<1x8x1xf32>
    %97 = vector.broadcast %96 : vector<1x8x1xf32> to vector<1x8x8xf32>
    %98 = arith.mulf %93, %97 : vector<1x8x8xf32>
    %99 = arith.truncf %98 : vector<1x8x8xf32> to vector<1x8x8xbf16>
    %100 = vector.extract_strided_slice %40 {offsets = [0, 0, 16], sizes = [1, 8, 8], strides = [1, 1, 1]} : vector<1x8x32xbf16> to vector<1x8x8xbf16>
    "tpu.trace_start"() <{level = 10 : i32, message = "bqk,bkd->bqd"}> : () -> ()
    %cst_31 = arith.constant dense<0.000000e+00> : vector<1x8x8xf32>
    %101 = tpu.matmul %99, %100, %cst_31 {dimension_numbers = #tpu.dot_dimension_numbers<[2], [1], [1], [2], [0, 0, 0, 1, 1, 2], [0], [0]>} : vector<1x8x8xbf16>, vector<1x8x8xbf16>, vector<1x8x8xf32> -> vector<1x8x8xf32>
    "tpu.trace_stop"() : () -> ()
    %102 = vector.shape_cast %101 : vector<1x8x8xf32> to vector<8x8xf32>
    %103 = arith.truncf %102 : vector<8x8xf32> to vector<8x8xbf16>
    %c0_32 = arith.constant 0 : index
    %c16 = arith.constant 16 : index
    %104 = vector.load %arg16[%c0_32, %c16] : memref<8x32xbf16, #tpu.memory_space<vmem>>, vector<8x8xbf16>
    tpu.vector_store %arg16[%c0_32, %c16], %103 {strides = array<i32>} : memref<8x32xbf16, #tpu.memory_space<vmem>>, vector<8x8xbf16>,
    %105 = vector.extract_strided_slice %34 {offsets = [0, 0, 24], sizes = [1, 8, 8], strides = [1, 1, 1]} : vector<1x8x32xbf16> to vector<1x8x8xbf16>
    %106 = vector.extract_strided_slice %37 {offsets = [0, 0, 24], sizes = [1, 8, 8], strides = [1, 1, 1]} : vector<1x8x32xbf16> to vector<1x8x8xbf16>
    "tpu.trace_start"() <{level = 10 : i32, message = "bqd,bkd->bqk"}> : () -> ()
    %cst_33 = arith.constant dense<0.000000e+00> : vector<1x8x8xf32>
    %107 = tpu.matmul %105, %106, %cst_33 {dimension_numbers = #tpu.dot_dimension_numbers<[2], [2], [1], [1], [0, 0, 0, 1, 1, 1], [0], [0]>} : vector<1x8x8xbf16>, vector<1x8x8xbf16>, vector<1x8x8xf32> -> vector<1x8x8xf32>
    "tpu.trace_stop"() : () -> ()
    %108 = vector.shape_cast %41 : vector<8x8xf32> to vector<1x8x8xf32>
    %109 = arith.addf %107, %108 : vector<1x8x8xf32>
    %cst_34 = arith.constant dense<0xFF800000> : vector<1x8xf32>
    %110 = vector.multi_reduction <maximumf>, %109, %cst_34 [2] : vector<1x8x8xf32> to vector<1x8xf32>
    %111 = vector.shape_cast %110 : vector<1x8xf32> to vector<1x8x1xf32>
    %112 = vector.broadcast %111 : vector<1x8x1xf32> to vector<1x8x8xf32>
    %113 = arith.subf %109, %112 : vector<1x8x8xf32>
    %114 = math.exp %113 : vector<1x8x8xf32>
    %cst_35 = arith.constant dense<0.000000e+00> : vector<1x8xf32>
    %115 = vector.multi_reduction <add>, %114, %cst_35 [2] : vector<1x8x8xf32> to vector<1x8xf32>
    %116 = vector.shape_cast %115 : vector<1x8xf32> to vector<1x8x1xf32>
    %117 = tpu.reciprocal %116 {approx = true} : vector<1x8x1xf32> -> vector<1x8x1xf32>
    %118 = vector.broadcast %117 : vector<1x8x1xf32> to vector<1x8x8xf32>
    %119 = arith.mulf %114, %118 : vector<1x8x8xf32>
    %120 = arith.truncf %119 : vector<1x8x8xf32> to vector<1x8x8xbf16>
    %121 = vector.extract_strided_slice %40 {offsets = [0, 0, 24], sizes = [1, 8, 8], strides = [1, 1, 1]} : vector<1x8x32xbf16> to vector<1x8x8xbf16>
    "tpu.trace_start"() <{level = 10 : i32, message = "bqk,bkd->bqd"}> : () -> ()
    %cst_36 = arith.constant dense<0.000000e+00> : vector<1x8x8xf32>
    %122 = tpu.matmul %120, %121, %cst_36 {dimension_numbers = #tpu.dot_dimension_numbers<[2], [1], [1], [2], [0, 0, 0, 1, 1, 2], [0], [0]>} : vector<1x8x8xbf16>, vector<1x8x8xbf16>, vector<1x8x8xf32> -> vector<1x8x8xf32>
    "tpu.trace_stop"() : () -> ()
    %123 = vector.shape_cast %122 : vector<1x8x8xf32> to vector<8x8xf32>
    %124 = arith.truncf %123 : vector<8x8xf32> to vector<8x8xbf16>
    %c0_37 = arith.constant 0 : index
    %c24 = arith.constant 24 : index
    %125 = vector.load %arg16[%c0_37, %c24] : memref<8x32xbf16, #tpu.memory_space<vmem>>, vector<8x8xbf16>
    tpu.vector_store %arg16[%c0_37, %c24], %124 {strides = array<i32>} : memref<8x32xbf16, #tpu.memory_space<vmem>>, vector<8x8xbf16>,
    %c0_38 = arith.constant 0 : index
    %c0_39 = arith.constant 0 : index
    %126 = vector.load %arg16[%c0_38, %c0_39] : memref<8x32xbf16, #tpu.memory_space<vmem>>, vector<8x32xbf16>
    %c0_40 = arith.constant 0 : index
    %c0_41 = arith.constant 0 : index
    %127 = vector.load %arg7[%c0_40, %c0_41] : memref<32x32xbf16, #tpu.memory_space<vmem>>, vector<32x32xbf16>
    %cst_42 = arith.constant dense<0.000000e+00> : vector<8x32xf32>
    %128 = tpu.matmul %126, %127, %cst_42 {dimension_numbers = #tpu.dot_dimension_numbers<[1], [0], [0], [1], [0, 0, 1, 1], [], []>} : vector<8x32xbf16>, vector<32x32xbf16>, vector<8x32xf32> -> vector<8x32xf32>
    %c0_43 = arith.constant 0 : index
    %c0_44 = arith.constant 0 : index
    %129 = vector.load %arg8[%c0_43, %c0_44] : memref<1x32xf32, #tpu.memory_space<vmem>>, vector<1x32xf32>
    %130 = vector.broadcast %129 : vector<1x32xf32> to vector<8x32xf32>
    %131 = arith.addf %128, %130 : vector<8x32xf32>
    %132 = arith.addf %1, %131 : vector<8x32xf32>
    %c0_45 = arith.constant 0 : index
    %c0_46 = arith.constant 0 : index
    %133 = vector.load %arg9[%c0_45, %c0_46] : memref<1x32xf32, #tpu.memory_space<vmem>>, vector<1x32xf32>
    %c0_47 = arith.constant 0 : index
    %c0_48 = arith.constant 0 : index
    %134 = vector.load %arg10[%c0_47, %c0_48] : memref<1x32xf32, #tpu.memory_space<vmem>>, vector<1x32xf32>
    %cst_49 = arith.constant dense<0.000000e+00> : vector<8xf32>
    %135 = vector.multi_reduction <add>, %132, %cst_49 [1] : vector<8x32xf32> to vector<8xf32>
    %136 = vector.shape_cast %135 : vector<8xf32> to vector<8x1xf32>
    %cst_50 = arith.constant 3.200000e+01 : f32
    %137 = vector.broadcast %cst_50 : f32 to vector<8x1xf32>
    %138 = arith.divf %136, %137 : vector<8x1xf32>
    %139 = vector.broadcast %138 : vector<8x1xf32> to vector<8x32xf32>
    %140 = arith.subf %132, %139 : vector<8x32xf32>
    %141 = arith.mulf %140, %140 : vector<8x32xf32>
    %cst_51 = arith.constant dense<0.000000e+00> : vector<8xf32>
    %142 = vector.multi_reduction <add>, %141, %cst_51 [1] : vector<8x32xf32> to vector<8xf32>
    %143 = vector.shape_cast %142 : vector<8xf32> to vector<8x1xf32>
    %cst_52 = arith.constant 3.200000e+01 : f32
    %144 = vector.broadcast %cst_52 : f32 to vector<8x1xf32>
    %145 = arith.divf %143, %144 : vector<8x1xf32>
    %146 = vector.broadcast %138 : vector<8x1xf32> to vector<8x32xf32>
    %147 = arith.subf %132, %146 : vector<8x32xf32>
    %cst_53 = arith.constant 9.99999974E-6 : f32
    %148 = vector.broadcast %cst_53 : f32 to vector<8x1xf32>
    %149 = arith.addf %145, %148 : vector<8x1xf32>
    %150 = math.rsqrt %149 : vector<8x1xf32>
    %151 = vector.broadcast %150 : vector<8x1xf32> to vector<8x32xf32>
    %152 = arith.mulf %147, %151 : vector<8x32xf32>
    %153 = vector.broadcast %133 : vector<1x32xf32> to vector<8x32xf32>
    %154 = arith.mulf %152, %153 : vector<8x32xf32>
    %155 = vector.broadcast %134 : vector<1x32xf32> to vector<8x32xf32>
    %156 = arith.addf %154, %155 : vector<8x32xf32>
    %157 = arith.truncf %156 : vector<8x32xf32> to vector<8x32xbf16>
    %cst_54 = arith.constant 0.000000e+00 : f32
    %158 = vector.broadcast %cst_54 : f32 to vector<8x32xf32>
    %c0_55 = arith.constant 0 : index
    %c0_56 = arith.constant 0 : index
    %159 = vector.load %arg11[%c0_55, %c0_56] : memref<32x128xbf16, #tpu.memory_space<vmem>>, vector<32x128xbf16>
    %cst_57 = arith.constant dense<0.000000e+00> : vector<8x128xf32>
    %160 = tpu.matmul %157, %159, %cst_57 {dimension_numbers = #tpu.dot_dimension_numbers<[1], [0], [0], [1], [0, 0, 1, 1], [], []>} : vector<8x32xbf16>, vector<32x128xbf16>, vector<8x128xf32> -> vector<8x128xf32>
    %c0_58 = arith.constant 0 : index
    %c0_59 = arith.constant 0 : index
    %161 = vector.load %arg12[%c0_58, %c0_59] : memref<1x128xf32, #tpu.memory_space<vmem>>, vector<1x128xf32>
    %162 = vector.broadcast %161 : vector<1x128xf32> to vector<8x128xf32>
    %163 = arith.addf %160, %162 : vector<8x128xf32>
    %cst_60 = arith.constant 1.702000e+00 : f32
    %164 = vector.broadcast %cst_60 : f32 to vector<8x128xf32>
    %165 = arith.mulf %164, %163 : vector<8x128xf32>
    %166 = arith.negf %165 : vector<8x128xf32>
    %167 = math.exp %166 : vector<8x128xf32>
    %cst_61 = arith.constant 1.000000e+00 : f32
    %168 = vector.broadcast %cst_61 : f32 to vector<8x128xf32>
    %169 = arith.addf %168, %167 : vector<8x128xf32>
    %170 = arith.divf %168, %169 : vector<8x128xf32>
    %171 = arith.mulf %163, %170 : vector<8x128xf32>
    %172 = arith.truncf %171 : vector<8x128xf32> to vector<8x128xbf16>
    %c0_62 = arith.constant 0 : index
    %c0_63 = arith.constant 0 : index
    %173 = vector.load %arg13[%c0_62, %c0_63] : memref<128x32xbf16, #tpu.memory_space<vmem>>, vector<128x32xbf16>
    %cst_64 = arith.constant dense<0.000000e+00> : vector<8x32xf32>
    %174 = tpu.matmul %172, %173, %cst_64 {dimension_numbers = #tpu.dot_dimension_numbers<[1], [0], [0], [1], [0, 0, 1, 1], [], []>} : vector<8x128xbf16>, vector<128x32xbf16>, vector<8x32xf32> -> vector<8x32xf32>
    %175 = arith.addf %158, %174 : vector<8x32xf32>
    %c0_65 = arith.constant 0 : index
    %c0_66 = arith.constant 0 : index
    %176 = vector.load %arg14[%c0_65, %c0_66] : memref<1x32xf32, #tpu.memory_space<vmem>>, vector<1x32xf32>
    %177 = vector.broadcast %176 : vector<1x32xf32> to vector<8x32xf32>
    %178 = arith.addf %175, %177 : vector<8x32xf32>
    %179 = arith.addf %132, %178 : vector<8x32xf32>
    %180 = vector.shape_cast %179 : vector<8x32xf32> to vector<1x8x32xf32>
    %c0_67 = arith.constant 0 : index
    %c0_68 = arith.constant 0 : index
    %c0_69 = arith.constant 0 : index
    %181 = vector.load %arg15[%c0_67, %c0_68, %c0_69] : memref<1x8x32xf32, #tpu.memory_space<vmem>>, vector<1x8x32xf32>
    tpu.vector_store %arg15[%c0_67, %c0_68, %c0_69], %180 {strides = array<i32>} : memref<1x8x32xf32, #tpu.memory_space<vmem>>, vector<1x8x32xf32>,
    return
  }
  func.func @transform_0(%arg0: i32) -> (i32, i32, i32) {
    %c0_i32 = arith.constant 0 : i32
    %c0_i32_0 = arith.constant 0 : i32
    %c0_i32_1 = arith.constant 0 : i32
    return %arg0, %c0_i32, %c0_i32_0 : i32, i32, i32
  }
  func.func @transform_1(%arg0: i32) -> (i32, i32) {
    %c0_i32 = arith.constant 0 : i32
    %c0_i32_0 = arith.constant 0 : i32
    %c0_i32_1 = arith.constant 0 : i32
    return %c0_i32, %c0_i32_0 : i32, i32
  }
  func.func @transform_2(%arg0: i32) -> (i32, i32) {
    %c0_i32 = arith.constant 0 : i32
    %c0_i32_0 = arith.constant 0 : i32
    %c0_i32_1 = arith.constant 0 : i32
    return %c0_i32, %c0_i32_0 : i32, i32
  }
  func.func @transform_3(%arg0: i32) -> (i32, i32) {
    %c0_i32 = arith.constant 0 : i32
    %c0_i32_0 = arith.constant 0 : i32
    %c0_i32_1 = arith.constant 0 : i32
    return %c0_i32, %c0_i32_0 : i32, i32
  }
  func.func @transform_4(%arg0: i32) -> (i32, i32) {
    %c0_i32 = arith.constant 0 : i32
    %c0_i32_0 = arith.constant 0 : i32
    %c0_i32_1 = arith.constant 0 : i32
    return %c0_i32, %c0_i32_0 : i32, i32
  }
  func.func @transform_5(%arg0: i32) -> (i32, i32) {
    %c0_i32 = arith.constant 0 : i32
    %c0_i32_0 = arith.constant 0 : i32
    %c0_i32_1 = arith.constant 0 : i32
    return %c0_i32, %c0_i32_0 : i32, i32
  }
  func.func @transform_6(%arg0: i32) -> (i32, i32) {
    %c0_i32 = arith.constant 0 : i32
    %c0_i32_0 = arith.constant 0 : i32
    %c0_i32_1 = arith.constant 0 : i32
    return %c0_i32, %c0_i32_0 : i32, i32
  }
  func.func @transform_7(%arg0: i32) -> (i32, i32) {
    %c0_i32 = arith.constant 0 : i32
    %c0_i32_0 = arith.constant 0 : i32
    %c0_i32_1 = arith.constant 0 : i32
    return %c0_i32, %c0_i32_0 : i32, i32
  }
  func.func @transform_8(%arg0: i32) -> (i32, i32) {
    %c0_i32 = arith.constant 0 : i32
    %c0_i32_0 = arith.constant 0 : i32
    %c0_i32_1 = arith.constant 0 : i32
    return %c0_i32, %c0_i32_0 : i32, i32
  }
  func.func @transform_9(%arg0: i32) -> (i32, i32) {
    %c0_i32 = arith.constant 0 : i32
    %c0_i32_0 = arith.constant 0 : i32
    %c0_i32_1 = arith.constant 0 : i32
    return %c0_i32, %c0_i32_0 : i32, i32
  }
  func.func @transform_10(%arg0: i32) -> (i32, i32) {
    %c0_i32 = arith.constant 0 : i32
    %c0_i32_0 = arith.constant 0 : i32
    %c0_i32_1 = arith.constant 0 : i32
    return %c0_i32, %c0_i32_0 : i32, i32
  }
  func.func @transform_11(%arg0: i32) -> (i32, i32) {
    %c0_i32 = arith.constant 0 : i32
    %c0_i32_0 = arith.constant 0 : i32
    %c0_i32_1 = arith.constant 0 : i32
    return %c0_i32, %c0_i32_0 : i32, i32
  }
  func.func @transform_12(%arg0: i32) -> (i32, i32) {
    %c0_i32 = arith.constant 0 : i32
    %c0_i32_0 = arith.constant 0 : i32
    %c0_i32_1 = arith.constant 0 : i32
    return %c0_i32, %c0_i32_0 : i32, i32
  }
  func.func @transform_13(%arg0: i32) -> (i32, i32) {
    %c0_i32 = arith.constant 0 : i32
    %c0_i32_0 = arith.constant 0 : i32
    %c0_i32_1 = arith.constant 0 : i32
    return %c0_i32, %c0_i32_0 : i32, i32
  }
  func.func @transform_14(%arg0: i32) -> (i32, i32, i32) {
    %c0_i32 = arith.constant 0 : i32
    %c0_i32_0 = arith.constant 0 : i32
    %c0_i32_1 = arith.constant 0 : i32
    return %arg0, %c0_i32, %c0_i32_0 : i32, i32, i32
  }
}

module attributes {stable_mosaic.version = 11 : i64} {
  func.func @_block_kernel(%arg0: i32, %arg1: memref<1x8x32xf32, #tpu.memory_space<vmem>>, %arg2: memref<8x8xf32, #tpu.memory_space<vmem>>, %arg3: memref<1x32xf32, #tpu.memory_space<vmem>>, %arg4: memref<1x32xf32, #tpu.memory_space<vmem>>, %arg5: memref<32x96xbf16, #tpu.memory_space<vmem>>, %arg6: memref<1x96xf32, #tpu.memory_space<vmem>>, %arg7: memref<32x32xbf16, #tpu.memory_space<vmem>>, %arg8: memref<1x32xf32, #tpu.memory_space<vmem>>, %arg9: memref<1x32xf32, #tpu.memory_space<vmem>>, %arg10: memref<1x32xf32, #tpu.memory_space<vmem>>, %arg11: memref<32x128xbf16, #tpu.memory_space<vmem>>, %arg12: memref<1x128xf32, #tpu.memory_space<vmem>>, %arg13: memref<128x32xbf16, #tpu.memory_space<vmem>>, %arg14: memref<1x32xf32, #tpu.memory_space<vmem>>, %arg15: memref<1x8x32xf32, #tpu.memory_space<vmem>>, %arg16: memref<8x32xbf16, #tpu.memory_space<vmem>>) attributes {dimension_semantics = [#tpu.dimension_semantics<parallel>], iteration_bounds = array<i64: 2>, scalar_prefetch = 0 : i64, scratch_operands = 1 : i64, tpu.core_type = #tpu.core_type<tc>, window_params = [{transform_indices = @transform_0, window_bounds = array<i64: 1, 8, 32>}, {pipeline_mode = #tpu.pipeline_mode<synchronous>, transform_indices = @transform_1, window_bounds = array<i64: 8, 8>}, {pipeline_mode = #tpu.pipeline_mode<synchronous>, transform_indices = @transform_2, window_bounds = array<i64: 1, 32>}, {pipeline_mode = #tpu.pipeline_mode<synchronous>, transform_indices = @transform_3, window_bounds = array<i64: 1, 32>}, {pipeline_mode = #tpu.pipeline_mode<synchronous>, transform_indices = @transform_4, window_bounds = array<i64: 32, 96>}, {pipeline_mode = #tpu.pipeline_mode<synchronous>, transform_indices = @transform_5, window_bounds = array<i64: 1, 96>}, {pipeline_mode = #tpu.pipeline_mode<synchronous>, transform_indices = @transform_6, window_bounds = array<i64: 32, 32>}, {pipeline_mode = #tpu.pipeline_mode<synchronous>, transform_indices = @transform_7, window_bounds = array<i64: 1, 32>}, {pipeline_mode = #tpu.pipeline_mode<synchronous>, transform_indices = @transform_8, window_bounds = array<i64: 1, 32>}, {pipeline_mode = #tpu.pipeline_mode<synchronous>, transform_indices = @transform_9, window_bounds = array<i64: 1, 32>}, {pipeline_mode = #tpu.pipeline_mode<synchronous>, transform_indices = @transform_10, window_bounds = array<i64: 32, 128>}, {pipeline_mode = #tpu.pipeline_mode<synchronous>, transform_indices = @transform_11, window_bounds = array<i64: 1, 128>}, {pipeline_mode = #tpu.pipeline_mode<synchronous>, transform_indices = @transform_12, window_bounds = array<i64: 128, 32>}, {pipeline_mode = #tpu.pipeline_mode<synchronous>, transform_indices = @transform_13, window_bounds = array<i64: 1, 32>}, {transform_indices = @transform_14, window_bounds = array<i64: 1, 8, 32>}]} {
    %c0 = arith.constant 0 : index
    %c0_0 = arith.constant 0 : index
    %c0_1 = arith.constant 0 : index
    %0 = vector.load %arg1[%c0, %c0_0, %c0_1] : memref<1x8x32xf32, #tpu.memory_space<vmem>>, vector<1x8x32xf32>
    %1 = vector.shape_cast %0 : vector<1x8x32xf32> to vector<8x32xf32>
    %c0_2 = arith.constant 0 : index
    %c0_3 = arith.constant 0 : index
    %2 = vector.load %arg3[%c0_2, %c0_3] : memref<1x32xf32, #tpu.memory_space<vmem>>, vector<1x32xf32>
    %c0_4 = arith.constant 0 : index
    %c0_5 = arith.constant 0 : index
    %3 = vector.load %arg4[%c0_4, %c0_5] : memref<1x32xf32, #tpu.memory_space<vmem>>, vector<1x32xf32>
    %cst = arith.constant dense<0.000000e+00> : vector<8xf32>
    %4 = vector.multi_reduction <add>, %1, %cst [1] : vector<8x32xf32> to vector<8xf32>
    %5 = vector.shape_cast %4 : vector<8xf32> to vector<8x1xf32>
    %cst_6 = arith.constant 3.200000e+01 : f32
    %6 = vector.broadcast %cst_6 : f32 to vector<8x1xf32>
    %7 = arith.divf %5, %6 : vector<8x1xf32>
    %8 = vector.broadcast %7 : vector<8x1xf32> to vector<8x32xf32>
    %9 = arith.subf %1, %8 : vector<8x32xf32>
    %10 = arith.mulf %9, %9 : vector<8x32xf32>
    %cst_7 = arith.constant dense<0.000000e+00> : vector<8xf32>
    %11 = vector.multi_reduction <add>, %10, %cst_7 [1] : vector<8x32xf32> to vector<8xf32>
    %12 = vector.shape_cast %11 : vector<8xf32> to vector<8x1xf32>
    %cst_8 = arith.constant 3.200000e+01 : f32
    %13 = vector.broadcast %cst_8 : f32 to vector<8x1xf32>
    %14 = arith.divf %12, %13 : vector<8x1xf32>
    %15 = vector.broadcast %7 : vector<8x1xf32> to vector<8x32xf32>
    %16 = arith.subf %1, %15 : vector<8x32xf32>
    %cst_9 = arith.constant 9.99999974E-6 : f32
    %17 = vector.broadcast %cst_9 : f32 to vector<8x1xf32>
    %18 = arith.addf %14, %17 : vector<8x1xf32>
    %19 = math.rsqrt %18 : vector<8x1xf32>
    %20 = vector.broadcast %19 : vector<8x1xf32> to vector<8x32xf32>
    %21 = arith.mulf %16, %20 : vector<8x32xf32>
    %22 = vector.broadcast %2 : vector<1x32xf32> to vector<8x32xf32>
    %23 = arith.mulf %21, %22 : vector<8x32xf32>
    %24 = vector.broadcast %3 : vector<1x32xf32> to vector<8x32xf32>
    %25 = arith.addf %23, %24 : vector<8x32xf32>
    %26 = arith.truncf %25 : vector<8x32xf32> to vector<8x32xbf16>
    %c0_10 = arith.constant 0 : index
    %c0_11 = arith.constant 0 : index
    %27 = vector.load %arg5[%c0_10, %c0_11] : memref<32x96xbf16, #tpu.memory_space<vmem>>, vector<32x96xbf16>
    %cst_12 = arith.constant dense<0.000000e+00> : vector<8x96xf32>
    %28 = tpu.matmul %26, %27, %cst_12 {dimension_numbers = #tpu.dot_dimension_numbers<[1], [0], [0], [1], [0, 0, 1, 1], [], []>} : vector<8x32xbf16>, vector<32x96xbf16>, vector<8x96xf32> -> vector<8x96xf32>
    %c0_13 = arith.constant 0 : index
    %c0_14 = arith.constant 0 : index
    %29 = vector.load %arg6[%c0_13, %c0_14] : memref<1x96xf32, #tpu.memory_space<vmem>>, vector<1x96xf32>
    %30 = vector.broadcast %29 : vector<1x96xf32> to vector<8x96xf32>
    %31 = arith.addf %28, %30 : vector<8x96xf32>
    %32 = vector.extract_strided_slice %31 {offsets = [0, 0], sizes = [8, 32], strides = [1, 1]} : vector<8x96xf32> to vector<8x32xf32>
    %33 = vector.shape_cast %32 : vector<8x32xf32> to vector<1x8x32xf32>
    %34 = arith.truncf %33 : vector<1x8x32xf32> to vector<1x8x32xbf16>
    %35 = vector.extract_strided_slice %31 {offsets = [0, 32], sizes = [8, 32], strides = [1, 1]} : vector<8x96xf32> to vector<8x32xf32>
    %36 = vector.shape_cast %35 : vector<8x32xf32> to vector<1x8x32xf32>
    %37 = arith.truncf %36 : vector<1x8x32xf32> to vector<1x8x32xbf16>
    %38 = vector.extract_strided_slice %31 {offsets = [0, 64], sizes = [8, 32], strides = [1, 1]} : vector<8x96xf32> to vector<8x32xf32>
    %39 = vector.shape_cast %38 : vector<8x32xf32> to vector<1x8x32xf32>
    %40 = arith.truncf %39 : vector<1x8x32xf32> to vector<1x8x32xbf16>
    %c0_15 = arith.constant 0 : index
    %c0_16 = arith.constant 0 : index
    %41 = vector.load %arg2[%c0_15, %c0_16] : memref<8x8xf32, #tpu.memory_space<vmem>>, vector<8x8xf32>
    %42 = vector.extract_strided_slice %34 {offsets = [0, 0, 0], sizes = [1, 8, 8], strides = [1, 1, 1]} : vector<1x8x32xbf16> to vector<1x8x8xbf16>
    %43 = vector.extract_strided_slice %37 {offsets = [0, 0, 0], sizes = [1, 8, 8], strides = [1, 1, 1]} : vector<1x8x32xbf16> to vector<1x8x8xbf16>
    "tpu.trace_start"() <{level = 10 : i32, message = "bqd,bkd->bqk"}> : () -> ()
    %cst_17 = arith.constant dense<0.000000e+00> : vector<1x8x8xf32>
    %44 = tpu.matmul %42, %43, %cst_17 {dimension_numbers = #tpu.dot_dimension_numbers<[2], [2], [1], [1], [0, 0, 0, 1, 1, 1], [0], [0]>} : vector<1x8x8xbf16>, vector<1x8x8xbf16>, vector<1x8x8xf32> -> vector<1x8x8xf32>
    "tpu.trace_stop"() : () -> ()
    %45 = vector.shape_cast %41 : vector<8x8xf32> to vector<1x8x8xf32>
    %46 = arith.addf %44, %45 : vector<1x8x8xf32>
    %cst_18 = arith.constant dense<0xFF800000> : vector<1x8xf32>
    %47 = vector.multi_reduction <maximumf>, %46, %cst_18 [2] : vector<1x8x8xf32> to vector<1x8xf32>
    %48 = vector.shape_cast %47 : vector<1x8xf32> to vector<1x8x1xf32>
    %49 = vector.broadcast %48 : vector<1x8x1xf32> to vector<1x8x8xf32>
    %50 = arith.subf %46, %49 : vector<1x8x8xf32>
    %51 = math.exp %50 : vector<1x8x8xf32>
    %cst_19 = arith.constant dense<0.000000e+00> : vector<1x8xf32>
    %52 = vector.multi_reduction <add>, %51, %cst_19 [2] : vector<1x8x8xf32> to vector<1x8xf32>
    %53 = vector.shape_cast %52 : vector<1x8xf32> to vector<1x8x1xf32>
    %54 = tpu.reciprocal %53 {approx = true} : vector<1x8x1xf32> -> vector<1x8x1xf32>
    %55 = vector.broadcast %54 : vector<1x8x1xf32> to vector<1x8x8xf32>
    %56 = arith.mulf %51, %55 : vector<1x8x8xf32>
    %57 = arith.truncf %56 : vector<1x8x8xf32> to vector<1x8x8xbf16>
    %58 = vector.extract_strided_slice %40 {offsets = [0, 0, 0], sizes = [1, 8, 8], strides = [1, 1, 1]} : vector<1x8x32xbf16> to vector<1x8x8xbf16>
    "tpu.trace_start"() <{level = 10 : i32, message = "bqk,bkd->bqd"}> : () -> ()
    %cst_20 = arith.constant dense<0.000000e+00> : vector<1x8x8xf32>
    %59 = tpu.matmul %57, %58, %cst_20 {dimension_numbers = #tpu.dot_dimension_numbers<[2], [1], [1], [2], [0, 0, 0, 1, 1, 2], [0], [0]>} : vector<1x8x8xbf16>, vector<1x8x8xbf16>, vector<1x8x8xf32> -> vector<1x8x8xf32>
    "tpu.trace_stop"() : () -> ()
    %60 = vector.shape_cast %59 : vector<1x8x8xf32> to vector<8x8xf32>
    %61 = arith.truncf %60 : vector<8x8xf32> to vector<8x8xbf16>
    %c0_21 = arith.constant 0 : index
    %c0_22 = arith.constant 0 : index
    %62 = vector.load %arg16[%c0_21, %c0_22] : memref<8x32xbf16, #tpu.memory_space<vmem>>, vector<8x8xbf16>
    tpu.vector_store %arg16[%c0_21, %c0_22], %61 {strides = array<i32>} : memref<8x32xbf16, #tpu.memory_space<vmem>>, vector<8x8xbf16>,
    %63 = vector.extract_strided_slice %34 {offsets = [0, 0, 8], sizes = [1, 8, 8], strides = [1, 1, 1]} : vector<1x8x32xbf16> to vector<1x8x8xbf16>
    %64 = vector.extract_strided_slice %37 {offsets = [0, 0, 8], sizes = [1, 8, 8], strides = [1, 1, 1]} : vector<1x8x32xbf16> to vector<1x8x8xbf16>
    "tpu.trace_start"() <{level = 10 : i32, message = "bqd,bkd->bqk"}> : () -> ()
    %cst_23 = arith.constant dense<0.000000e+00> : vector<1x8x8xf32>
    %65 = tpu.matmul %63, %64, %cst_23 {dimension_numbers = #tpu.dot_dimension_numbers<[2], [2], [1], [1], [0, 0, 0, 1, 1, 1], [0], [0]>} : vector<1x8x8xbf16>, vector<1x8x8xbf16>, vector<1x8x8xf32> -> vector<1x8x8xf32>
    "tpu.trace_stop"() : () -> ()
    %66 = vector.shape_cast %41 : vector<8x8xf32> to vector<1x8x8xf32>
    %67 = arith.addf %65, %66 : vector<1x8x8xf32>
    %cst_24 = arith.constant dense<0xFF800000> : vector<1x8xf32>
    %68 = vector.multi_reduction <maximumf>, %67, %cst_24 [2] : vector<1x8x8xf32> to vector<1x8xf32>
    %69 = vector.shape_cast %68 : vector<1x8xf32> to vector<1x8x1xf32>
    %70 = vector.broadcast %69 : vector<1x8x1xf32> to vector<1x8x8xf32>
    %71 = arith.subf %67, %70 : vector<1x8x8xf32>
    %72 = math.exp %71 : vector<1x8x8xf32>
    %cst_25 = arith.constant dense<0.000000e+00> : vector<1x8xf32>
    %73 = vector.multi_reduction <add>, %72, %cst_25 [2] : vector<1x8x8xf32> to vector<1x8xf32>
    %74 = vector.shape_cast %73 : vector<1x8xf32> to vector<1x8x1xf32>
    %75 = tpu.reciprocal %74 {approx = true} : vector<1x8x1xf32> -> vector<1x8x1xf32>
    %76 = vector.broadcast %75 : vector<1x8x1xf32> to vector<1x8x8xf32>
    %77 = arith.mulf %72, %76 : vector<1x8x8xf32>
    %78 = arith.truncf %77 : vector<1x8x8xf32> to vector<1x8x8xbf16>
    %79 = vector.extract_strided_slice %40 {offsets = [0, 0, 8], sizes = [1, 8, 8], strides = [1, 1, 1]} : vector<1x8x32xbf16> to vector<1x8x8xbf16>
    "tpu.trace_start"() <{level = 10 : i32, message = "bqk,bkd->bqd"}> : () -> ()
    %cst_26 = arith.constant dense<0.000000e+00> : vector<1x8x8xf32>
    %80 = tpu.matmul %78, %79, %cst_26 {dimension_numbers = #tpu.dot_dimension_numbers<[2], [1], [1], [2], [0, 0, 0, 1, 1, 2], [0], [0]>} : vector<1x8x8xbf16>, vector<1x8x8xbf16>, vector<1x8x8xf32> -> vector<1x8x8xf32>
    "tpu.trace_stop"() : () -> ()
    %81 = vector.shape_cast %80 : vector<1x8x8xf32> to vector<8x8xf32>
    %82 = arith.truncf %81 : vector<8x8xf32> to vector<8x8xbf16>
    %c0_27 = arith.constant 0 : index
    %c8 = arith.constant 8 : index
    %83 = vector.load %arg16[%c0_27, %c8] : memref<8x32xbf16, #tpu.memory_space<vmem>>, vector<8x8xbf16>
    tpu.vector_store %arg16[%c0_27, %c8], %82 {strides = array<i32>} : memref<8x32xbf16, #tpu.memory_space<vmem>>, vector<8x8xbf16>,
    %84 = vector.extract_strided_slice %34 {offsets = [0, 0, 16], sizes = [1, 8, 8], strides = [1, 1, 1]} : vector<1x8x32xbf16> to vector<1x8x8xbf16>
    %85 = vector.extract_strided_slice %37 {offsets = [0, 0, 16], sizes = [1, 8, 8], strides = [1, 1, 1]} : vector<1x8x32xbf16> to vector<1x8x8xbf16>
    "tpu.trace_start"() <{level = 10 : i32, message = "bqd,bkd->bqk"}> : () -> ()
    %cst_28 = arith.constant dense<0.000000e+00> : vector<1x8x8xf32>
    %86 = tpu.matmul %84, %85, %cst_28 {dimension_numbers = #tpu.dot_dimension_numbers<[2], [2], [1], [1], [0, 0, 0, 1, 1, 1], [0], [0]>} : vector<1x8x8xbf16>, vector<1x8x8xbf16>, vector<1x8x8xf32> -> vector<1x8x8xf32>
    "tpu.trace_stop"() : () -> ()
    %87 = vector.shape_cast %41 : vector<8x8xf32> to vector<1x8x8xf32>
    %88 = arith.addf %86, %87 : vector<1x8x8xf32>
    %cst_29 = arith.constant dense<0xFF800000> : vector<1x8xf32>
    %89 = vector.multi_reduction <maximumf>, %88, %cst_29 [2] : vector<1x8x8xf32> to vector<1x8xf32>
    %90 = vector.shape_cast %89 : vector<1x8xf32> to vector<1x8x1xf32>
    %91 = vector.broadcast %90 : vector<1x8x1xf32> to vector<1x8x8xf32>
    %92 = arith.subf %88, %91 : vector<1x8x8xf32>
    %93 = math.exp %92 : vector<1x8x8xf32>
    %cst_30 = arith.constant dense<0.000000e+00> : vector<1x8xf32>
    %94 = vector.multi_reduction <add>, %93, %cst_30 [2] : vector<1x8x8xf32> to vector<1x8xf32>
    %95 = vector.shape_cast %94 : vector<1x8xf32> to vector<1x8x1xf32>
    %96 = tpu.reciprocal %95 {approx = true} : vector<1x8x1xf32> -> vector<1x8x1xf32>
    %97 = vector.broadcast %96 : vector<1x8x1xf32> to vector<1x8x8xf32>
    %98 = arith.mulf %93, %97 : vector<1x8x8xf32>
    %99 = arith.truncf %98 : vector<1x8x8xf32> to vector<1x8x8xbf16>
    %100 = vector.extract_strided_slice %40 {offsets = [0, 0, 16], sizes = [1, 8, 8], strides = [1, 1, 1]} : vector<1x8x32xbf16> to vector<1x8x8xbf16>
    "tpu.trace_start"() <{level = 10 : i32, message = "bqk,bkd->bqd"}> : () -> ()
    %cst_31 = arith.constant dense<0.000000e+00> : vector<1x8x8xf32>
    %101 = tpu.matmul %99, %100, %cst_31 {dimension_numbers = #tpu.dot_dimension_numbers<[2], [1], [1], [2], [0, 0, 0, 1, 1, 2], [0], [0]>} : vector<1x8x8xbf16>, vector<1x8x8xbf16>, vector<1x8x8xf32> -> vector<1x8x8xf32>
    "tpu.trace_stop"() : () -> ()
    %102 = vector.shape_cast %101 : vector<1x8x8xf32> to vector<8x8xf32>
    %103 = arith.truncf %102 : vector<8x8xf32> to vector<8x8xbf16>
    %c0_32 = arith.constant 0 : index
    %c16 = arith.constant 16 : index
    %104 = vector.load %arg16[%c0_32, %c16] : memref<8x32xbf16, #tpu.memory_space<vmem>>, vector<8x8xbf16>
    tpu.vector_store %arg16[%c0_32, %c16], %103 {strides = array<i32>} : memref<8x32xbf16, #tpu.memory_space<vmem>>, vector<8x8xbf16>,
    %105 = vector.extract_strided_slice %34 {offsets = [0, 0, 24], sizes = [1, 8, 8], strides = [1, 1, 1]} : vector<1x8x32xbf16> to vector<1x8x8xbf16>
    %106 = vector.extract_strided_slice %37 {offsets = [0, 0, 24], sizes = [1, 8, 8], strides = [1, 1, 1]} : vector<1x8x32xbf16> to vector<1x8x8xbf16>
    "tpu.trace_start"() <{level = 10 : i32, message = "bqd,bkd->bqk"}> : () -> ()
    %cst_33 = arith.constant dense<0.000000e+00> : vector<1x8x8xf32>
    %107 = tpu.matmul %105, %106, %cst_33 {dimension_numbers = #tpu.dot_dimension_numbers<[2], [2], [1], [1], [0, 0, 0, 1, 1, 1], [0], [0]>} : vector<1x8x8xbf16>, vector<1x8x8xbf16>, vector<1x8x8xf32> -> vector<1x8x8xf32>
    "tpu.trace_stop"() : () -> ()
    %108 = vector.shape_cast %41 : vector<8x8xf32> to vector<1x8x8xf32>
    %109 = arith.addf %107, %108 : vector<1x8x8xf32>
    %cst_34 = arith.constant dense<0xFF800000> : vector<1x8xf32>
    %110 = vector.multi_reduction <maximumf>, %109, %cst_34 [2] : vector<1x8x8xf32> to vector<1x8xf32>
    %111 = vector.shape_cast %110 : vector<1x8xf32> to vector<1x8x1xf32>
    %112 = vector.broadcast %111 : vector<1x8x1xf32> to vector<1x8x8xf32>
    %113 = arith.subf %109, %112 : vector<1x8x8xf32>
    %114 = math.exp %113 : vector<1x8x8xf32>
    %cst_35 = arith.constant dense<0.000000e+00> : vector<1x8xf32>
    %115 = vector.multi_reduction <add>, %114, %cst_35 [2] : vector<1x8x8xf32> to vector<1x8xf32>
    %116 = vector.shape_cast %115 : vector<1x8xf32> to vector<1x8x1xf32>
    %117 = tpu.reciprocal %116 {approx = true} : vector<1x8x1xf32> -> vector<1x8x1xf32>
    %118 = vector.broadcast %117 : vector<1x8x1xf32> to vector<1x8x8xf32>
    %119 = arith.mulf %114, %118 : vector<1x8x8xf32>
    %120 = arith.truncf %119 : vector<1x8x8xf32> to vector<1x8x8xbf16>
    %121 = vector.extract_strided_slice %40 {offsets = [0, 0, 24], sizes = [1, 8, 8], strides = [1, 1, 1]} : vector<1x8x32xbf16> to vector<1x8x8xbf16>
    "tpu.trace_start"() <{level = 10 : i32, message = "bqk,bkd->bqd"}> : () -> ()
    %cst_36 = arith.constant dense<0.000000e+00> : vector<1x8x8xf32>
    %122 = tpu.matmul %120, %121, %cst_36 {dimension_numbers = #tpu.dot_dimension_numbers<[2], [1], [1], [2], [0, 0, 0, 1, 1, 2], [0], [0]>} : vector<1x8x8xbf16>, vector<1x8x8xbf16>, vector<1x8x8xf32> -> vector<1x8x8xf32>
    "tpu.trace_stop"() : () -> ()
    %123 = vector.shape_cast %122 : vector<1x8x8xf32> to vector<8x8xf32>
    %124 = arith.truncf %123 : vector<8x8xf32> to vector<8x8xbf16>
    %c0_37 = arith.constant 0 : index
    %c24 = arith.constant 24 : index
    %125 = vector.load %arg16[%c0_37, %c24] : memref<8x32xbf16, #tpu.memory_space<vmem>>, vector<8x8xbf16>
    tpu.vector_store %arg16[%c0_37, %c24], %124 {strides = array<i32>} : memref<8x32xbf16, #tpu.memory_space<vmem>>, vector<8x8xbf16>,
    %c0_38 = arith.constant 0 : index
    %c0_39 = arith.constant 0 : index
    %126 = vector.load %arg16[%c0_38, %c0_39] : memref<8x32xbf16, #tpu.memory_space<vmem>>, vector<8x32xbf16>
    %c0_40 = arith.constant 0 : index
    %c0_41 = arith.constant 0 : index
    %127 = vector.load %arg7[%c0_40, %c0_41] : memref<32x32xbf16, #tpu.memory_space<vmem>>, vector<32x32xbf16>
    %cst_42 = arith.constant dense<0.000000e+00> : vector<8x32xf32>
    %128 = tpu.matmul %126, %127, %cst_42 {dimension_numbers = #tpu.dot_dimension_numbers<[1], [0], [0], [1], [0, 0, 1, 1], [], []>} : vector<8x32xbf16>, vector<32x32xbf16>, vector<8x32xf32> -> vector<8x32xf32>
    %c0_43 = arith.constant 0 : index
    %c0_44 = arith.constant 0 : index
    %129 = vector.load %arg8[%c0_43, %c0_44] : memref<1x32xf32, #tpu.memory_space<vmem>>, vector<1x32xf32>
    %130 = vector.broadcast %129 : vector<1x32xf32> to vector<8x32xf32>
    %131 = arith.addf %128, %130 : vector<8x32xf32>
    %132 = arith.addf %1, %131 : vector<8x32xf32>
    %c0_45 = arith.constant 0 : index
    %c0_46 = arith.constant 0 : index
    %133 = vector.load %arg9[%c0_45, %c0_46] : memref<1x32xf32, #tpu.memory_space<vmem>>, vector<1x32xf32>
    %c0_47 = arith.constant 0 : index
    %c0_48 = arith.constant 0 : index
    %134 = vector.load %arg10[%c0_47, %c0_48] : memref<1x32xf32, #tpu.memory_space<vmem>>, vector<1x32xf32>
    %cst_49 = arith.constant dense<0.000000e+00> : vector<8xf32>
    %135 = vector.multi_reduction <add>, %132, %cst_49 [1] : vector<8x32xf32> to vector<8xf32>
    %136 = vector.shape_cast %135 : vector<8xf32> to vector<8x1xf32>
    %cst_50 = arith.constant 3.200000e+01 : f32
    %137 = vector.broadcast %cst_50 : f32 to vector<8x1xf32>
    %138 = arith.divf %136, %137 : vector<8x1xf32>
    %139 = vector.broadcast %138 : vector<8x1xf32> to vector<8x32xf32>
    %140 = arith.subf %132, %139 : vector<8x32xf32>
    %141 = arith.mulf %140, %140 : vector<8x32xf32>
    %cst_51 = arith.constant dense<0.000000e+00> : vector<8xf32>
    %142 = vector.multi_reduction <add>, %141, %cst_51 [1] : vector<8x32xf32> to vector<8xf32>
    %143 = vector.shape_cast %142 : vector<8xf32> to vector<8x1xf32>
    %cst_52 = arith.constant 3.200000e+01 : f32
    %144 = vector.broadcast %cst_52 : f32 to vector<8x1xf32>
    %145 = arith.divf %143, %144 : vector<8x1xf32>
    %146 = vector.broadcast %138 : vector<8x1xf32> to vector<8x32xf32>
    %147 = arith.subf %132, %146 : vector<8x32xf32>
    %cst_53 = arith.constant 9.99999974E-6 : f32
    %148 = vector.broadcast %cst_53 : f32 to vector<8x1xf32>
    %149 = arith.addf %145, %148 : vector<8x1xf32>
    %150 = math.rsqrt %149 : vector<8x1xf32>
    %151 = vector.broadcast %150 : vector<8x1xf32> to vector<8x32xf32>
    %152 = arith.mulf %147, %151 : vector<8x32xf32>
    %153 = vector.broadcast %133 : vector<1x32xf32> to vector<8x32xf32>
    %154 = arith.mulf %152, %153 : vector<8x32xf32>
    %155 = vector.broadcast %134 : vector<1x32xf32> to vector<8x32xf32>
    %156 = arith.addf %154, %155 : vector<8x32xf32>
    %157 = arith.truncf %156 : vector<8x32xf32> to vector<8x32xbf16>
    %cst_54 = arith.constant 0.000000e+00 : f32
    %158 = vector.broadcast %cst_54 : f32 to vector<8x32xf32>
    %c0_55 = arith.constant 0 : index
    %c0_56 = arith.constant 0 : index
    %159 = vector.load %arg11[%c0_55, %c0_56] : memref<32x128xbf16, #tpu.memory_space<vmem>>, vector<32x128xbf16>
    %cst_57 = arith.constant dense<0.000000e+00> : vector<8x128xf32>
    %160 = tpu.matmul %157, %159, %cst_57 {dimension_numbers = #tpu.dot_dimension_numbers<[1], [0], [0], [1], [0, 0, 1, 1], [], []>} : vector<8x32xbf16>, vector<32x128xbf16>, vector<8x128xf32> -> vector<8x128xf32>
    %c0_58 = arith.constant 0 : index
    %c0_59 = arith.constant 0 : index
    %161 = vector.load %arg12[%c0_58, %c0_59] : memref<1x128xf32, #tpu.memory_space<vmem>>, vector<1x128xf32>
    %162 = vector.broadcast %161 : vector<1x128xf32> to vector<8x128xf32>
    %163 = arith.addf %160, %162 : vector<8x128xf32>
    %cst_60 = arith.constant 1.702000e+00 : f32
    %164 = vector.broadcast %cst_60 : f32 to vector<8x128xf32>
    %165 = arith.mulf %164, %163 : vector<8x128xf32>
    %166 = arith.negf %165 : vector<8x128xf32>
    %167 = math.exp %166 : vector<8x128xf32>
    %cst_61 = arith.constant 1.000000e+00 : f32
    %168 = vector.broadcast %cst_61 : f32 to vector<8x128xf32>
    %169 = arith.addf %168, %167 : vector<8x128xf32>
    %170 = arith.divf %168, %169 : vector<8x128xf32>
    %171 = arith.mulf %163, %170 : vector<8x128xf32>
    %172 = arith.truncf %171 : vector<8x128xf32> to vector<8x128xbf16>
    %c0_62 = arith.constant 0 : index
    %c0_63 = arith.constant 0 : index
    %173 = vector.load %arg13[%c0_62, %c0_63] : memref<128x32xbf16, #tpu.memory_space<vmem>>, vector<128x32xbf16>
    %cst_64 = arith.constant dense<0.000000e+00> : vector<8x32xf32>
    %174 = tpu.matmul %172, %173, %cst_64 {dimension_numbers = #tpu.dot_dimension_numbers<[1], [0], [0], [1], [0, 0, 1, 1], [], []>} : vector<8x128xbf16>, vector<128x32xbf16>, vector<8x32xf32> -> vector<8x32xf32>
    %175 = arith.addf %158, %174 : vector<8x32xf32>
    %c0_65 = arith.constant 0 : index
    %c0_66 = arith.constant 0 : index
    %176 = vector.load %arg14[%c0_65, %c0_66] : memref<1x32xf32, #tpu.memory_space<vmem>>, vector<1x32xf32>
    %177 = vector.broadcast %176 : vector<1x32xf32> to vector<8x32xf32>
    %178 = arith.addf %175, %177 : vector<8x32xf32>
    %179 = arith.addf %132, %178 : vector<8x32xf32>
    %180 = vector.shape_cast %179 : vector<8x32xf32> to vector<1x8x32xf32>
    %c0_67 = arith.constant 0 : index
    %c0_68 = arith.constant 0 : index
    %c0_69 = arith.constant 0 : index
    %181 = vector.load %arg15[%c0_67, %c0_68, %c0_69] : memref<1x8x32xf32, #tpu.memory_space<vmem>>, vector<1x8x32xf32>
    tpu.vector_store %arg15[%c0_67, %c0_68, %c0_69], %180 {strides = array<i32>} : memref<1x8x32xf32, #tpu.memory_space<vmem>>, vector<1x8x32xf32>,
    return
  }
  func.func @transform_0(%arg0: i32) -> (i32, i32, i32) {
    %c0_i32 = arith.constant 0 : i32
    %c0_i32_0 = arith.constant 0 : i32
    %c0_i32_1 = arith.constant 0 : i32
    return %arg0, %c0_i32, %c0_i32_0 : i32, i32, i32
  }
  func.func @transform_1(%arg0: i32) -> (i32, i32) {
    %c0_i32 = arith.constant 0 : i32
    %c0_i32_0 = arith.constant 0 : i32
    %c0_i32_1 = arith.constant 0 : i32
    return %c0_i32, %c0_i32_0 : i32, i32
  }
  func.func @transform_2(%arg0: i32) -> (i32, i32) {
    %c0_i32 = arith.constant 0 : i32
    %c0_i32_0 = arith.constant 0 : i32
    %c0_i32_1 = arith.constant 0 : i32
    return %c0_i32, %c0_i32_0 : i32, i32
  }
  func.func @transform_3(%arg0: i32) -> (i32, i32) {
    %c0_i32 = arith.constant 0 : i32
    %c0_i32_0 = arith.constant 0 : i32
    %c0_i32_1 = arith.constant 0 : i32
    return %c0_i32, %c0_i32_0 : i32, i32
  }
  func.func @transform_4(%arg0: i32) -> (i32, i32) {
    %c0_i32 = arith.constant 0 : i32
    %c0_i32_0 = arith.constant 0 : i32
    %c0_i32_1 = arith.constant 0 : i32
    return %c0_i32, %c0_i32_0 : i32, i32
  }
  func.func @transform_5(%arg0: i32) -> (i32, i32) {
    %c0_i32 = arith.constant 0 : i32
    %c0_i32_0 = arith.constant 0 : i32
    %c0_i32_1 = arith.constant 0 : i32
    return %c0_i32, %c0_i32_0 : i32, i32
  }
  func.func @transform_6(%arg0: i32) -> (i32, i32) {
    %c0_i32 = arith.constant 0 : i32
    %c0_i32_0 = arith.constant 0 : i32
    %c0_i32_1 = arith.constant 0 : i32
    return %c0_i32, %c0_i32_0 : i32, i32
  }
  func.func @transform_7(%arg0: i32) -> (i32, i32) {
    %c0_i32 = arith.constant 0 : i32
    %c0_i32_0 = arith.constant 0 : i32
    %c0_i32_1 = arith.constant 0 : i32
    return %c0_i32, %c0_i32_0 : i32, i32
  }
  func.func @transform_8(%arg0: i32) -> (i32, i32) {
    %c0_i32 = arith.constant 0 : i32
    %c0_i32_0 = arith.constant 0 : i32
    %c0_i32_1 = arith.constant 0 : i32
    return %c0_i32, %c0_i32_0 : i32, i32
  }
  func.func @transform_9(%arg0: i32) -> (i32, i32) {
    %c0_i32 = arith.constant 0 : i32
    %c0_i32_0 = arith.constant 0 : i32
    %c0_i32_1 = arith.constant 0 : i32
    return %c0_i32, %c0_i32_0 : i32, i32
  }
  func.func @transform_10(%arg0: i32) -> (i32, i32) {
    %c0_i32 = arith.constant 0 : i32
    %c0_i32_0 = arith.constant 0 : i32
    %c0_i32_1 = arith.constant 0 : i32
    return %c0_i32, %c0_i32_0 : i32, i32
  }
  func.func @transform_11(%arg0: i32) -> (i32, i32) {
    %c0_i32 = arith.constant 0 : i32
    %c0_i32_0 = arith.constant 0 : i32
    %c0_i32_1 = arith.constant 0 : i32
    return %c0_i32, %c0_i32_0 : i32, i32
  }
  func.func @transform_12(%arg0: i32) -> (i32, i32) {
    %c0_i32 = arith.constant 0 : i32
    %c0_i32_0 = arith.constant 0 : i32
    %c0_i32_1 = arith.constant 0 : i32
    return %c0_i32, %c0_i32_0 : i32, i32
  }
  func.func @transform_13(%arg0: i32) -> (i32, i32) {
    %c0_i32 = arith.constant 0 : i32
    %c0_i32_0 = arith.constant 0 : i32
    %c0_i32_1 = arith.constant 0 : i32
    return %c0_i32, %c0_i32_0 : i32, i32
  }
  func.func @transform_14(%arg0: i32) -> (i32, i32, i32) {
    %c0_i32 = arith.constant 0 : i32
    %c0_i32_0 = arith.constant 0 : i32
    %c0_i32_1 = arith.constant 0 : i32
    return %arg0, %c0_i32, %c0_i32_0 : i32, i32, i32
  }
}

</mosaic_0001>

<llo_original>
// kernel: tpu_custom_call.1
$region0: #{tpu_custom_call.1}
  #allocation0 [shape = 'u32[]', space=smem, size = 0x4, offset = 0x4, fixed_abs, tag = 'smem constant byte address 0x4 - core index']
  #allocation1 [shape = 'u32[144,128]{1,0:T(1,128)}', space=vmem, size = 0x12000, scoped, tag = 'internal scratch']
  #allocation2 [shape = 'bf16[8,32]{1,0:T(8,128)(2,1)}', space=vmem, size = 0x800, scoped, tag = 'scratch operand']
  %s0 = inlined_call_operand.vmem [shape: f32[2,8,32], index: 0, kind: input, shape index: {}]
  %s1 = inlined_call_operand.vmem [shape: f32[8,8], index: 1, kind: input, shape index: {}]
  %s2 = inlined_call_operand.vmem [shape: f32[1,32], index: 2, kind: input, shape index: {}]
  %s3 = inlined_call_operand.vmem [shape: f32[1,32], index: 3, kind: input, shape index: {}]
  %s4 = inlined_call_operand.vmem [shape: bf16[32,96], index: 4, kind: input, shape index: {}]
  %s5 = inlined_call_operand.vmem [shape: f32[1,96], index: 5, kind: input, shape index: {}]
  %s6 = inlined_call_operand.vmem [shape: bf16[32,32], index: 6, kind: input, shape index: {}]
  %s7 = inlined_call_operand.vmem [shape: f32[1,32], index: 7, kind: input, shape index: {}]
  %s8 = inlined_call_operand.vmem [shape: f32[1,32], index: 8, kind: input, shape index: {}]
  %s9 = inlined_call_operand.vmem [shape: f32[1,32], index: 9, kind: input, shape index: {}]
  %s10 = inlined_call_operand.vmem [shape: bf16[32,128], index: 10, kind: input, shape index: {}]
  %s11 = inlined_call_operand.vmem [shape: f32[1,128], index: 11, kind: input, shape index: {}]
  %s12 = inlined_call_operand.vmem [shape: bf16[128,32], index: 12, kind: input, shape index: {}]
  %s13 = inlined_call_operand.vmem [shape: f32[1,32], index: 13, kind: input, shape index: {}]
  %s14 = inlined_call_operand.hbm [shape: f32[2,8,32], index: 14, kind: output, shape index: {}]
  %s15 = sld [smem:[#allocation0]]
  $region89: #{tpu_custom_call.1} parent=0
    _
  %s17 = ssub.s32 1, %s15
  %s18 = scalar_select 0, %s17, %s15
  $region1: #{tpu_custom_call.1} parent=0
    #allocation3 [shape = 'u8[8192]{0}', space=vmem, size = 0x2000, scoped, tag = 'output window, operand 0']
    #allocation4 [shape = 's32[2]{0}', space=sflag, size = 0x8, scoped, tag = 'scoped memory for tpu_custom_call.1']
    %19 = vsyncpa [#allocation4], 0
    %s20 = scalar_lea.sflag [#allocation4], 1
    %21 = vsyncpa %s20, 0
    loop: start=0, step=1, limit=4
    $region2: #{tpu_custom_call.1} parent=1 // loop_pre_header
      _
    $region3: #{tpu_custom_call.1} parent=1 // loop_header
      %s23 = sphi 0, %s27
      %p24 = scmp.ge.s32.totalorder %s23, 4
      %s33 = sphi 0, %s35
      %s36 = sphi 0, %s33
      %s37 = sphi 0, %s36
      %s53 = sphi 0, %s37
      %s57 = sphi 0, %s57
      %s59 = sphi 0, %s57
      %s60 = sphi 0, %s59
      %s74 = sphi 0, %s60
      %s78 = sphi 0, %s78
      %s80 = sphi 0, %s78
      %s81 = sphi 0, %s80
      %s95 = sphi 0, %s81
      %s99 = sphi 0, %s99
      %s101 = sphi 0, %s99
      %s102 = sphi 0, %s101
      %s116 = sphi 0, %s102
      %s120 = sphi 0, %s120
      %s122 = sphi 0, %s120
      %s123 = sphi 0, %s122
      %s137 = sphi 0, %s123
      %s141 = sphi 0, %s141
      %s143 = sphi 0, %s141
      %s144 = sphi 0, %s143
      %s158 = sphi 0, %s144
      %s162 = sphi 0, %s162
      %s164 = sphi 0, %s162
      %s165 = sphi 0, %s164
      %s179 = sphi 0, %s165
      %s183 = sphi 0, %s183
      %s185 = sphi 0, %s183
      %s186 = sphi 0, %s185
      %s200 = sphi 0, %s186
      %s204 = sphi 0, %s204
      %s206 = sphi 0, %s204
      %s207 = sphi 0, %s206
      %s221 = sphi 0, %s207
      %s225 = sphi 0, %s225
      %s227 = sphi 0, %s225
      %s228 = sphi 0, %s227
      %s242 = sphi 0, %s228
      %s246 = sphi 0, %s246
      %s248 = sphi 0, %s246
      %s249 = sphi 0, %s248
      %s263 = sphi 0, %s249
      %s267 = sphi 0, %s267
      %s269 = sphi 0, %s267
      %s270 = sphi 0, %s269
      %s284 = sphi 0, %s270
      %s288 = sphi 0, %s288
      %s290 = sphi 0, %s288
      %s291 = sphi 0, %s290
      %s305 = sphi 0, %s291
      %s309 = sphi 0, %s309
      %s311 = sphi 0, %s309
      %s312 = sphi 0, %s311
      %s326 = sphi 0, %s312
      %s332 = sphi 0, %s334
      %s335 = sphi 0, %s332
      %s336 = sphi 0, %s335
      %s352 = sphi 0, %s336
    $region4: #{tpu_custom_call.1} parent=1 // loop_header_branch
      %26 = sbr.rel (%p24) target = $region8
    $region5: #{tpu_custom_call.1} parent=1 // loop_body
      %s28 = ssub.s32 %s23, 1
      %s29 = ssub.s32 %s23, 2
      %s30 = sadd.s32 %s23, 1
      %s31 = ssub.s32 %s23, %s30
      %p32 = scmp.eq.s32.totalorder %s31, 0
      %s34 = sadd.s32 %s33, 1
      %s35 = scalar_select %p32, %s33, %s34
      %p38 = pneg %p32
      %p39 = scmp.eq.s32.totalorder %s23, 1
      %p40 = por %p38, %p39
      %p41 = scmp.ne.s32.totalorder %s33, %s36
      %p42 = scmp.eq.s32.totalorder %s23, 0
      %p43 = por %p41, %p42
      %p44 = scmp.ne.s32.totalorder %s33, %s36
      %p45 = scmp.eq.s32.totalorder %s28, 1
      %p46 = por %p44, %p45
      %p47 = scmp.ne.s32.totalorder %s36, %s37
      %p48 = scmp.eq.s32.totalorder %s28, 0
      %p49 = por %p47, %p48
      %p50 = scmp.ne.s32.totalorder %s36, %s37
      %p51 = scmp.eq.s32.totalorder %s29, 1
      %p52 = por %p50, %p51
      %p54 = scmp.ne.s32.totalorder %s37, %s53
      %p55 = scmp.eq.s32.totalorder %s29, 0
      %p56 = por %p54, %p55
      %s58 = sadd.s32 %s57, 1
      %p61 = scmp.eq.s32.totalorder %s23, 1
      %p62 = scmp.ne.s32.totalorder %s57, %s59
      %p63 = scmp.eq.s32.totalorder %s23, 0
      %p64 = por %p62, %p63
      %p65 = scmp.ne.s32.totalorder %s57, %s59
      %p66 = scmp.eq.s32.totalorder %s28, 1
      %p67 = por %p65, %p66
      %p68 = scmp.ne.s32.totalorder %s59, %s60
      %p69 = scmp.eq.s32.totalorder %s28, 0
      %p70 = por %p68, %p69
      %p71 = scmp.ne.s32.totalorder %s59, %s60
      %p72 = scmp.eq.s32.totalorder %s29, 1
      %p73 = por %p71, %p72
      %p75 = scmp.ne.s32.totalorder %s60, %s74
      %p76 = scmp.eq.s32.totalorder %s29, 0
      %p77 = por %p75, %p76
      %s79 = sadd.s32 %s78, 1
      %p82 = scmp.eq.s32.totalorder %s23, 1
      %p83 = scmp.ne.s32.totalorder %s78, %s80
      %p84 = scmp.eq.s32.totalorder %s23, 0
      %p85 = por %p83, %p84
      %p86 = scmp.ne.s32.totalorder %s78, %s80
      %p87 = scmp.eq.s32.totalorder %s28, 1
      %p88 = por %p86, %p87
      %p89 = scmp.ne.s32.totalorder %s80, %s81
      %p90 = scmp.eq.s32.totalorder %s28, 0
      %p91 = por %p89, %p90
      %p92 = scmp.ne.s32.totalorder %s80, %s81
      %p93 = scmp.eq.s32.totalorder %s29, 1
      %p94 = por %p92, %p93
      %p96 = scmp.ne.s32.totalorder %s81, %s95
      %p97 = scmp.eq.s32.totalorder %s29, 0
      %p98 = por %p96, %p97
      %s100 = sadd.s32 %s99, 1
      %p103 = scmp.eq.s32.totalorder %s23, 1
      %p104 = scmp.ne.s32.totalorder %s99, %s101
      %p105 = scmp.eq.s32.totalorder %s23, 0
      %p106 = por %p104, %p105
      %p107 = scmp.ne.s32.totalorder %s99, %s101
      %p108 = scmp.eq.s32.totalorder %s28, 1
      %p109 = por %p107, %p108
      %p110 = scmp.ne.s32.totalorder %s101, %s102
      %p111 = scmp.eq.s32.totalorder %s28, 0
      %p112 = por %p110, %p111
      %p113 = scmp.ne.s32.totalorder %s101, %s102
      %p114 = scmp.eq.s32.totalorder %s29, 1
      %p115 = por %p113, %p114
      %p117 = scmp.ne.s32.totalorder %s102, %s116
      %p118 = scmp.eq.s32.totalorder %s29, 0
      %p119 = por %p117, %p118
      %s121 = sadd.s32 %s120, 1
      %p124 = scmp.eq.s32.totalorder %s23, 1
      %p125 = scmp.ne.s32.totalorder %s120, %s122
      %p126 = scmp.eq.s32.totalorder %s23, 0
      %p127 = por %p125, %p126
      %p128 = scmp.ne.s32.totalorder %s120, %s122
      %p129 = scmp.eq.s32.totalorder %s28, 1
      %p130 = por %p128, %p129
      %p131 = scmp.ne.s32.totalorder %s122, %s123
      %p132 = scmp.eq.s32.totalorder %s28, 0
      %p133 = por %p131, %p132
      %p134 = scmp.ne.s32.totalorder %s122, %s123
      %p135 = scmp.eq.s32.totalorder %s29, 1
      %p136 = por %p134, %p135
      %p138 = scmp.ne.s32.totalorder %s123, %s137
      %p139 = scmp.eq.s32.totalorder %s29, 0
      %p140 = por %p138, %p139
      %s142 = sadd.s32 %s141, 1
      %p145 = scmp.eq.s32.totalorder %s23, 1
      %p146 = scmp.ne.s32.totalorder %s141, %s143
      %p147 = scmp.eq.s32.totalorder %s23, 0
      %p148 = por %p146, %p147
      %p149 = scmp.ne.s32.totalorder %s141, %s143
      %p150 = scmp.eq.s32.totalorder %s28, 1
      %p151 = por %p149, %p150
      %p152 = scmp.ne.s32.totalorder %s143, %s144
      %p153 = scmp.eq.s32.totalorder %s28, 0
      %p154 = por %p152, %p153
      %p155 = scmp.ne.s32.totalorder %s143, %s144
      %p156 = scmp.eq.s32.totalorder %s29, 1
      %p157 = por %p155, %p156
      %p159 = scmp.ne.s32.totalorder %s144, %s158
      %p160 = scmp.eq.s32.totalorder %s29, 0
      %p161 = por %p159, %p160
      %s163 = sadd.s32 %s162, 1
      %p166 = scmp.eq.s32.totalorder %s23, 1
      %p167 = scmp.ne.s32.totalorder %s162, %s164
      %p168 = scmp.eq.s32.totalorder %s23, 0
      %p169 = por %p167, %p168
      %p170 = scmp.ne.s32.totalorder %s162, %s164
      %p171 = scmp.eq.s32.totalorder %s28, 1
      %p172 = por %p170, %p171
      %p173 = scmp.ne.s32.totalorder %s164, %s165
      %p174 = scmp.eq.s32.totalorder %s28, 0
      %p175 = por %p173, %p174
      %p176 = scmp.ne.s32.totalorder %s164, %s165
      %p177 = scmp.eq.s32.totalorder %s29, 1
      %p178 = por %p176, %p177
      %p180 = scmp.ne.s32.totalorder %s165, %s179
      %p181 = scmp.eq.s32.totalorder %s29, 0
      %p182 = por %p180, %p181
      %s184 = sadd.s32 %s183, 1
      %p187 = scmp.eq.s32.totalorder %s23, 1
      %p188 = scmp.ne.s32.totalorder %s183, %s185
      %p189 = scmp.eq.s32.totalorder %s23, 0
      %p190 = por %p188, %p189
      %p191 = scmp.ne.s32.totalorder %s183, %s185
      %p192 = scmp.eq.s32.totalorder %s28, 1
      %p193 = por %p191, %p192
      %p194 = scmp.ne.s32.totalorder %s185, %s186
      %p195 = scmp.eq.s32.totalorder %s28, 0
      %p196 = por %p194, %p195
      %p197 = scmp.ne.s32.totalorder %s185, %s186
      %p198 = scmp.eq.s32.totalorder %s29, 1
      %p199 = por %p197, %p198
      %p201 = scmp.ne.s32.totalorder %s186, %s200
      %p202 = scmp.eq.s32.totalorder %s29, 0
      %p203 = por %p201, %p202
      %s205 = sadd.s32 %s204, 1
      %p208 = scmp.eq.s32.totalorder %s23, 1
      %p209 = scmp.ne.s32.totalorder %s204, %s206
      %p210 = scmp.eq.s32.totalorder %s23, 0
      %p211 = por %p209, %p210
      %p212 = scmp.ne.s32.totalorder %s204, %s206
      %p213 = scmp.eq.s32.totalorder %s28, 1
      %p214 = por %p212, %p213
      %p215 = scmp.ne.s32.totalorder %s206, %s207
      %p216 = scmp.eq.s32.totalorder %s28, 0
      %p217 = por %p215, %p216
      %p218 = scmp.ne.s32.totalorder %s206, %s207
      %p219 = scmp.eq.s32.totalorder %s29, 1
      %p220 = por %p218, %p219
      %p222 = scmp.ne.s32.totalorder %s207, %s221
      %p223 = scmp.eq.s32.totalorder %s29, 0
      %p224 = por %p222, %p223
      %s226 = sadd.s32 %s225, 1
      %p229 = scmp.eq.s32.totalorder %s23, 1
      %p230 = scmp.ne.s32.totalorder %s225, %s227
      %p231 = scmp.eq.s32.totalorder %s23, 0
      %p232 = por %p230, %p231
      %p233 = scmp.ne.s32.totalorder %s225, %s227
      %p234 = scmp.eq.s32.totalorder %s28, 1
      %p235 = por %p233, %p234
      %p236 = scmp.ne.s32.totalorder %s227, %s228
      %p237 = scmp.eq.s32.totalorder %s28, 0
      %p238 = por %p236, %p237
      %p239 = scmp.ne.s32.totalorder %s227, %s228
      %p240 = scmp.eq.s32.totalorder %s29, 1
      %p241 = por %p239, %p240
      %p243 = scmp.ne.s32.totalorder %s228, %s242
      %p244 = scmp.eq.s32.totalorder %s29, 0
      %p245 = por %p243, %p244
      %s247 = sadd.s32 %s246, 1
      %p250 = scmp.eq.s32.totalorder %s23, 1
      %p251 = scmp.ne.s32.totalorder %s246, %s248
      %p252 = scmp.eq.s32.totalorder %s23, 0
      %p253 = por %p251, %p252
      %p254 = scmp.ne.s32.totalorder %s246, %s248
      %p255 = scmp.eq.s32.totalorder %s28, 1
      %p256 = por %p254, %p255
      %p257 = scmp.ne.s32.totalorder %s248, %s249
      %p258 = scmp.eq.s32.totalorder %s28, 0
      %p259 = por %p257, %p258
      %p260 = scmp.ne.s32.totalorder %s248, %s249
      %p261 = scmp.eq.s32.totalorder %s29, 1
      %p262 = por %p260, %p261
      %p264 = scmp.ne.s32.totalorder %s249, %s263
      %p265 = scmp.eq.s32.totalorder %s29, 0
      %p266 = por %p264, %p265
      %s268 = sadd.s32 %s267, 1
      %p271 = scmp.eq.s32.totalorder %s23, 1
      %p272 = scmp.ne.s32.totalorder %s267, %s269
      %p273 = scmp.eq.s32.totalorder %s23, 0
      %p274 = por %p272, %p273
      %p275 = scmp.ne.s32.totalorder %s267, %s269
      %p276 = scmp.eq.s32.totalorder %s28, 1
      %p277 = por %p275, %p276
      %p278 = scmp.ne.s32.totalorder %s269, %s270
      %p279 = scmp.eq.s32.totalorder %s28, 0
      %p280 = por %p278, %p279
      %p281 = scmp.ne.s32.totalorder %s269, %s270
      %p282 = scmp.eq.s32.totalorder %s29, 1
      %p283 = por %p281, %p282
      %p285 = scmp.ne.s32.totalorder %s270, %s284
      %p286 = scmp.eq.s32.totalorder %s29, 0
      %p287 = por %p285, %p286
      %s289 = sadd.s32 %s288, 1
      %p292 = scmp.eq.s32.totalorder %s23, 1
      %p293 = scmp.ne.s32.totalorder %s288, %s290
      %p294 = scmp.eq.s32.totalorder %s23, 0
      %p295 = por %p293, %p294
      %p296 = scmp.ne.s32.totalorder %s288, %s290
      %p297 = scmp.eq.s32.totalorder %s28, 1
      %p298 = por %p296, %p297
      %p299 = scmp.ne.s32.totalorder %s290, %s291
      %p300 = scmp.eq.s32.totalorder %s28, 0
      %p301 = por %p299, %p300
      %p302 = scmp.ne.s32.totalorder %s290, %s291
      %p303 = scmp.eq.s32.totalorder %s29, 1
      %p304 = por %p302, %p303
      %p306 = scmp.ne.s32.totalorder %s291, %s305
      %p307 = scmp.eq.s32.totalorder %s29, 0
      %p308 = por %p306, %p307
      %s310 = sadd.s32 %s309, 1
      %p313 = scmp.eq.s32.totalorder %s23, 1
      %p314 = scmp.ne.s32.totalorder %s309, %s311
      %p315 = scmp.eq.s32.totalorder %s23, 0
      %p316 = por %p314, %p315
      %p317 = scmp.ne.s32.totalorder %s309, %s311
      %p318 = scmp.eq.s32.totalorder %s28, 1
      %p319 = por %p317, %p318
      %p320 = scmp.ne.s32.totalorder %s311, %s312
      %p321 = scmp.eq.s32.totalorder %s28, 0
      %p322 = por %p320, %p321
      %p323 = scmp.ne.s32.totalorder %s311, %s312
      %p324 = scmp.eq.s32.totalorder %s29, 1
      %p325 = por %p323, %p324
      %p327 = scmp.ne.s32.totalorder %s312, %s326
      %p328 = scmp.eq.s32.totalorder %s29, 0
      %p329 = por %p327, %p328
      %s330 = ssub.s32 %s23, %s30
      %p331 = scmp.eq.s32.totalorder %s330, 0
      %s333 = sadd.s32 %s332, 1
      %s334 = scalar_select %p331, %s332, %s333
      %p337 = pneg %p331
      %p338 = scmp.eq.s32.totalorder %s23, 1
      %p339 = por %p337, %p338
      %p340 = scmp.ne.s32.totalorder %s332, %s335
      %p341 = scmp.eq.s32.totalorder %s23, 0
      %p342 = por %p340, %p341
      %p343 = scmp.ne.s32.totalorder %s332, %s335
      %p344 = scmp.eq.s32.totalorder %s28, 1
      %p345 = por %p343, %p344
      %p346 = scmp.ne.s32.totalorder %s335, %s336
      %p347 = scmp.eq.s32.totalorder %s28, 0
      %p348 = por %p346, %p347
      %p349 = scmp.ne.s32.totalorder %s335, %s336
      %p350 = scmp.eq.s32.totalorder %s29, 1
      %p351 = por %p349, %p350
      %p353 = scmp.ne.s32.totalorder %s336, %s352
      %p354 = scmp.eq.s32.totalorder %s29, 0
      %p355 = por %p353, %p354
      %p356 = scmp.le.s32.totalorder 1, %s23
      %p357 = scmp.lt.s32.totalorder %s23, 3
      %p358 = pnand %p356, %p357
      %p359 = pneg %p358
      // Predicated region
      $region9: #{tpu_custom_call.1} parent=5 // pred_check
        _
      $region10: #{tpu_custom_call.1} parent=5 // pred_check_branch
        %361 = sbr.rel (%p358) target = $region12
      $region11: #{tpu_custom_call.1} parent=5 // pred_region
        %s362 = ssub.s32 %s23, 1
        // Predicated region
        $region13: #{tpu_custom_call.1} parent=11 // pred_check
          %p363 = pneg %p70
        $region14: #{tpu_custom_call.1} parent=11 // pred_check_branch
          %365 = sbr.rel (%p363) target = $region16
        $region15: #{tpu_custom_call.1} parent=11 // pred_region
          _
        $region16: #{tpu_custom_call.1} parent=11 // pred_fallthru
          _
        // Predicated region
        $region17: #{tpu_custom_call.1} parent=11 // pred_check
          %p366 = pneg %p91
        $region18: #{tpu_custom_call.1} parent=11 // pred_check_branch
          %368 = sbr.rel (%p366) target = $region20
        $region19: #{tpu_custom_call.1} parent=11 // pred_region
          _
        $region20: #{tpu_custom_call.1} parent=11 // pred_fallthru
          _
        // Predicated region
        $region21: #{tpu_custom_call.1} parent=11 // pred_check
          %p369 = pneg %p112
        $region22: #{tpu_custom_call.1} parent=11 // pred_check_branch
          %371 = sbr.rel (%p369) target = $region24
        $region23: #{tpu_custom_call.1} parent=11 // pred_region
          _
        $region24: #{tpu_custom_call.1} parent=11 // pred_fallthru
          _
        // Predicated region
        $region25: #{tpu_custom_call.1} parent=11 // pred_check
          %p372 = pneg %p133
        $region26: #{tpu_custom_call.1} parent=11 // pred_check_branch
          %374 = sbr.rel (%p372) target = $region28
        $region27: #{tpu_custom_call.1} parent=11 // pred_region
          _
        $region28: #{tpu_custom_call.1} parent=11 // pred_fallthru
          _
        // Predicated region
        $region29: #{tpu_custom_call.1} parent=11 // pred_check
          %p375 = pneg %p154
        $region30: #{tpu_custom_call.1} parent=11 // pred_check_branch
          %377 = sbr.rel (%p375) target = $region32
        $region31: #{tpu_custom_call.1} parent=11 // pred_region
          _
        $region32: #{tpu_custom_call.1} parent=11 // pred_fallthru
          _
        // Predicated region
        $region33: #{tpu_custom_call.1} parent=11 // pred_check
          %p378 = pneg %p175
        $region34: #{tpu_custom_call.1} parent=11 // pred_check_branch
          %380 = sbr.rel (%p378) target = $region36
        $region35: #{tpu_custom_call.1} parent=11 // pred_region
          _
        $region36: #{tpu_custom_call.1} parent=11 // pred_fallthru
          _
        // Predicated region
        $region37: #{tpu_custom_call.1} parent=11 // pred_check
          %p381 = pneg %p196
        $region38: #{tpu_custom_call.1} parent=11 // pred_check_branch
          %383 = sbr.rel (%p381) target = $region40
        $region39: #{tpu_custom_call.1} parent=11 // pred_region
          _
        $region40: #{tpu_custom_call.1} parent=11 // pred_fallthru
          _
        // Predicated region
        $region41: #{tpu_custom_call.1} parent=11 // pred_check
          %p384 = pneg %p217
        $region42: #{tpu_custom_call.1} parent=11 // pred_check_branch
          %386 = sbr.rel (%p384) target = $region44
        $region43: #{tpu_custom_call.1} parent=11 // pred_region
          _
        $region44: #{tpu_custom_call.1} parent=11 // pred_fallthru
          _
        // Predicated region
        $region45: #{tpu_custom_call.1} parent=11 // pred_check
          %p387 = pneg %p238
        $region46: #{tpu_custom_call.1} parent=11 // pred_check_branch
          %389 = sbr.rel (%p387) target = $region48
        $region47: #{tpu_custom_call.1} parent=11 // pred_region
          _
        $region48: #{tpu_custom_call.1} parent=11 // pred_fallthru
          _
        // Predicated region
        $region49: #{tpu_custom_call.1} parent=11 // pred_check
          %p390 = pneg %p259
        $region50: #{tpu_custom_call.1} parent=11 // pred_check_branch
          %392 = sbr.rel (%p390) target = $region52
        $region51: #{tpu_custom_call.1} parent=11 // pred_region
          _
        $region52: #{tpu_custom_call.1} parent=11 // pred_fallthru
          _
        // Predicated region
        $region53: #{tpu_custom_call.1} parent=11 // pred_check
          %p393 = pneg %p280
        $region54: #{tpu_custom_call.1} parent=11 // pred_check_branch
          %395 = sbr.rel (%p393) target = $region56
        $region55: #{tpu_custom_call.1} parent=11 // pred_region
          _
        $region56: #{tpu_custom_call.1} parent=11 // pred_fallthru
          _
        // Predicated region
        $region57: #{tpu_custom_call.1} parent=11 // pred_check
          %p396 = pneg %p301
        $region58: #{tpu_custom_call.1} parent=11 // pred_check_branch
          %398 = sbr.rel (%p396) target = $region60
        $region59: #{tpu_custom_call.1} parent=11 // pred_region
          _
        $region60: #{tpu_custom_call.1} parent=11 // pred_fallthru
          _
        // Predicated region
        $region61: #{tpu_custom_call.1} parent=11 // pred_check
          %p399 = pneg %p322
        $region62: #{tpu_custom_call.1} parent=11 // pred_check_branch
          %401 = sbr.rel (%p399) target = $region64
        $region63: #{tpu_custom_call.1} parent=11 // pred_region
          _
        $region64: #{tpu_custom_call.1} parent=11 // pred_fallthru
          _
      $region12: #{tpu_custom_call.1} parent=5 // pred_fallthru
        _
      %p402 = scmp.lt.s32.totalorder %s23, 2
      // Predicated region
      $region65: #{tpu_custom_call.1} parent=5 // pred_check
        %p403 = pneg %p402
      $region66: #{tpu_custom_call.1} parent=5 // pred_check_branch
        %405 = sbr.rel (%p403) target = $region68
      $region67: #{tpu_custom_call.1} parent=5 // pred_region
        // Predicated region
        $region69: #{tpu_custom_call.1} parent=67 // pred_check
          %p406 = pneg %p43
        $region70: #{tpu_custom_call.1} parent=67 // pred_check_branch
          %408 = sbr.rel (%p406) target = $region72
        $region71: #{tpu_custom_call.1} parent=67 // pred_region
          %p409 = scmp.lt.s32.totalorder %s23, 1
          %s410 = scalar_select %p409, %s23, 1
          %s411 = smul.addr %s410, 8
          %s412 = scalar_lea.vmem %s0, %s411
        $region72: #{tpu_custom_call.1} parent=67 // pred_fallthru
          _
      $region68: #{tpu_custom_call.1} parent=5 // pred_fallthru
        _
      %p413 = scmp.le.s32.totalorder 1, %s23
      %p414 = scmp.lt.s32.totalorder %s23, 3
      %p415 = pnand %p413, %p414
      %p416 = pneg %p415
      // Predicated region
      $region73: #{tpu_custom_call.1} parent=5 // pred_check
        _
      $region74: #{tpu_custom_call.1} parent=5 // pred_check_branch
        %418 = sbr.rel (%p415) target = $region76
      $region75: #{tpu_custom_call.1} parent=5 // pred_region
        %s419 = ssub.s32 %s23, 1
        %p420 = scmp.lt.s32.totalorder %s28, 1
        %s421 = scalar_select %p420, %s28, 1
        %s422 = smul.addr %s421, 8
        %s423 = scalar_lea.vmem %s0, %s422
        %p424 = pneg %p49
        %p425 = pneg %p46
        %p426 = pneg %p70
        %p427 = pneg %p67
        %p428 = pneg %p91
        %p429 = pneg %p88
        %p430 = pneg %p112
        %p431 = pneg %p109
        %p432 = pneg %p133
        %p433 = pneg %p130
        %p434 = pneg %p154
        %p435 = pneg %p151
        %p436 = pneg %p175
        %p437 = pneg %p172
        %p438 = pneg %p196
        %p439 = pneg %p193
        %p440 = pneg %p217
        %p441 = pneg %p214
        %p442 = pneg %p238
        %p443 = pneg %p235
        %p444 = pneg %p259
        %p445 = pneg %p256
        %p446 = pneg %p280
        %p447 = pneg %p277
        %p448 = pneg %p301
        %p449 = pneg %p298
        %p450 = pneg %p322
        %p451 = pneg %p319
        %p452 = pneg %p348
        %p453 = pneg %p345
        %s454 = sand.u32 %s335, 1
        %s455 = scalar_lea.sflag [#allocation4], %s454
        %s456 = sand.u32 %s335, 1
        %s457 = smul.addr %s456, 8
        %s458 = scalar_lea.vmem [#allocation3], %s457
        %p459 = scmp.lt.s32.totalorder %s28, 1
        %s460 = scalar_select %p459, %s28, 1
        %s461 = smul.addr %s460, 8
        %s462 = scalar_lea.vmem %s0, %s461
        %v464 = vld [vmem:[%s462] sm:$0xff]
        %v465 = vld [vmem:[%s2] sm:$0x1]
        %v466 = vld [vmem:[%s3] sm:$0x1]
        %vm467 = vcmask 261120
        %v468 = vsel %vm467, %v464, 0.0
        %469 = vadd.xlane.f32.xlu0 %v468
        %v470 = vpop.xlane.xlu0 %469
        %v471 = vrcp.pop 32.0
        %v472 = vmul.f32 %v470, %v471
        %v473 = vsub.f32 %v464, %v472
        %v474 = vmul.f32 %v473, %v473
        %v475 = vsel %vm467, %v474, 0.0
        %476 = vadd.xlane.f32.xlu0 %v475
        %v477 = vpop.xlane.xlu0 %476
        %v478 = vmul.f32 %v477, %v471
        %v479 = vadd.f32 %v478, 1e-05
        %v480 = vrsqrt.pop %v479
        %v481 = vmul.f32 %v473, %v480
        %v483 = vlaneseq
        %v484 = vshrl.u32 %v483, 7
        %v485 = vsub.s32 0, %v484
        %v486 = vrot.slane %v465, %v485
        %v488 = vmul.f32 %v481, %v486
        %v490 = vlaneseq
        %v491 = vshrl.u32 %v490, 7
        %v492 = vsub.s32 0, %v491
        %v493 = vrot.slane %v466, %v492
        %v495 = vadd.f32 %v488, %v493
        %v496 = vpack.c.bf16 %v495, %v495
        %v497 = vld [vmem:[%s4] sm:$0xf]
        %v498 = vld [vmem:[%s4 + $0x4] sm:$0xf]
        %v499 = vld [vmem:[%s4 + $0x8] sm:$0xf]
        %v500 = vld [vmem:[%s4 + $0xc] sm:$0xf]
        %v501 = vld [vmem:[%s5] sm:$0x1]
        %v503 = vlaneseq
        %v504 = vshrl.u32 %v503, 7
        %v505 = vsub.s32 0, %v504
        %v506 = vrot.slane %v501, %v505
        %v512 = vunpack.c.l.b16 %v497
        %v513 = vunpack.c.l.b16 %v498
        %v514 = vunpack.c.l.b16 %v499
        %v515 = vunpack.c.l.b16 %v500
        %v516 = vpack.c.b16 %v513, %v512
        %v517 = vpack.c.b16 %v515, %v514
        %v521 = vsel %vm467, %v496, 0
        %523 = vmatprep.subr.bf16.mxu0 0
        %524 = vmatpush1.bf16.msra.mxu0 0
        %525 = vmatprep.subr.bf16.mxu0 0
        %526 = vmatpush1.bf16.msra.mxu0 0
        %527 = vmatprep.subr.bf16.mxu0 0
        %528 = vmatpush1.bf16.msra.mxu0 0
        %529 = vmatprep.subr.bf16.mxu0 0
        %530 = vmatpush1.bf16.msra.mxu0 0
        %531 = vmatprep.subr.bf16.mxu0 0
        %532 = vmatpush1.bf16.msra.mxu0 0
        %533 = vmatprep.subr.bf16.mxu0 0
        %534 = vmatpush1.bf16.msra.mxu0 0
        %535 = vmatprep.subr.bf16.mxu0 0
        %536 = vmatpush1.bf16.msra.mxu0 %v517
        %537 = vmatprep.subr.bf16.mxu0 0
        %538 = vmatpush1.bf16.msra.mxu0 %v516
        %539 = vmatprep.subr.bf16.mxu0 0
        %540 = vmatpush2.bf16.msra.mxu0 0
        %541 = vmatprep.subr.bf16.mxu0 0
        %542 = vmatpush2.bf16.msra.mxu0 0
        %543 = vmatprep.subr.bf16.mxu0 0
        %544 = vmatpush2.bf16.msra.mxu0 0
        %545 = vmatprep.subr.bf16.mxu0 0
        %546 = vmatpush2.bf16.msra.mxu0 0
        %547 = vmatprep.subr.bf16.mxu0 0
        %548 = vmatpush2.bf16.msra.mxu0 0
        %549 = vmatprep.subr.bf16.mxu0 0
        %550 = vmatpush2.bf16.msra.mxu0 0
        %551 = vmatprep.subr.bf16.mxu0 0
        %552 = vmatpush2.bf16.msra.mxu0 0
        %553 = vmatprep.subr.bf16.mxu0 0
        %554 = vmatpush2.bf16.msra.mxu0 0
        %555 = vmatprep.mubr.bf16.mxu0 0
        %556 = vmatmul.mubr.bf16.gmra.mxu0 %v521
        %v557 = vpop.f32.mrf.mxu0
        %v558 = vadd.f32 %v506, %v557
        %v559 = vpop.f32.mrf.mxu0
        %v560 = vpop.f32.mrf.mxu0
        %v561 = vpop.f32.mrf.mxu0
        %562 = vdwg.mxu0
        %v563 = vpack.c.bf16 %v558, %v558
        %v564 = vld [vmem:[%s1] sm:$0xff]
        %566 = vrot.lane.b32.xlu0 %v563, 96
        %v567 = vpop.permute.xlu0 %566
        %vm568 = vcmask 64512
        %v570 = vsel %vm568, %v563, 0
        %v573 = vsel %vm568, %v567, 0
        %575 = vmatprep.subr.bf16.mxu0 0
        %576 = vmatpush1.bf16.xpose.msra.mxu0 0
        %577 = vmatprep.subr.bf16.mxu0 0
        %578 = vmatpush1.bf16.xpose.msra.mxu0 0
        %579 = vmatprep.subr.bf16.mxu0 0
        %580 = vmatpush1.bf16.xpose.msra.mxu0 0
        %581 = vmatprep.subr.bf16.mxu0 0
        %582 = vmatpush1.bf16.xpose.msra.mxu0 0
        %583 = vmatprep.subr.bf16.mxu0 0
        %584 = vmatpush1.bf16.xpose.msra.mxu0 0
        %585 = vmatprep.subr.bf16.mxu0 0
        %586 = vmatpush1.bf16.xpose.msra.mxu0 0
        %587 = vmatprep.subr.bf16.mxu0 0
        %588 = vmatpush1.bf16.xpose.msra.mxu0 0
        %589 = vmatprep.subr.bf16.mxu0 0
        %590 = vmatpush1.bf16.xpose.msra.mxu0 %v573
        %591 = vmatprep.subr.bf16.mxu0 0
        %592 = vmatpush2.bf16.xpose.msra.mxu0 0
        %593 = vmatprep.subr.bf16.mxu0 0
        %594 = vmatpush2.bf16.xpose.msra.mxu0 0
        %595 = vmatprep.subr.bf16.mxu0 0
        %596 = vmatpush2.bf16.xpose.msra.mxu0 0
        %597 = vmatprep.subr.bf16.mxu0 0
        %598 = vmatpush2.bf16.xpose.msra.mxu0 0
        %599 = vmatprep.subr.bf16.mxu0 0
        %600 = vmatpush2.bf16.xpose.msra.mxu0 0
        %601 = vmatprep.subr.bf16.mxu0 0
        %602 = vmatpush2.bf16.xpose.msra.mxu0 0
        %603 = vmatprep.subr.bf16.mxu0 0
        %604 = vmatpush2.bf16.xpose.msra.mxu0 0
        %605 = vmatprep.subr.bf16.mxu0 0
        %606 = vmatpush2.bf16.xpose.msra.mxu0 0
        %607 = vmatprep.mubr.bf16.mxu0 0
        %608 = vmatmul.mubr.bf16.gmra.mxu0 %v570
        %v609 = vpop.f32.mrf.mxu0
        %v610 = vadd.f32 %v564, %v609
        %v611 = vpop.f32.mrf.mxu0
        %v612 = vpop.f32.mrf.mxu0
        %v613 = vpop.f32.mrf.mxu0
        %614 = vdwg.mxu0
        %v615 = vsel %vm568, %v610, -inf
        %616 = vmax.xlane.f32.xlu0 %v615
        %v617 = vpop.xlane.xlu0 %616
        %v618 = vsub.f32 %v610, %v617
        %v619 = vmul.f32 %v618, 1.442695
        %v620 = vpow.pop %v619
        %v621 = vsel %vm568, %v620, 0.0
        %622 = vadd.xlane.f32.xlu0 %v621
        %v623 = vpop.xlane.xlu0 %622
        %v624 = vrcp.pop %v623
        %v625 = vmul.f32 %v620, %v624
        %v626 = vpack.c.bf16 %v625, %v625
        %627 = vrot.lane.b32.xlu0 %v563, 64
        %v628 = vpop.permute.xlu0 %627
        %v630 = vsel %vm568, %v626, 0
        %vm632 = vcmask 1043456
        %v634 = vsel %vm632, %v628, 0
        %636 = vmatprep.subr.bf16.mxu0 0
        %637 = vmatpush1.bf16.msra.mxu0 0
        %638 = vmatprep.subr.bf16.mxu0 0
        %639 = vmatpush1.bf16.msra.mxu0 0
        %640 = vmatprep.subr.bf16.mxu0 0
        %641 = vmatpush1.bf16.msra.mxu0 0
        %642 = vmatprep.subr.bf16.mxu0 0
        %643 = vmatpush1.bf16.msra.mxu0 0
        %644 = vmatprep.subr.bf16.mxu0 0
        %645 = vmatpush1.bf16.msra.mxu0 0
        %646 = vmatprep.subr.bf16.mxu0 0
        %647 = vmatpush1.bf16.msra.mxu0 0
        %648 = vmatprep.subr.bf16.mxu0 0
        %649 = vmatpush1.bf16.msra.mxu0 0
        %650 = vmatprep.subr.bf16.mxu0 0
        %651 = vmatpush1.bf16.msra.mxu0 %v634
        %652 = vmatprep.subr.bf16.mxu0 0
        %653 = vmatpush2.bf16.msra.mxu0 0
        %654 = vmatprep.subr.bf16.mxu0 0
        %655 = vmatpush2.bf16.msra.mxu0 0
        %656 = vmatprep.subr.bf16.mxu0 0
        %657 = vmatpush2.bf16.msra.mxu0 0
        %658 = vmatprep.subr.bf16.mxu0 0
        %659 = vmatpush2.bf16.msra.mxu0 0
        %660 = vmatprep.subr.bf16.mxu0 0
        %661 = vmatpush2.bf16.msra.mxu0 0
        %662 = vmatprep.subr.bf16.mxu0 0
        %663 = vmatpush2.bf16.msra.mxu0 0
        %664 = vmatprep.subr.bf16.mxu0 0
        %665 = vmatpush2.bf16.msra.mxu0 0
        %666 = vmatprep.subr.bf16.mxu0 0
        %667 = vmatpush2.bf16.msra.mxu0 0
        %668 = vmatprep.mubr.bf16.mxu0 0
        %669 = vmatmul.mubr.bf16.gmra.mxu0 %v630
        %v670 = vpop.f32.mrf.mxu0
        %v671 = vadd.f32 0.0, %v670
        %v672 = vpop.f32.mrf.mxu0
        %v673 = vpop.f32.mrf.mxu0
        %v674 = vpop.f32.mrf.mxu0
        %675 = vdwg.mxu0
        %v676 = vpack.c.bf16 %v671, %v671
        %vm677 = vcmask 60416
        %678 = vst.msk [vmem:[#allocation2] sm:$0xf] %vm677, %v676
        %679 = vrot.lane.b32.xlu0 %v563, 120
        %v680 = vpop.permute.xlu0 %679
        %681 = vrot.lane.b32.xlu0 %v563, 88
        %v682 = vpop.permute.xlu0 %681
        %v684 = vsel %vm568, %v680, 0
        %v687 = vsel %vm568, %v682, 0
        %689 = vmatprep.subr.bf16.mxu0 0
        %690 = vmatpush1.bf16.xpose.msra.mxu0 0
        %691 = vmatprep.subr.bf16.mxu0 0
        %692 = vmatpush1.bf16.xpose.msra.mxu0 0
        %693 = vmatprep.subr.bf16.mxu0 0
        %694 = vmatpush1.bf16.xpose.msra.mxu0 0
        %695 = vmatprep.subr.bf16.mxu0 0
        %696 = vmatpush1.bf16.xpose.msra.mxu0 0
        %697 = vmatprep.subr.bf16.mxu0 0
        %698 = vmatpush1.bf16.xpose.msra.mxu0 0
        %699 = vmatprep.subr.bf16.mxu0 0
        %700 = vmatpush1.bf16.xpose.msra.mxu0 0
        %701 = vmatprep.subr.bf16.mxu0 0
        %702 = vmatpush1.bf16.xpose.msra.mxu0 0
        %703 = vmatprep.subr.bf16.mxu0 0
        %704 = vmatpush1.bf16.xpose.msra.mxu0 %v687
        %705 = vmatprep.subr.bf16.mxu0 0
        %706 = vmatpush2.bf16.xpose.msra.mxu0 0
        %707 = vmatprep.subr.bf16.mxu0 0
        %708 = vmatpush2.bf16.xpose.msra.mxu0 0
        %709 = vmatprep.subr.bf16.mxu0 0
        %710 = vmatpush2.bf16.xpose.msra.mxu0 0
        %711 = vmatprep.subr.bf16.mxu0 0
        %712 = vmatpush2.bf16.xpose.msra.mxu0 0
        %713 = vmatprep.subr.bf16.mxu0 0
        %714 = vmatpush2.bf16.xpose.msra.mxu0 0
        %715 = vmatprep.subr.bf16.mxu0 0
        %716 = vmatpush2.bf16.xpose.msra.mxu0 0
        %717 = vmatprep.subr.bf16.mxu0 0
        %718 = vmatpush2.bf16.xpose.msra.mxu0 0
        %719 = vmatprep.subr.bf16.mxu0 0
        %720 = vmatpush2.bf16.xpose.msra.mxu0 0
        %721 = vmatprep.mubr.bf16.mxu0 0
        %722 = vmatmul.mubr.bf16.gmra.mxu0 %v684
        %v723 = vpop.f32.mrf.mxu0
        %v724 = vadd.f32 %v564, %v723
        %v725 = vpop.f32.mrf.mxu0
        %v726 = vpop.f32.mrf.mxu0
        %v727 = vpop.f32.mrf.mxu0
        %728 = vdwg.mxu0
        %v729 = vsel %vm568, %v724, -inf
        %730 = vmax.xlane.f32.xlu0 %v729
        %v731 = vpop.xlane.xlu0 %730
        %v732 = vsub.f32 %v724, %v731
        %v733 = vmul.f32 %v732, 1.442695
        %v734 = vpow.pop %v733
        %v735 = vsel %vm568, %v734, 0.0
        %736 = vadd.xlane.f32.xlu0 %v735
        %v737 = vpop.xlane.xlu0 %736
        %v738 = vrcp.pop %v737
        %v739 = vmul.f32 %v734, %v738
        %v740 = vpack.c.bf16 %v739, %v739
        %741 = vrot.lane.b32.xlu0 %v563, 56
        %v742 = vpop.permute.xlu0 %741
        %v744 = vsel %vm568, %v740, 0
        %v747 = vsel %vm632, %v742, 0
        %749 = vmatprep.subr.bf16.mxu0 0
        %750 = vmatpush1.bf16.msra.mxu0 0
        %751 = vmatprep.subr.bf16.mxu0 0
        %752 = vmatpush1.bf16.msra.mxu0 0
        %753 = vmatprep.subr.bf16.mxu0 0
        %754 = vmatpush1.bf16.msra.mxu0 0
        %755 = vmatprep.subr.bf16.mxu0 0
        %756 = vmatpush1.bf16.msra.mxu0 0
        %757 = vmatprep.subr.bf16.mxu0 0
        %758 = vmatpush1.bf16.msra.mxu0 0
        %759 = vmatprep.subr.bf16.mxu0 0
        %760 = vmatpush1.bf16.msra.mxu0 0
        %761 = vmatprep.subr.bf16.mxu0 0
        %762 = vmatpush1.bf16.msra.mxu0 0
        %763 = vmatprep.subr.bf16.mxu0 0
        %764 = vmatpush1.bf16.msra.mxu0 %v747
        %765 = vmatprep.subr.bf16.mxu0 0
        %766 = vmatpush2.bf16.msra.mxu0 0
        %767 = vmatprep.subr.bf16.mxu0 0
        %768 = vmatpush2.bf16.msra.mxu0 0
        %769 = vmatprep.subr.bf16.mxu0 0
        %770 = vmatpush2.bf16.msra.mxu0 0
        %771 = vmatprep.subr.bf16.mxu0 0
        %772 = vmatpush2.bf16.msra.mxu0 0
        %773 = vmatprep.subr.bf16.mxu0 0
        %774 = vmatpush2.bf16.msra.mxu0 0
        %775 = vmatprep.subr.bf16.mxu0 0
        %776 = vmatpush2.bf16.msra.mxu0 0
        %777 = vmatprep.subr.bf16.mxu0 0
        %778 = vmatpush2.bf16.msra.mxu0 0
        %779 = vmatprep.subr.bf16.mxu0 0
        %780 = vmatpush2.bf16.msra.mxu0 0
        %781 = vmatprep.mubr.bf16.mxu0 0
        %782 = vmatmul.mubr.bf16.gmra.mxu0 %v744
        %v783 = vpop.f32.mrf.mxu0
        %v784 = vadd.f32 0.0, %v783
        %v785 = vpop.f32.mrf.mxu0
        %v786 = vpop.f32.mrf.mxu0
        %v787 = vpop.f32.mrf.mxu0
        %788 = vdwg.mxu0
        %v789 = vpack.c.bf16 %v784, %v784
        %v791 = vunpack.c.l.b16 %v789
        %v792 = vpack.c.b16 %v791, %v791
        %793 = vrot.lane.b32.xlu0 %v792, 8
        %v794 = vpop.permute.xlu0 %793
        %vm796 = vcmask 126016
        %797 = vst.msk [vmem:[#allocation2] sm:$0xf] %vm796, %v794
        %798 = vrot.lane.b32.xlu0 %v563, 112
        %v799 = vpop.permute.xlu0 %798
        %800 = vrot.lane.b32.xlu0 %v563, 80
        %v801 = vpop.permute.xlu0 %800
        %v803 = vsel %vm568, %v799, 0
        %v806 = vsel %vm568, %v801, 0
        %808 = vmatprep.subr.bf16.mxu0 0
        %809 = vmatpush1.bf16.xpose.msra.mxu0 0
        %810 = vmatprep.subr.bf16.mxu0 0
        %811 = vmatpush1.bf16.xpose.msra.mxu0 0
        %812 = vmatprep.subr.bf16.mxu0 0
        %813 = vmatpush1.bf16.xpose.msra.mxu0 0
        %814 = vmatprep.subr.bf16.mxu0 0
        %815 = vmatpush1.bf16.xpose.msra.mxu0 0
        %816 = vmatprep.subr.bf16.mxu0 0
        %817 = vmatpush1.bf16.xpose.msra.mxu0 0
        %818 = vmatprep.subr.bf16.mxu0 0
        %819 = vmatpush1.bf16.xpose.msra.mxu0 0
        %820 = vmatprep.subr.bf16.mxu0 0
        %821 = vmatpush1.bf16.xpose.msra.mxu0 0
        %822 = vmatprep.subr.bf16.mxu0 0
        %823 = vmatpush1.bf16.xpose.msra.mxu0 %v806
        %824 = vmatprep.subr.bf16.mxu0 0
        %825 = vmatpush2.bf16.xpose.msra.mxu0 0
        %826 = vmatprep.subr.bf16.mxu0 0
        %827 = vmatpush2.bf16.xpose.msra.mxu0 0
        %828 = vmatprep.subr.bf16.mxu0 0
        %829 = vmatpush2.bf16.xpose.msra.mxu0 0
        %830 = vmatprep.subr.bf16.mxu0 0
        %831 = vmatpush2.bf16.xpose.msra.mxu0 0
        %832 = vmatprep.subr.bf16.mxu0 0
        %833 = vmatpush2.bf16.xpose.msra.mxu0 0
        %834 = vmatprep.subr.bf16.mxu0 0
        %835 = vmatpush2.bf16.xpose.msra.mxu0 0
        %836 = vmatprep.subr.bf16.mxu0 0
        %837 = vmatpush2.bf16.xpose.msra.mxu0 0
        %838 = vmatprep.subr.bf16.mxu0 0
        %839 = vmatpush2.bf16.xpose.msra.mxu0 0
        %840 = vmatprep.mubr.bf16.mxu0 0
        %841 = vmatmul.mubr.bf16.gmra.mxu0 %v803
        %v842 = vpop.f32.mrf.mxu0
        %v843 = vadd.f32 %v564, %v842
        %v844 = vpop.f32.mrf.mxu0
        %v845 = vpop.f32.mrf.mxu0
        %v846 = vpop.f32.mrf.mxu0
        %847 = vdwg.mxu0
        %v848 = vsel %vm568, %v843, -inf
        %849 = vmax.xlane.f32.xlu0 %v848
        %v850 = vpop.xlane.xlu0 %849
        %v851 = vsub.f32 %v843, %v850
        %v852 = vmul.f32 %v851, 1.442695
        %v853 = vpow.pop %v852
        %v854 = vsel %vm568, %v853, 0.0
        %855 = vadd.xlane.f32.xlu0 %v854
        %v856 = vpop.xlane.xlu0 %855
        %v857 = vrcp.pop %v856
        %v858 = vmul.f32 %v853, %v857
        %v859 = vpack.c.bf16 %v858, %v858
        %860 = vrot.lane.b32.xlu0 %v563, 48
        %v861 = vpop.permute.xlu0 %860
        %v863 = vsel %vm568, %v859, 0
        %v866 = vsel %vm632, %v861, 0
        %868 = vmatprep.subr.bf16.mxu0 0
        %869 = vmatpush1.bf16.msra.mxu0 0
        %870 = vmatprep.subr.bf16.mxu0 0
        %871 = vmatpush1.bf16.msra.mxu0 0
        %872 = vmatprep.subr.bf16.mxu0 0
        %873 = vmatpush1.bf16.msra.mxu0 0
        %874 = vmatprep.subr.bf16.mxu0 0
        %875 = vmatpush1.bf16.msra.mxu0 0
        %876 = vmatprep.subr.bf16.mxu0 0
        %877 = vmatpush1.bf16.msra.mxu0 0
        %878 = vmatprep.subr.bf16.mxu0 0
        %879 = vmatpush1.bf16.msra.mxu0 0
        %880 = vmatprep.subr.bf16.mxu0 0
        %881 = vmatpush1.bf16.msra.mxu0 0
        %882 = vmatprep.subr.bf16.mxu0 0
        %883 = vmatpush1.bf16.msra.mxu0 %v866
        %884 = vmatprep.subr.bf16.mxu0 0
        %885 = vmatpush2.bf16.msra.mxu0 0
        %886 = vmatprep.subr.bf16.mxu0 0
        %887 = vmatpush2.bf16.msra.mxu0 0
        %888 = vmatprep.subr.bf16.mxu0 0
        %889 = vmatpush2.bf16.msra.mxu0 0
        %890 = vmatprep.subr.bf16.mxu0 0
        %891 = vmatpush2.bf16.msra.mxu0 0
        %892 = vmatprep.subr.bf16.mxu0 0
        %893 = vmatpush2.bf16.msra.mxu0 0
        %894 = vmatprep.subr.bf16.mxu0 0
        %895 = vmatpush2.bf16.msra.mxu0 0
        %896 = vmatprep.subr.bf16.mxu0 0
        %897 = vmatpush2.bf16.msra.mxu0 0
        %898 = vmatprep.subr.bf16.mxu0 0
        %899 = vmatpush2.bf16.msra.mxu0 0
        %900 = vmatprep.mubr.bf16.mxu0 0
        %901 = vmatmul.mubr.bf16.gmra.mxu0 %v863
        %v902 = vpop.f32.mrf.mxu0
        %v903 = vadd.f32 0.0, %v902
        %v904 = vpop.f32.mrf.mxu0
        %v905 = vpop.f32.mrf.mxu0
        %v906 = vpop.f32.mrf.mxu0
        %907 = vdwg.mxu0
        %v908 = vpack.c.bf16 %v903, %v903
        %v910 = vunpack.c.l.b16 %v908
        %v911 = vpack.c.b16 %v910, %v910
        %912 = vrot.lane.b32.xlu0 %v911, 16
        %v913 = vpop.permute.xlu0 %912
        %vm915 = vcmask 191616
        %916 = vst.msk [vmem:[#allocation2] sm:$0xf] %vm915, %v913
        %917 = vrot.lane.b32.xlu0 %v563, 104
        %v918 = vpop.permute.xlu0 %917
        %919 = vrot.lane.b32.xlu0 %v563, 72
        %v920 = vpop.permute.xlu0 %919
        %v922 = vsel %vm568, %v918, 0
        %v925 = vsel %vm568, %v920, 0
        %927 = vmatprep.subr.bf16.mxu0 0
        %928 = vmatpush1.bf16.xpose.msra.mxu0 0
        %929 = vmatprep.subr.bf16.mxu0 0
        %930 = vmatpush1.bf16.xpose.msra.mxu0 0
        %931 = vmatprep.subr.bf16.mxu0 0
        %932 = vmatpush1.bf16.xpose.msra.mxu0 0
        %933 = vmatprep.subr.bf16.mxu0 0
        %934 = vmatpush1.bf16.xpose.msra.mxu0 0
        %935 = vmatprep.subr.bf16.mxu0 0
        %936 = vmatpush1.bf16.xpose.msra.mxu0 0
        %937 = vmatprep.subr.bf16.mxu0 0
        %938 = vmatpush1.bf16.xpose.msra.mxu0 0
        %939 = vmatprep.subr.bf16.mxu0 0
        %940 = vmatpush1.bf16.xpose.msra.mxu0 0
        %941 = vmatprep.subr.bf16.mxu0 0
        %942 = vmatpush1.bf16.xpose.msra.mxu0 %v925
        %943 = vmatprep.subr.bf16.mxu0 0
        %944 = vmatpush2.bf16.xpose.msra.mxu0 0
        %945 = vmatprep.subr.bf16.mxu0 0
        %946 = vmatpush2.bf16.xpose.msra.mxu0 0
        %947 = vmatprep.subr.bf16.mxu0 0
        %948 = vmatpush2.bf16.xpose.msra.mxu0 0
        %949 = vmatprep.subr.bf16.mxu0 0
        %950 = vmatpush2.bf16.xpose.msra.mxu0 0
        %951 = vmatprep.subr.bf16.mxu0 0
        %952 = vmatpush2.bf16.xpose.msra.mxu0 0
        %953 = vmatprep.subr.bf16.mxu0 0
        %954 = vmatpush2.bf16.xpose.msra.mxu0 0
        %955 = vmatprep.subr.bf16.mxu0 0
        %956 = vmatpush2.bf16.xpose.msra.mxu0 0
        %957 = vmatprep.subr.bf16.mxu0 0
        %958 = vmatpush2.bf16.xpose.msra.mxu0 0
        %959 = vmatprep.mubr.bf16.mxu0 0
        %960 = vmatmul.mubr.bf16.gmra.mxu0 %v922
        %v961 = vpop.f32.mrf.mxu0
        %v962 = vadd.f32 %v564, %v961
        %v963 = vpop.f32.mrf.mxu0
        %v964 = vpop.f32.mrf.mxu0
        %v965 = vpop.f32.mrf.mxu0
        %966 = vdwg.mxu0
        %v967 = vsel %vm568, %v962, -inf
        %968 = vmax.xlane.f32.xlu0 %v967
        %v969 = vpop.xlane.xlu0 %968
        %v970 = vsub.f32 %v962, %v969
        %v971 = vmul.f32 %v970, 1.442695
        %v972 = vpow.pop %v971
        %v973 = vsel %vm568, %v972, 0.0
        %974 = vadd.xlane.f32.xlu0 %v973
        %v975 = vpop.xlane.xlu0 %974
        %v976 = vrcp.pop %v975
        %v977 = vmul.f32 %v972, %v976
        %v978 = vpack.c.bf16 %v977, %v977
        %979 = vrot.lane.b32.xlu0 %v563, 40
        %v980 = vpop.permute.xlu0 %979
        %v982 = vsel %vm568, %v978, 0
        %v985 = vsel %vm632, %v980, 0
        %987 = vmatprep.subr.bf16.mxu0 0
        %988 = vmatpush1.bf16.msra.mxu0 0
        %989 = vmatprep.subr.bf16.mxu0 0
        %990 = vmatpush1.bf16.msra.mxu0 0
        %991 = vmatprep.subr.bf16.mxu0 0
        %992 = vmatpush1.bf16.msra.mxu0 0
        %993 = vmatprep.subr.bf16.mxu0 0
        %994 = vmatpush1.bf16.msra.mxu0 0
        %995 = vmatprep.subr.bf16.mxu0 0
        %996 = vmatpush1.bf16.msra.mxu0 0
        %997 = vmatprep.subr.bf16.mxu0 0
        %998 = vmatpush1.bf16.msra.mxu0 0
        %999 = vmatprep.subr.bf16.mxu0 0
        %1000 = vmatpush1.bf16.msra.mxu0 0
        %1001 = vmatprep.subr.bf16.mxu0 0
        %1002 = vmatpush1.bf16.msra.mxu0 %v985
        %1003 = vmatprep.subr.bf16.mxu0 0
        %1004 = vmatpush2.bf16.msra.mxu0 0
        %1005 = vmatprep.subr.bf16.mxu0 0
        %1006 = vmatpush2.bf16.msra.mxu0 0
        %1007 = vmatprep.subr.bf16.mxu0 0
        %1008 = vmatpush2.bf16.msra.mxu0 0
        %1009 = vmatprep.subr.bf16.mxu0 0
        %1010 = vmatpush2.bf16.msra.mxu0 0
        %1011 = vmatprep.subr.bf16.mxu0 0
        %1012 = vmatpush2.bf16.msra.mxu0 0
        %1013 = vmatprep.subr.bf16.mxu0 0
        %1014 = vmatpush2.bf16.msra.mxu0 0
        %1015 = vmatprep.subr.bf16.mxu0 0
        %1016 = vmatpush2.bf16.msra.mxu0 0
        %1017 = vmatprep.subr.bf16.mxu0 0
        %1018 = vmatpush2.bf16.msra.mxu0 0
        %1019 = vmatprep.mubr.bf16.mxu0 0
        %1020 = vmatmul.mubr.bf16.gmra.mxu0 %v982
        %v1021 = vpop.f32.mrf.mxu0
        %v1022 = vadd.f32 0.0, %v1021
        %v1023 = vpop.f32.mrf.mxu0
        %v1024 = vpop.f32.mrf.mxu0
        %v1025 = vpop.f32.mrf.mxu0
        %1026 = vdwg.mxu0
        %v1027 = vpack.c.bf16 %v1022, %v1022
        %v1029 = vunpack.c.l.b16 %v1027
        %v1030 = vpack.c.b16 %v1029, %v1029
        %1031 = vrot.lane.b32.xlu0 %v1030, 24
        %v1032 = vpop.permute.xlu0 %1031
        %vm1034 = vcmask 257216
        %1035 = vst.msk [vmem:[#allocation2] sm:$0xf] %vm1034, %v1032
        %v1036 = vld [vmem:[#allocation2] sm:$0xf]
        %v1037 = vld [vmem:[%s6] sm:$0xf]
        %v1038 = vld [vmem:[%s6 + $0x4] sm:$0xf]
        %v1039 = vld [vmem:[%s6 + $0x8] sm:$0xf]
        %v1040 = vld [vmem:[%s6 + $0xc] sm:$0xf]
        %v1041 = vld [vmem:[%s7] sm:$0x1]
        %v1043 = vlaneseq
        %v1044 = vshrl.u32 %v1043, 7
        %v1045 = vsub.s32 0, %v1044
        %v1046 = vrot.slane %v1041, %v1045
        %v1052 = vunpack.c.l.b16 %v1037
        %v1053 = vunpack.c.l.b16 %v1038
        %v1054 = vunpack.c.l.b16 %v1039
        %v1055 = vunpack.c.l.b16 %v1040
        %v1056 = vpack.c.b16 %v1053, %v1052
        %v1057 = vpack.c.b16 %v1055, %v1054
        %v1061 = vsel %vm467, %v1036, 0
        %1063 = vmatprep.subr.bf16.mxu0 0
        %1064 = vmatpush1.bf16.msra.mxu0 0
        %1065 = vmatprep.subr.bf16.mxu0 0
        %1066 = vmatpush1.bf16.msra.mxu0 0
        %1067 = vmatprep.subr.bf16.mxu0 0
        %1068 = vmatpush1.bf16.msra.mxu0 0
        %1069 = vmatprep.subr.bf16.mxu0 0
        %1070 = vmatpush1.bf16.msra.mxu0 0
        %1071 = vmatprep.subr.bf16.mxu0 0
        %1072 = vmatpush1.bf16.msra.mxu0 0
        %1073 = vmatprep.subr.bf16.mxu0 0
        %1074 = vmatpush1.bf16.msra.mxu0 0
        %1075 = vmatprep.subr.bf16.mxu0 0
        %1076 = vmatpush1.bf16.msra.mxu0 %v1057
        %1077 = vmatprep.subr.bf16.mxu0 0
        %1078 = vmatpush1.bf16.msra.mxu0 %v1056
        %1079 = vmatprep.subr.bf16.mxu0 0
        %1080 = vmatpush2.bf16.msra.mxu0 0
        %1081 = vmatprep.subr.bf16.mxu0 0
        %1082 = vmatpush2.bf16.msra.mxu0 0
        %1083 = vmatprep.subr.bf16.mxu0 0
        %1084 = vmatpush2.bf16.msra.mxu0 0
        %1085 = vmatprep.subr.bf16.mxu0 0
        %1086 = vmatpush2.bf16.msra.mxu0 0
        %1087 = vmatprep.subr.bf16.mxu0 0
        %1088 = vmatpush2.bf16.msra.mxu0 0
        %1089 = vmatprep.subr.bf16.mxu0 0
        %1090 = vmatpush2.bf16.msra.mxu0 0
        %1091 = vmatprep.subr.bf16.mxu0 0
        %1092 = vmatpush2.bf16.msra.mxu0 0
        %1093 = vmatprep.subr.bf16.mxu0 0
        %1094 = vmatpush2.bf16.msra.mxu0 0
        %1095 = vmatprep.mubr.bf16.mxu0 0
        %1096 = vmatmul.mubr.bf16.gmra.mxu0 %v1061
        %v1097 = vpop.f32.mrf.mxu0
        %v1098 = vadd.f32 %v1046, %v1097
        %v1099 = vpop.f32.mrf.mxu0
        %v1100 = vpop.f32.mrf.mxu0
        %v1101 = vpop.f32.mrf.mxu0
        %1102 = vdwg.mxu0
        %v1103 = vadd.f32 %v464, %v1098
        %v1104 = vld [vmem:[%s8] sm:$0x1]
        %v1105 = vld [vmem:[%s9] sm:$0x1]
        %v1106 = vsel %vm467, %v1103, 0.0
        %1107 = vadd.xlane.f32.xlu0 %v1106
        %v1108 = vpop.xlane.xlu0 %1107
        %v1109 = vmul.f32 %v1108, %v471
        %v1110 = vsub.f32 %v1103, %v1109
        %v1111 = vmul.f32 %v1110, %v1110
        %v1112 = vsel %vm467, %v1111, 0.0
        %1113 = vadd.xlane.f32.xlu0 %v1112
        %v1114 = vpop.xlane.xlu0 %1113
        %v1115 = vmul.f32 %v1114, %v471
        %v1116 = vadd.f32 %v1115, 1e-05
        %v1117 = vrsqrt.pop %v1116
        %v1118 = vmul.f32 %v1110, %v1117
        %v1120 = vlaneseq
        %v1121 = vshrl.u32 %v1120, 7
        %v1122 = vsub.s32 0, %v1121
        %v1123 = vrot.slane %v1104, %v1122
        %v1125 = vmul.f32 %v1118, %v1123
        %v1127 = vlaneseq
        %v1128 = vshrl.u32 %v1127, 7
        %v1129 = vsub.s32 0, %v1128
        %v1130 = vrot.slane %v1105, %v1129
        %v1132 = vadd.f32 %v1125, %v1130
        %v1133 = vpack.c.bf16 %v1132, %v1132
        %v1134 = vld [vmem:[%s10] sm:$0xf]
        %v1135 = vld [vmem:[%s10 + $0x4] sm:$0xf]
        %v1136 = vld [vmem:[%s10 + $0x8] sm:$0xf]
        %v1137 = vld [vmem:[%s10 + $0xc] sm:$0xf]
        %v1138 = vld [vmem:[%s11] sm:$0x1]
        %v1140 = vlaneseq
        %v1141 = vshrl.u32 %v1140, 7
        %v1142 = vsub.s32 0, %v1141
        %v1143 = vrot.slane %v1138, %v1142
        %v1149 = vunpack.c.l.b16 %v1134
        %v1150 = vunpack.c.l.b16 %v1135
        %v1151 = vunpack.c.l.b16 %v1136
        %v1152 = vunpack.c.l.b16 %v1137
        %v1153 = vpack.c.b16 %v1150, %v1149
        %v1154 = vpack.c.b16 %v1152, %v1151
        %v1158 = vsel %vm467, %v1133, 0
        %1160 = vmatprep.subr.bf16.mxu0 0
        %1161 = vmatpush1.bf16.msra.mxu0 0
        %1162 = vmatprep.subr.bf16.mxu0 0
        %1163 = vmatpush1.bf16.msra.mxu0 0
        %1164 = vmatprep.subr.bf16.mxu0 0
        %1165 = vmatpush1.bf16.msra.mxu0 0
        %1166 = vmatprep.subr.bf16.mxu0 0
        %1167 = vmatpush1.bf16.msra.mxu0 0
        %1168 = vmatprep.subr.bf16.mxu0 0
        %1169 = vmatpush1.bf16.msra.mxu0 0
        %1170 = vmatprep.subr.bf16.mxu0 0
        %1171 = vmatpush1.bf16.msra.mxu0 0
        %1172 = vmatprep.subr.bf16.mxu0 0
        %1173 = vmatpush1.bf16.msra.mxu0 %v1154
        %1174 = vmatprep.subr.bf16.mxu0 0
        %1175 = vmatpush1.bf16.msra.mxu0 %v1153
        %1176 = vmatprep.subr.bf16.mxu0 0
        %1177 = vmatpush2.bf16.msra.mxu0 0
        %1178 = vmatprep.subr.bf16.mxu0 0
        %1179 = vmatpush2.bf16.msra.mxu0 0
        %1180 = vmatprep.subr.bf16.mxu0 0
        %1181 = vmatpush2.bf16.msra.mxu0 0
        %1182 = vmatprep.subr.bf16.mxu0 0
        %1183 = vmatpush2.bf16.msra.mxu0 0
        %1184 = vmatprep.subr.bf16.mxu0 0
        %1185 = vmatpush2.bf16.msra.mxu0 0
        %1186 = vmatprep.subr.bf16.mxu0 0
        %1187 = vmatpush2.bf16.msra.mxu0 0
        %1188 = vmatprep.subr.bf16.mxu0 0
        %1189 = vmatpush2.bf16.msra.mxu0 0
        %1190 = vmatprep.subr.bf16.mxu0 0
        %1191 = vmatpush2.bf16.msra.mxu0 0
        %1192 = vmatprep.mubr.bf16.mxu0 0
        %1193 = vmatmul.mubr.bf16.gmra.mxu0 %v1158
        %v1194 = vpop.f32.mrf.mxu0
        %v1195 = vadd.f32 %v1143, %v1194
        %v1196 = vpop.f32.mrf.mxu0
        %v1197 = vpop.f32.mrf.mxu0
        %v1198 = vpop.f32.mrf.mxu0
        %1199 = vdwg.mxu0
        %v1200 = vmul.f32 %v1195, 1.702
        %v1201 = vxor.u32 %v1200, 2147483648
        %v1202 = vmul.f32 %v1201, 1.442695
        %v1203 = vpow.pop %v1202
        %v1204 = vadd.f32 %v1203, 1.0
        %v1205 = vrcp.pop %v1204
        %v1206 = vmul.f32 1.0, %v1205
        %v1207 = vmul.f32 %v1195, %v1206
        %v1208 = vpack.c.bf16 %v1207, %v1207
        %v1209 = vld [vmem:[%s12] sm:$0xf]
        %v1210 = vld [vmem:[%s12 + $0x4] sm:$0xf]
        %v1211 = vld [vmem:[%s12 + $0x8] sm:$0xf]
        %v1212 = vld [vmem:[%s12 + $0xc] sm:$0xf]
        %v1213 = vld [vmem:[%s12 + $0x10] sm:$0xf]
        %v1214 = vld [vmem:[%s12 + $0x14] sm:$0xf]
        %v1215 = vld [vmem:[%s12 + $0x18] sm:$0xf]
        %v1216 = vld [vmem:[%s12 + $0x1c] sm:$0xf]
        %v1217 = vld [vmem:[%s12 + $0x20] sm:$0xf]
        %v1218 = vld [vmem:[%s12 + $0x24] sm:$0xf]
        %v1219 = vld [vmem:[%s12 + $0x28] sm:$0xf]
        %v1220 = vld [vmem:[%s12 + $0x2c] sm:$0xf]
        %v1221 = vld [vmem:[%s12 + $0x30] sm:$0xf]
        %v1222 = vld [vmem:[%s12 + $0x34] sm:$0xf]
        %v1223 = vld [vmem:[%s12 + $0x38] sm:$0xf]
        %v1224 = vld [vmem:[%s12 + $0x3c] sm:$0xf]
        %v1225 = vld [vmem:[%s13] sm:$0x1]
        %v1227 = vlaneseq
        %v1228 = vshrl.u32 %v1227, 7
        %v1229 = vsub.s32 0, %v1228
        %v1230 = vrot.slane %v1225, %v1229
        %v1248 = vunpack.c.l.b16 %v1209
        %v1249 = vunpack.c.l.b16 %v1210
        %v1250 = vunpack.c.l.b16 %v1211
        %v1251 = vunpack.c.l.b16 %v1212
        %v1252 = vunpack.c.l.b16 %v1213
        %v1253 = vunpack.c.l.b16 %v1214
        %v1254 = vunpack.c.l.b16 %v1215
        %v1255 = vunpack.c.l.b16 %v1216
        %v1256 = vunpack.c.l.b16 %v1217
        %v1257 = vunpack.c.l.b16 %v1218
        %v1258 = vunpack.c.l.b16 %v1219
        %v1259 = vunpack.c.l.b16 %v1220
        %v1260 = vunpack.c.l.b16 %v1221
        %v1261 = vunpack.c.l.b16 %v1222
        %v1262 = vunpack.c.l.b16 %v1223
        %v1263 = vunpack.c.l.b16 %v1224
        %v1264 = vpack.c.b16 %v1249, %v1248
        %v1265 = vpack.c.b16 %v1251, %v1250
        %v1266 = vpack.c.b16 %v1253, %v1252
        %v1267 = vpack.c.b16 %v1255, %v1254
        %v1268 = vpack.c.b16 %v1257, %v1256
        %v1269 = vpack.c.b16 %v1259, %v1258
        %v1270 = vpack.c.b16 %v1261, %v1260
        %v1271 = vpack.c.b16 %v1263, %v1262
        %1280 = vmatprep.subr.bf16.mxu0 0
        %1281 = vmatpush1.bf16.msra.mxu0 %v1271
        %1282 = vmatprep.subr.bf16.mxu0 0
        %1283 = vmatpush1.bf16.msra.mxu0 %v1270
        %1284 = vmatprep.subr.bf16.mxu0 0
        %1285 = vmatpush1.bf16.msra.mxu0 %v1269
        %1286 = vmatprep.subr.bf16.mxu0 0
        %1287 = vmatpush1.bf16.msra.mxu0 %v1268
        %1288 = vmatprep.subr.bf16.mxu0 0
        %1289 = vmatpush1.bf16.msra.mxu0 %v1267
        %1290 = vmatprep.subr.bf16.mxu0 0
        %1291 = vmatpush1.bf16.msra.mxu0 %v1266
        %1292 = vmatprep.subr.bf16.mxu0 0
        %1293 = vmatpush1.bf16.msra.mxu0 %v1265
        %1294 = vmatprep.subr.bf16.mxu0 0
        %1295 = vmatpush1.bf16.msra.mxu0 %v1264
        %1296 = vmatprep.subr.bf16.mxu0 0
        %1297 = vmatpush2.bf16.msra.mxu0 0
        %1298 = vmatprep.subr.bf16.mxu0 0
        %1299 = vmatpush2.bf16.msra.mxu0 0
        %1300 = vmatprep.subr.bf16.mxu0 0
        %1301 = vmatpush2.bf16.msra.mxu0 0
        %1302 = vmatprep.subr.bf16.mxu0 0
        %1303 = vmatpush2.bf16.msra.mxu0 0
        %1304 = vmatprep.subr.bf16.mxu0 0
        %1305 = vmatpush2.bf16.msra.mxu0 0
        %1306 = vmatprep.subr.bf16.mxu0 0
        %1307 = vmatpush2.bf16.msra.mxu0 0
        %1308 = vmatprep.subr.bf16.mxu0 0
        %1309 = vmatpush2.bf16.msra.mxu0 0
        %1310 = vmatprep.subr.bf16.mxu0 0
        %1311 = vmatpush2.bf16.msra.mxu0 0
        %1312 = vmatprep.mubr.bf16.mxu0 0
        %1313 = vmatmul.mubr.bf16.gmra.mxu0 %v1208
        %v1314 = vpop.f32.mrf.mxu0
        %v1315 = vadd.f32 %v1230, %v1314
        %v1316 = vpop.f32.mrf.mxu0
        %v1317 = vpop.f32.mrf.mxu0
        %v1318 = vpop.f32.mrf.mxu0
        %1319 = vdwg.mxu0
        %v1320 = vadd.f32 %v1103, %v1315
        %1321 = vst.msk [vmem:[%s458] sm:$0xff] %vm467, %v1320
        %s1322 = sand.u32 %s335, 1
        %s1323 = scalar_lea.sflag [#allocation4], %s1322
        %s1324 = sand.u32 %s335, 1
        %s1325 = smul.addr %s1324, 8
        %s1326 = scalar_lea.vmem [#allocation3], %s1325
        // Predicated region
        $region77: #{tpu_custom_call.1} parent=75 // pred_check
          %p1327 = pneg %p345
        $region78: #{tpu_custom_call.1} parent=75 // pred_check_branch
          %1329 = sbr.rel (%p1327) target = $region80
        $region79: #{tpu_custom_call.1} parent=75 // pred_region
          %s1331 = ssub.s32 128, 128
          %1332 = vsyncadd %s1323, %s1331
          %s1333 = smul.addr %s28, 128
          %s1334 = scalar_lea.hbm %s14, %s1333
          %s1336 = sshll.u32 %s1326, 4
          %s1337 = int_to_ptr.vmem [resolvable:$true] %s1336
          %1339 = dma.vmem_to_hbm [thread:$0]  %s1337, 128, %s1334, %s1323
        $region80: #{tpu_custom_call.1} parent=75 // pred_fallthru
          _
      $region76: #{tpu_custom_call.1} parent=5 // pred_fallthru
        _
      %p1340 = scmp.le.s32.totalorder 2, %s23
      // Predicated region
      $region81: #{tpu_custom_call.1} parent=5 // pred_check
        %p1341 = pneg %p1340
      $region82: #{tpu_custom_call.1} parent=5 // pred_check_branch
        %1343 = sbr.rel (%p1341) target = $region84
      $region83: #{tpu_custom_call.1} parent=5 // pred_region
        %s1344 = ssub.s32 %s23, 2
        // Predicated region
        $region85: #{tpu_custom_call.1} parent=83 // pred_check
          %p1345 = pneg %p351
        $region86: #{tpu_custom_call.1} parent=83 // pred_check_branch
          %1347 = sbr.rel (%p1345) target = $region88
        $region87: #{tpu_custom_call.1} parent=83 // pred_region
          %s1348 = sand.u32 %s336, 1
          %s1349 = scalar_lea.sflag [#allocation4], %s1348
          %s1350 = sand.u32 %s336, 1
          %s1351 = smul.addr %s1350, 8
          %s1352 = scalar_lea.vmem [#allocation3], %s1351
          %1353 = dma.done %s1349, 128
        $region88: #{tpu_custom_call.1} parent=83 // pred_fallthru
          _
      $region84: #{tpu_custom_call.1} parent=5 // pred_fallthru
        _
    $region6: #{tpu_custom_call.1} parent=1 // loop_footer
      %s27 = sadd.s32 1, %s23
    $region7: #{tpu_custom_call.1} parent=1 // loop_footer_branch
      %22 = sbr.rel target = $region3
    $region8: #{tpu_custom_call.1} parent=1 // loop_exit
      _
    %1354 = vsyncpa [#allocation4], 1
    %s1355 = scalar_lea.sflag [#allocation4], 1
    %1356 = vsyncpa %s1355, 1

// kernel: tpu_custom_call.1
$region0: #{tpu_custom_call.1}
  #allocation0 [shape = 'u32[]', space=smem, size = 0x4, offset = 0x4, fixed_abs, tag = 'smem constant byte address 0x4 - core index']
  #allocation1 [shape = 'u32[144,128]{1,0:T(1,128)}', space=vmem, size = 0x12000, scoped, tag = 'internal scratch']
  #allocation2 [shape = 'bf16[8,32]{1,0:T(8,128)(2,1)}', space=vmem, size = 0x800, scoped, tag = 'scratch operand']
  %s0 = inlined_call_operand.vmem [shape: f32[2,8,32], index: 0, kind: input, shape index: {}]
  %s1 = inlined_call_operand.vmem [shape: f32[8,8], index: 1, kind: input, shape index: {}]
  %s2 = inlined_call_operand.vmem [shape: f32[1,32], index: 2, kind: input, shape index: {}]
  %s3 = inlined_call_operand.vmem [shape: f32[1,32], index: 3, kind: input, shape index: {}]
  %s4 = inlined_call_operand.vmem [shape: bf16[32,96], index: 4, kind: input, shape index: {}]
  %s5 = inlined_call_operand.vmem [shape: f32[1,96], index: 5, kind: input, shape index: {}]
  %s6 = inlined_call_operand.vmem [shape: bf16[32,32], index: 6, kind: input, shape index: {}]
  %s7 = inlined_call_operand.vmem [shape: f32[1,32], index: 7, kind: input, shape index: {}]
  %s8 = inlined_call_operand.vmem [shape: f32[1,32], index: 8, kind: input, shape index: {}]
  %s9 = inlined_call_operand.vmem [shape: f32[1,32], index: 9, kind: input, shape index: {}]
  %s10 = inlined_call_operand.vmem [shape: bf16[32,128], index: 10, kind: input, shape index: {}]
  %s11 = inlined_call_operand.vmem [shape: f32[1,128], index: 11, kind: input, shape index: {}]
  %s12 = inlined_call_operand.vmem [shape: bf16[128,32], index: 12, kind: input, shape index: {}]
  %s13 = inlined_call_operand.vmem [shape: f32[1,32], index: 13, kind: input, shape index: {}]
  %s14 = inlined_call_operand.hbm [shape: f32[2,8,32], index: 14, kind: output, shape index: {}]
  %s15 = sld [smem:[#allocation0]]
  $region89: #{tpu_custom_call.1} parent=0
    _
  %s17 = ssub.s32 1, %s15
  %s18 = scalar_select 0, %s17, %s15
  $region1: #{tpu_custom_call.1} parent=0
    #allocation3 [shape = 'u8[8192]{0}', space=vmem, size = 0x2000, scoped, tag = 'output window, operand 0']
    #allocation4 [shape = 's32[2]{0}', space=sflag, size = 0x8, scoped, tag = 'scoped memory for tpu_custom_call.1']
    %19 = vsyncpa [#allocation4], 0
    %s20 = scalar_lea.sflag [#allocation4], 1
    %21 = vsyncpa %s20, 0
    loop: start=0, step=1, limit=4
    $region2: #{tpu_custom_call.1} parent=1 // loop_pre_header
      _
    $region3: #{tpu_custom_call.1} parent=1 // loop_header
      %s23 = sphi 0, %s27
      %p24 = scmp.ge.s32.totalorder %s23, 4
      %s33 = sphi 0, %s35
      %s36 = sphi 0, %s33
      %s37 = sphi 0, %s36
      %s53 = sphi 0, %s37
      %s57 = sphi 0, %s57
      %s59 = sphi 0, %s57
      %s60 = sphi 0, %s59
      %s74 = sphi 0, %s60
      %s78 = sphi 0, %s78
      %s80 = sphi 0, %s78
      %s81 = sphi 0, %s80
      %s95 = sphi 0, %s81
      %s99 = sphi 0, %s99
      %s101 = sphi 0, %s99
      %s102 = sphi 0, %s101
      %s116 = sphi 0, %s102
      %s120 = sphi 0, %s120
      %s122 = sphi 0, %s120
      %s123 = sphi 0, %s122
      %s137 = sphi 0, %s123
      %s141 = sphi 0, %s141
      %s143 = sphi 0, %s141
      %s144 = sphi 0, %s143
      %s158 = sphi 0, %s144
      %s162 = sphi 0, %s162
      %s164 = sphi 0, %s162
      %s165 = sphi 0, %s164
      %s179 = sphi 0, %s165
      %s183 = sphi 0, %s183
      %s185 = sphi 0, %s183
      %s186 = sphi 0, %s185
      %s200 = sphi 0, %s186
      %s204 = sphi 0, %s204
      %s206 = sphi 0, %s204
      %s207 = sphi 0, %s206
      %s221 = sphi 0, %s207
      %s225 = sphi 0, %s225
      %s227 = sphi 0, %s225
      %s228 = sphi 0, %s227
      %s242 = sphi 0, %s228
      %s246 = sphi 0, %s246
      %s248 = sphi 0, %s246
      %s249 = sphi 0, %s248
      %s263 = sphi 0, %s249
      %s267 = sphi 0, %s267
      %s269 = sphi 0, %s267
      %s270 = sphi 0, %s269
      %s284 = sphi 0, %s270
      %s288 = sphi 0, %s288
      %s290 = sphi 0, %s288
      %s291 = sphi 0, %s290
      %s305 = sphi 0, %s291
      %s309 = sphi 0, %s309
      %s311 = sphi 0, %s309
      %s312 = sphi 0, %s311
      %s326 = sphi 0, %s312
      %s332 = sphi 0, %s334
      %s335 = sphi 0, %s332
      %s336 = sphi 0, %s335
      %s352 = sphi 0, %s336
    $region4: #{tpu_custom_call.1} parent=1 // loop_header_branch
      %26 = sbr.rel (%p24) target = $region8
    $region5: #{tpu_custom_call.1} parent=1 // loop_body
      %s28 = ssub.s32 %s23, 1
      %s29 = ssub.s32 %s23, 2
      %s30 = sadd.s32 %s23, 1
      %s31 = ssub.s32 %s23, %s30
      %p32 = scmp.eq.s32.totalorder %s31, 0
      %s34 = sadd.s32 %s33, 1
      %s35 = scalar_select %p32, %s33, %s34
      %p38 = pneg %p32
      %p39 = scmp.eq.s32.totalorder %s23, 1
      %p40 = por %p38, %p39
      %p41 = scmp.ne.s32.totalorder %s33, %s36
      %p42 = scmp.eq.s32.totalorder %s23, 0
      %p43 = por %p41, %p42
      %p44 = scmp.ne.s32.totalorder %s33, %s36
      %p45 = scmp.eq.s32.totalorder %s28, 1
      %p46 = por %p44, %p45
      %p47 = scmp.ne.s32.totalorder %s36, %s37
      %p48 = scmp.eq.s32.totalorder %s28, 0
      %p49 = por %p47, %p48
      %p50 = scmp.ne.s32.totalorder %s36, %s37
      %p51 = scmp.eq.s32.totalorder %s29, 1
      %p52 = por %p50, %p51
      %p54 = scmp.ne.s32.totalorder %s37, %s53
      %p55 = scmp.eq.s32.totalorder %s29, 0
      %p56 = por %p54, %p55
      %s58 = sadd.s32 %s57, 1
      %p61 = scmp.eq.s32.totalorder %s23, 1
      %p62 = scmp.ne.s32.totalorder %s57, %s59
      %p63 = scmp.eq.s32.totalorder %s23, 0
      %p64 = por %p62, %p63
      %p65 = scmp.ne.s32.totalorder %s57, %s59
      %p66 = scmp.eq.s32.totalorder %s28, 1
      %p67 = por %p65, %p66
      %p68 = scmp.ne.s32.totalorder %s59, %s60
      %p69 = scmp.eq.s32.totalorder %s28, 0
      %p70 = por %p68, %p69
      %p71 = scmp.ne.s32.totalorder %s59, %s60
      %p72 = scmp.eq.s32.totalorder %s29, 1
      %p73 = por %p71, %p72
      %p75 = scmp.ne.s32.totalorder %s60, %s74
      %p76 = scmp.eq.s32.totalorder %s29, 0
      %p77 = por %p75, %p76
      %s79 = sadd.s32 %s78, 1
      %p82 = scmp.eq.s32.totalorder %s23, 1
      %p83 = scmp.ne.s32.totalorder %s78, %s80
      %p84 = scmp.eq.s32.totalorder %s23, 0
      %p85 = por %p83, %p84
      %p86 = scmp.ne.s32.totalorder %s78, %s80
      %p87 = scmp.eq.s32.totalorder %s28, 1
      %p88 = por %p86, %p87
      %p89 = scmp.ne.s32.totalorder %s80, %s81
      %p90 = scmp.eq.s32.totalorder %s28, 0
      %p91 = por %p89, %p90
      %p92 = scmp.ne.s32.totalorder %s80, %s81
      %p93 = scmp.eq.s32.totalorder %s29, 1
      %p94 = por %p92, %p93
      %p96 = scmp.ne.s32.totalorder %s81, %s95
      %p97 = scmp.eq.s32.totalorder %s29, 0
      %p98 = por %p96, %p97
      %s100 = sadd.s32 %s99, 1
      %p103 = scmp.eq.s32.totalorder %s23, 1
      %p104 = scmp.ne.s32.totalorder %s99, %s101
      %p105 = scmp.eq.s32.totalorder %s23, 0
      %p106 = por %p104, %p105
      %p107 = scmp.ne.s32.totalorder %s99, %s101
      %p108 = scmp.eq.s32.totalorder %s28, 1
      %p109 = por %p107, %p108
      %p110 = scmp.ne.s32.totalorder %s101, %s102
      %p111 = scmp.eq.s32.totalorder %s28, 0
      %p112 = por %p110, %p111
      %p113 = scmp.ne.s32.totalorder %s101, %s102
      %p114 = scmp.eq.s32.totalorder %s29, 1
      %p115 = por %p113, %p114
      %p117 = scmp.ne.s32.totalorder %s102, %s116
      %p118 = scmp.eq.s32.totalorder %s29, 0
      %p119 = por %p117, %p118
      %s121 = sadd.s32 %s120, 1
      %p124 = scmp.eq.s32.totalorder %s23, 1
      %p125 = scmp.ne.s32.totalorder %s120, %s122
      %p126 = scmp.eq.s32.totalorder %s23, 0
      %p127 = por %p125, %p126
      %p128 = scmp.ne.s32.totalorder %s120, %s122
      %p129 = scmp.eq.s32.totalorder %s28, 1
      %p130 = por %p128, %p129
      %p131 = scmp.ne.s32.totalorder %s122, %s123
      %p132 = scmp.eq.s32.totalorder %s28, 0
      %p133 = por %p131, %p132
      %p134 = scmp.ne.s32.totalorder %s122, %s123
      %p135 = scmp.eq.s32.totalorder %s29, 1
      %p136 = por %p134, %p135
      %p138 = scmp.ne.s32.totalorder %s123, %s137
      %p139 = scmp.eq.s32.totalorder %s29, 0
      %p140 = por %p138, %p139
      %s142 = sadd.s32 %s141, 1
      %p145 = scmp.eq.s32.totalorder %s23, 1
      %p146 = scmp.ne.s32.totalorder %s141, %s143
      %p147 = scmp.eq.s32.totalorder %s23, 0
      %p148 = por %p146, %p147
      %p149 = scmp.ne.s32.totalorder %s141, %s143
      %p150 = scmp.eq.s32.totalorder %s28, 1
      %p151 = por %p149, %p150
      %p152 = scmp.ne.s32.totalorder %s143, %s144
      %p153 = scmp.eq.s32.totalorder %s28, 0
      %p154 = por %p152, %p153
      %p155 = scmp.ne.s32.totalorder %s143, %s144
      %p156 = scmp.eq.s32.totalorder %s29, 1
      %p157 = por %p155, %p156
      %p159 = scmp.ne.s32.totalorder %s144, %s158
      %p160 = scmp.eq.s32.totalorder %s29, 0
      %p161 = por %p159, %p160
      %s163 = sadd.s32 %s162, 1
      %p166 = scmp.eq.s32.totalorder %s23, 1
      %p167 = scmp.ne.s32.totalorder %s162, %s164
      %p168 = scmp.eq.s32.totalorder %s23, 0
      %p169 = por %p167, %p168
      %p170 = scmp.ne.s32.totalorder %s162, %s164
      %p171 = scmp.eq.s32.totalorder %s28, 1
      %p172 = por %p170, %p171
      %p173 = scmp.ne.s32.totalorder %s164, %s165
      %p174 = scmp.eq.s32.totalorder %s28, 0
      %p175 = por %p173, %p174
      %p176 = scmp.ne.s32.totalorder %s164, %s165
      %p177 = scmp.eq.s32.totalorder %s29, 1
      %p178 = por %p176, %p177
      %p180 = scmp.ne.s32.totalorder %s165, %s179
      %p181 = scmp.eq.s32.totalorder %s29, 0
      %p182 = por %p180, %p181
      %s184 = sadd.s32 %s183, 1
      %p187 = scmp.eq.s32.totalorder %s23, 1
      %p188 = scmp.ne.s32.totalorder %s183, %s185
      %p189 = scmp.eq.s32.totalorder %s23, 0
      %p190 = por %p188, %p189
      %p191 = scmp.ne.s32.totalorder %s183, %s185
      %p192 = scmp.eq.s32.totalorder %s28, 1
      %p193 = por %p191, %p192
      %p194 = scmp.ne.s32.totalorder %s185, %s186
      %p195 = scmp.eq.s32.totalorder %s28, 0
      %p196 = por %p194, %p195
      %p197 = scmp.ne.s32.totalorder %s185, %s186
      %p198 = scmp.eq.s32.totalorder %s29, 1
      %p199 = por %p197, %p198
      %p201 = scmp.ne.s32.totalorder %s186, %s200
      %p202 = scmp.eq.s32.totalorder %s29, 0
      %p203 = por %p201, %p202
      %s205 = sadd.s32 %s204, 1
      %p208 = scmp.eq.s32.totalorder %s23, 1
      %p209 = scmp.ne.s32.totalorder %s204, %s206
      %p210 = scmp.eq.s32.totalorder %s23, 0
      %p211 = por %p209, %p210
      %p212 = scmp.ne.s32.totalorder %s204, %s206
      %p213 = scmp.eq.s32.totalorder %s28, 1
      %p214 = por %p212, %p213
      %p215 = scmp.ne.s32.totalorder %s206, %s207
      %p216 = scmp.eq.s32.totalorder %s28, 0
      %p217 = por %p215, %p216
      %p218 = scmp.ne.s32.totalorder %s206, %s207
      %p219 = scmp.eq.s32.totalorder %s29, 1
      %p220 = por %p218, %p219
      %p222 = scmp.ne.s32.totalorder %s207, %s221
      %p223 = scmp.eq.s32.totalorder %s29, 0
      %p224 = por %p222, %p223
      %s226 = sadd.s32 %s225, 1
      %p229 = scmp.eq.s32.totalorder %s23, 1
      %p230 = scmp.ne.s32.totalorder %s225, %s227
      %p231 = scmp.eq.s32.totalorder %s23, 0
      %p232 = por %p230, %p231
      %p233 = scmp.ne.s32.totalorder %s225, %s227
      %p234 = scmp.eq.s32.totalorder %s28, 1
      %p235 = por %p233, %p234
      %p236 = scmp.ne.s32.totalorder %s227, %s228
      %p237 = scmp.eq.s32.totalorder %s28, 0
      %p238 = por %p236, %p237
      %p239 = scmp.ne.s32.totalorder %s227, %s228
      %p240 = scmp.eq.s32.totalorder %s29, 1
      %p241 = por %p239, %p240
      %p243 = scmp.ne.s32.totalorder %s228, %s242
      %p244 = scmp.eq.s32.totalorder %s29, 0
      %p245 = por %p243, %p244
      %s247 = sadd.s32 %s246, 1
      %p250 = scmp.eq.s32.totalorder %s23, 1
      %p251 = scmp.ne.s32.totalorder %s246, %s248
      %p252 = scmp.eq.s32.totalorder %s23, 0
      %p253 = por %p251, %p252
      %p254 = scmp.ne.s32.totalorder %s246, %s248
      %p255 = scmp.eq.s32.totalorder %s28, 1
      %p256 = por %p254, %p255
      %p257 = scmp.ne.s32.totalorder %s248, %s249
      %p258 = scmp.eq.s32.totalorder %s28, 0
      %p259 = por %p257, %p258
      %p260 = scmp.ne.s32.totalorder %s248, %s249
      %p261 = scmp.eq.s32.totalorder %s29, 1
      %p262 = por %p260, %p261
      %p264 = scmp.ne.s32.totalorder %s249, %s263
      %p265 = scmp.eq.s32.totalorder %s29, 0
      %p266 = por %p264, %p265
      %s268 = sadd.s32 %s267, 1
      %p271 = scmp.eq.s32.totalorder %s23, 1
      %p272 = scmp.ne.s32.totalorder %s267, %s269
      %p273 = scmp.eq.s32.totalorder %s23, 0
      %p274 = por %p272, %p273
      %p275 = scmp.ne.s32.totalorder %s267, %s269
      %p276 = scmp.eq.s32.totalorder %s28, 1
      %p277 = por %p275, %p276
      %p278 = scmp.ne.s32.totalorder %s269, %s270
      %p279 = scmp.eq.s32.totalorder %s28, 0
      %p280 = por %p278, %p279
      %p281 = scmp.ne.s32.totalorder %s269, %s270
      %p282 = scmp.eq.s32.totalorder %s29, 1
      %p283 = por %p281, %p282
      %p285 = scmp.ne.s32.totalorder %s270, %s284
      %p286 = scmp.eq.s32.totalorder %s29, 0
      %p287 = por %p285, %p286
      %s289 = sadd.s32 %s288, 1
      %p292 = scmp.eq.s32.totalorder %s23, 1
      %p293 = scmp.ne.s32.totalorder %s288, %s290
      %p294 = scmp.eq.s32.totalorder %s23, 0
      %p295 = por %p293, %p294
      %p296 = scmp.ne.s32.totalorder %s288, %s290
      %p297 = scmp.eq.s32.totalorder %s28, 1
      %p298 = por %p296, %p297
      %p299 = scmp.ne.s32.totalorder %s290, %s291
      %p300 = scmp.eq.s32.totalorder %s28, 0
      %p301 = por %p299, %p300
      %p302 = scmp.ne.s32.totalorder %s290, %s291
      %p303 = scmp.eq.s32.totalorder %s29, 1
      %p304 = por %p302, %p303
      %p306 = scmp.ne.s32.totalorder %s291, %s305
      %p307 = scmp.eq.s32.totalorder %s29, 0
      %p308 = por %p306, %p307
      %s310 = sadd.s32 %s309, 1
      %p313 = scmp.eq.s32.totalorder %s23, 1
      %p314 = scmp.ne.s32.totalorder %s309, %s311
      %p315 = scmp.eq.s32.totalorder %s23, 0
      %p316 = por %p314, %p315
      %p317 = scmp.ne.s32.totalorder %s309, %s311
      %p318 = scmp.eq.s32.totalorder %s28, 1
      %p319 = por %p317, %p318
      %p320 = scmp.ne.s32.totalorder %s311, %s312
      %p321 = scmp.eq.s32.totalorder %s28, 0
      %p322 = por %p320, %p321
      %p323 = scmp.ne.s32.totalorder %s311, %s312
      %p324 = scmp.eq.s32.totalorder %s29, 1
      %p325 = por %p323, %p324
      %p327 = scmp.ne.s32.totalorder %s312, %s326
      %p328 = scmp.eq.s32.totalorder %s29, 0
      %p329 = por %p327, %p328
      %s330 = ssub.s32 %s23, %s30
      %p331 = scmp.eq.s32.totalorder %s330, 0
      %s333 = sadd.s32 %s332, 1
      %s334 = scalar_select %p331, %s332, %s333
      %p337 = pneg %p331
      %p338 = scmp.eq.s32.totalorder %s23, 1
      %p339 = por %p337, %p338
      %p340 = scmp.ne.s32.totalorder %s332, %s335
      %p341 = scmp.eq.s32.totalorder %s23, 0
      %p342 = por %p340, %p341
      %p343 = scmp.ne.s32.totalorder %s332, %s335
      %p344 = scmp.eq.s32.totalorder %s28, 1
      %p345 = por %p343, %p344
      %p346 = scmp.ne.s32.totalorder %s335, %s336
      %p347 = scmp.eq.s32.totalorder %s28, 0
      %p348 = por %p346, %p347
      %p349 = scmp.ne.s32.totalorder %s335, %s336
      %p350 = scmp.eq.s32.totalorder %s29, 1
      %p351 = por %p349, %p350
      %p353 = scmp.ne.s32.totalorder %s336, %s352
      %p354 = scmp.eq.s32.totalorder %s29, 0
      %p355 = por %p353, %p354
      %p356 = scmp.le.s32.totalorder 1, %s23
      %p357 = scmp.lt.s32.totalorder %s23, 3
      %p358 = pnand %p356, %p357
      %p359 = pneg %p358
      // Predicated region
      $region9: #{tpu_custom_call.1} parent=5 // pred_check
        _
      $region10: #{tpu_custom_call.1} parent=5 // pred_check_branch
        %361 = sbr.rel (%p358) target = $region12
      $region11: #{tpu_custom_call.1} parent=5 // pred_region
        %s362 = ssub.s32 %s23, 1
        // Predicated region
        $region13: #{tpu_custom_call.1} parent=11 // pred_check
          %p363 = pneg %p70
        $region14: #{tpu_custom_call.1} parent=11 // pred_check_branch
          %365 = sbr.rel (%p363) target = $region16
        $region15: #{tpu_custom_call.1} parent=11 // pred_region
          _
        $region16: #{tpu_custom_call.1} parent=11 // pred_fallthru
          _
        // Predicated region
        $region17: #{tpu_custom_call.1} parent=11 // pred_check
          %p366 = pneg %p91
        $region18: #{tpu_custom_call.1} parent=11 // pred_check_branch
          %368 = sbr.rel (%p366) target = $region20
        $region19: #{tpu_custom_call.1} parent=11 // pred_region
          _
        $region20: #{tpu_custom_call.1} parent=11 // pred_fallthru
          _
        // Predicated region
        $region21: #{tpu_custom_call.1} parent=11 // pred_check
          %p369 = pneg %p112
        $region22: #{tpu_custom_call.1} parent=11 // pred_check_branch
          %371 = sbr.rel (%p369) target = $region24
        $region23: #{tpu_custom_call.1} parent=11 // pred_region
          _
        $region24: #{tpu_custom_call.1} parent=11 // pred_fallthru
          _
        // Predicated region
        $region25: #{tpu_custom_call.1} parent=11 // pred_check
          %p372 = pneg %p133
        $region26: #{tpu_custom_call.1} parent=11 // pred_check_branch
          %374 = sbr.rel (%p372) target = $region28
        $region27: #{tpu_custom_call.1} parent=11 // pred_region
          _
        $region28: #{tpu_custom_call.1} parent=11 // pred_fallthru
          _
        // Predicated region
        $region29: #{tpu_custom_call.1} parent=11 // pred_check
          %p375 = pneg %p154
        $region30: #{tpu_custom_call.1} parent=11 // pred_check_branch
          %377 = sbr.rel (%p375) target = $region32
        $region31: #{tpu_custom_call.1} parent=11 // pred_region
          _
        $region32: #{tpu_custom_call.1} parent=11 // pred_fallthru
          _
        // Predicated region
        $region33: #{tpu_custom_call.1} parent=11 // pred_check
          %p378 = pneg %p175
        $region34: #{tpu_custom_call.1} parent=11 // pred_check_branch
          %380 = sbr.rel (%p378) target = $region36
        $region35: #{tpu_custom_call.1} parent=11 // pred_region
          _
        $region36: #{tpu_custom_call.1} parent=11 // pred_fallthru
          _
        // Predicated region
        $region37: #{tpu_custom_call.1} parent=11 // pred_check
          %p381 = pneg %p196
        $region38: #{tpu_custom_call.1} parent=11 // pred_check_branch
          %383 = sbr.rel (%p381) target = $region40
        $region39: #{tpu_custom_call.1} parent=11 // pred_region
          _
        $region40: #{tpu_custom_call.1} parent=11 // pred_fallthru
          _
        // Predicated region
        $region41: #{tpu_custom_call.1} parent=11 // pred_check
          %p384 = pneg %p217
        $region42: #{tpu_custom_call.1} parent=11 // pred_check_branch
          %386 = sbr.rel (%p384) target = $region44
        $region43: #{tpu_custom_call.1} parent=11 // pred_region
          _
        $region44: #{tpu_custom_call.1} parent=11 // pred_fallthru
          _
        // Predicated region
        $region45: #{tpu_custom_call.1} parent=11 // pred_check
          %p387 = pneg %p238
        $region46: #{tpu_custom_call.1} parent=11 // pred_check_branch
          %389 = sbr.rel (%p387) target = $region48
        $region47: #{tpu_custom_call.1} parent=11 // pred_region
          _
        $region48: #{tpu_custom_call.1} parent=11 // pred_fallthru
          _
        // Predicated region
        $region49: #{tpu_custom_call.1} parent=11 // pred_check
          %p390 = pneg %p259
        $region50: #{tpu_custom_call.1} parent=11 // pred_check_branch
          %392 = sbr.rel (%p390) target = $region52
        $region51: #{tpu_custom_call.1} parent=11 // pred_region
          _
        $region52: #{tpu_custom_call.1} parent=11 // pred_fallthru
          _
        // Predicated region
        $region53: #{tpu_custom_call.1} parent=11 // pred_check
          %p393 = pneg %p280
        $region54: #{tpu_custom_call.1} parent=11 // pred_check_branch
          %395 = sbr.rel (%p393) target = $region56
        $region55: #{tpu_custom_call.1} parent=11 // pred_region
          _
        $region56: #{tpu_custom_call.1} parent=11 // pred_fallthru
          _
        // Predicated region
        $region57: #{tpu_custom_call.1} parent=11 // pred_check
          %p396 = pneg %p301
        $region58: #{tpu_custom_call.1} parent=11 // pred_check_branch
          %398 = sbr.rel (%p396) target = $region60
        $region59: #{tpu_custom_call.1} parent=11 // pred_region
          _
        $region60: #{tpu_custom_call.1} parent=11 // pred_fallthru
          _
        // Predicated region
        $region61: #{tpu_custom_call.1} parent=11 // pred_check
          %p399 = pneg %p322
        $region62: #{tpu_custom_call.1} parent=11 // pred_check_branch
          %401 = sbr.rel (%p399) target = $region64
        $region63: #{tpu_custom_call.1} parent=11 // pred_region
          _
        $region64: #{tpu_custom_call.1} parent=11 // pred_fallthru
          _
      $region12: #{tpu_custom_call.1} parent=5 // pred_fallthru
        _
      %p402 = scmp.lt.s32.totalorder %s23, 2
      // Predicated region
      $region65: #{tpu_custom_call.1} parent=5 // pred_check
        %p403 = pneg %p402
      $region66: #{tpu_custom_call.1} parent=5 // pred_check_branch
        %405 = sbr.rel (%p403) target = $region68
      $region67: #{tpu_custom_call.1} parent=5 // pred_region
        // Predicated region
        $region69: #{tpu_custom_call.1} parent=67 // pred_check
          %p406 = pneg %p43
        $region70: #{tpu_custom_call.1} parent=67 // pred_check_branch
          %408 = sbr.rel (%p406) target = $region72
        $region71: #{tpu_custom_call.1} parent=67 // pred_region
          %p409 = scmp.lt.s32.totalorder %s23, 1
          %s410 = scalar_select %p409, %s23, 1
          %s411 = smul.addr %s410, 8
          %s412 = scalar_lea.vmem %s0, %s411
        $region72: #{tpu_custom_call.1} parent=67 // pred_fallthru
          _
      $region68: #{tpu_custom_call.1} parent=5 // pred_fallthru
        _
      %p413 = scmp.le.s32.totalorder 1, %s23
      %p414 = scmp.lt.s32.totalorder %s23, 3
      %p415 = pnand %p413, %p414
      %p416 = pneg %p415
      // Predicated region
      $region73: #{tpu_custom_call.1} parent=5 // pred_check
        _
      $region74: #{tpu_custom_call.1} parent=5 // pred_check_branch
        %418 = sbr.rel (%p415) target = $region76
      $region75: #{tpu_custom_call.1} parent=5 // pred_region
        %s419 = ssub.s32 %s23, 1
        %p420 = scmp.lt.s32.totalorder %s28, 1
        %s421 = scalar_select %p420, %s28, 1
        %s422 = smul.addr %s421, 8
        %s423 = scalar_lea.vmem %s0, %s422
        %p424 = pneg %p49
        %p425 = pneg %p46
        %p426 = pneg %p70
        %p427 = pneg %p67
        %p428 = pneg %p91
        %p429 = pneg %p88
        %p430 = pneg %p112
        %p431 = pneg %p109
        %p432 = pneg %p133
        %p433 = pneg %p130
        %p434 = pneg %p154
        %p435 = pneg %p151
        %p436 = pneg %p175
        %p437 = pneg %p172
        %p438 = pneg %p196
        %p439 = pneg %p193
        %p440 = pneg %p217
        %p441 = pneg %p214
        %p442 = pneg %p238
        %p443 = pneg %p235
        %p444 = pneg %p259
        %p445 = pneg %p256
        %p446 = pneg %p280
        %p447 = pneg %p277
        %p448 = pneg %p301
        %p449 = pneg %p298
        %p450 = pneg %p322
        %p451 = pneg %p319
        %p452 = pneg %p348
        %p453 = pneg %p345
        %s454 = sand.u32 %s335, 1
        %s455 = scalar_lea.sflag [#allocation4], %s454
        %s456 = sand.u32 %s335, 1
        %s457 = smul.addr %s456, 8
        %s458 = scalar_lea.vmem [#allocation3], %s457
        %p459 = scmp.lt.s32.totalorder %s28, 1
        %s460 = scalar_select %p459, %s28, 1
        %s461 = smul.addr %s460, 8
        %s462 = scalar_lea.vmem %s0, %s461
        %v464 = vld [vmem:[%s462] sm:$0xff]
        %v465 = vld [vmem:[%s2] sm:$0x1]
        %v466 = vld [vmem:[%s3] sm:$0x1]
        %vm467 = vcmask 261120
        %v468 = vsel %vm467, %v464, 0.0
        %469 = vadd.xlane.f32.xlu0 %v468
        %v470 = vpop.xlane.xlu0 %469
        %v471 = vrcp.pop 32.0
        %v472 = vmul.f32 %v470, %v471
        %v473 = vsub.f32 %v464, %v472
        %v474 = vmul.f32 %v473, %v473
        %v475 = vsel %vm467, %v474, 0.0
        %476 = vadd.xlane.f32.xlu0 %v475
        %v477 = vpop.xlane.xlu0 %476
        %v478 = vmul.f32 %v477, %v471
        %v479 = vadd.f32 %v478, 1e-05
        %v480 = vrsqrt.pop %v479
        %v481 = vmul.f32 %v473, %v480
        %v483 = vlaneseq
        %v484 = vshrl.u32 %v483, 7
        %v485 = vsub.s32 0, %v484
        %v486 = vrot.slane %v465, %v485
        %v488 = vmul.f32 %v481, %v486
        %v490 = vlaneseq
        %v491 = vshrl.u32 %v490, 7
        %v492 = vsub.s32 0, %v491
        %v493 = vrot.slane %v466, %v492
        %v495 = vadd.f32 %v488, %v493
        %v496 = vpack.c.bf16 %v495, %v495
        %v497 = vld [vmem:[%s4] sm:$0xf]
        %v498 = vld [vmem:[%s4 + $0x4] sm:$0xf]
        %v499 = vld [vmem:[%s4 + $0x8] sm:$0xf]
        %v500 = vld [vmem:[%s4 + $0xc] sm:$0xf]
        %v501 = vld [vmem:[%s5] sm:$0x1]
        %v503 = vlaneseq
        %v504 = vshrl.u32 %v503, 7
        %v505 = vsub.s32 0, %v504
        %v506 = vrot.slane %v501, %v505
        %v512 = vunpack.c.l.b16 %v497
        %v513 = vunpack.c.l.b16 %v498
        %v514 = vunpack.c.l.b16 %v499
        %v515 = vunpack.c.l.b16 %v500
        %v516 = vpack.c.b16 %v513, %v512
        %v517 = vpack.c.b16 %v515, %v514
        %v521 = vsel %vm467, %v496, 0
        %523 = vmatprep.subr.bf16.mxu0 0
        %524 = vmatpush1.bf16.msra.mxu0 0
        %525 = vmatprep.subr.bf16.mxu0 0
        %526 = vmatpush1.bf16.msra.mxu0 0
        %527 = vmatprep.subr.bf16.mxu0 0
        %528 = vmatpush1.bf16.msra.mxu0 0
        %529 = vmatprep.subr.bf16.mxu0 0
        %530 = vmatpush1.bf16.msra.mxu0 0
        %531 = vmatprep.subr.bf16.mxu0 0
        %532 = vmatpush1.bf16.msra.mxu0 0
        %533 = vmatprep.subr.bf16.mxu0 0
        %534 = vmatpush1.bf16.msra.mxu0 0
        %535 = vmatprep.subr.bf16.mxu0 0
        %536 = vmatpush1.bf16.msra.mxu0 %v517
        %537 = vmatprep.subr.bf16.mxu0 0
        %538 = vmatpush1.bf16.msra.mxu0 %v516
        %539 = vmatprep.subr.bf16.mxu0 0
        %540 = vmatpush2.bf16.msra.mxu0 0
        %541 = vmatprep.subr.bf16.mxu0 0
        %542 = vmatpush2.bf16.msra.mxu0 0
        %543 = vmatprep.subr.bf16.mxu0 0
        %544 = vmatpush2.bf16.msra.mxu0 0
        %545 = vmatprep.subr.bf16.mxu0 0
        %546 = vmatpush2.bf16.msra.mxu0 0
        %547 = vmatprep.subr.bf16.mxu0 0
        %548 = vmatpush2.bf16.msra.mxu0 0
        %549 = vmatprep.subr.bf16.mxu0 0
        %550 = vmatpush2.bf16.msra.mxu0 0
        %551 = vmatprep.subr.bf16.mxu0 0
        %552 = vmatpush2.bf16.msra.mxu0 0
        %553 = vmatprep.subr.bf16.mxu0 0
        %554 = vmatpush2.bf16.msra.mxu0 0
        %555 = vmatprep.mubr.bf16.mxu0 0
        %556 = vmatmul.mubr.bf16.gmra.mxu0 %v521
        %v557 = vpop.f32.mrf.mxu0
        %v558 = vadd.f32 %v506, %v557
        %v559 = vpop.f32.mrf.mxu0
        %v560 = vpop.f32.mrf.mxu0
        %v561 = vpop.f32.mrf.mxu0
        %562 = vdwg.mxu0
        %v563 = vpack.c.bf16 %v558, %v558
        %v564 = vld [vmem:[%s1] sm:$0xff]
        %566 = vrot.lane.b32.xlu0 %v563, 96
        %v567 = vpop.permute.xlu0 %566
        %vm568 = vcmask 64512
        %v570 = vsel %vm568, %v563, 0
        %v573 = vsel %vm568, %v567, 0
        %575 = vmatprep.subr.bf16.mxu0 0
        %576 = vmatpush1.bf16.xpose.msra.mxu0 0
        %577 = vmatprep.subr.bf16.mxu0 0
        %578 = vmatpush1.bf16.xpose.msra.mxu0 0
        %579 = vmatprep.subr.bf16.mxu0 0
        %580 = vmatpush1.bf16.xpose.msra.mxu0 0
        %581 = vmatprep.subr.bf16.mxu0 0
        %582 = vmatpush1.bf16.xpose.msra.mxu0 0
        %583 = vmatprep.subr.bf16.mxu0 0
        %584 = vmatpush1.bf16.xpose.msra.mxu0 0
        %585 = vmatprep.subr.bf16.mxu0 0
        %586 = vmatpush1.bf16.xpose.msra.mxu0 0
        %587 = vmatprep.subr.bf16.mxu0 0
        %588 = vmatpush1.bf16.xpose.msra.mxu0 0
        %589 = vmatprep.subr.bf16.mxu0 0
        %590 = vmatpush1.bf16.xpose.msra.mxu0 %v573
        %591 = vmatprep.subr.bf16.mxu0 0
        %592 = vmatpush2.bf16.xpose.msra.mxu0 0
        %593 = vmatprep.subr.bf16.mxu0 0
        %594 = vmatpush2.bf16.xpose.msra.mxu0 0
        %595 = vmatprep.subr.bf16.mxu0 0
        %596 = vmatpush2.bf16.xpose.msra.mxu0 0
        %597 = vmatprep.subr.bf16.mxu0 0
        %598 = vmatpush2.bf16.xpose.msra.mxu0 0
        %599 = vmatprep.subr.bf16.mxu0 0
        %600 = vmatpush2.bf16.xpose.msra.mxu0 0
        %601 = vmatprep.subr.bf16.mxu0 0
        %602 = vmatpush2.bf16.xpose.msra.mxu0 0
        %603 = vmatprep.subr.bf16.mxu0 0
        %604 = vmatpush2.bf16.xpose.msra.mxu0 0
        %605 = vmatprep.subr.bf16.mxu0 0
        %606 = vmatpush2.bf16.xpose.msra.mxu0 0
        %607 = vmatprep.mubr.bf16.mxu0 0
        %608 = vmatmul.mubr.bf16.gmra.mxu0 %v570
        %v609 = vpop.f32.mrf.mxu0
        %v610 = vadd.f32 %v564, %v609
        %v611 = vpop.f32.mrf.mxu0
        %v612 = vpop.f32.mrf.mxu0
        %v613 = vpop.f32.mrf.mxu0
        %614 = vdwg.mxu0
        %v615 = vsel %vm568, %v610, -inf
        %616 = vmax.xlane.f32.xlu0 %v615
        %v617 = vpop.xlane.xlu0 %616
        %v618 = vsub.f32 %v610, %v617
        %v619 = vmul.f32 %v618, 1.442695
        %v620 = vpow.pop %v619
        %v621 = vsel %vm568, %v620, 0.0
        %622 = vadd.xlane.f32.xlu0 %v621
        %v623 = vpop.xlane.xlu0 %622
        %v624 = vrcp.pop %v623
        %v625 = vmul.f32 %v620, %v624
        %v626 = vpack.c.bf16 %v625, %v625
        %627 = vrot.lane.b32.xlu0 %v563, 64
        %v628 = vpop.permute.xlu0 %627
        %v630 = vsel %vm568, %v626, 0
        %vm632 = vcmask 1043456
        %v634 = vsel %vm632, %v628, 0
        %636 = vmatprep.subr.bf16.mxu0 0
        %637 = vmatpush1.bf16.msra.mxu0 0
        %638 = vmatprep.subr.bf16.mxu0 0
        %639 = vmatpush1.bf16.msra.mxu0 0
        %640 = vmatprep.subr.bf16.mxu0 0
        %641 = vmatpush1.bf16.msra.mxu0 0
        %642 = vmatprep.subr.bf16.mxu0 0
        %643 = vmatpush1.bf16.msra.mxu0 0
        %644 = vmatprep.subr.bf16.mxu0 0
        %645 = vmatpush1.bf16.msra.mxu0 0
        %646 = vmatprep.subr.bf16.mxu0 0
        %647 = vmatpush1.bf16.msra.mxu0 0
        %648 = vmatprep.subr.bf16.mxu0 0
        %649 = vmatpush1.bf16.msra.mxu0 0
        %650 = vmatprep.subr.bf16.mxu0 0
        %651 = vmatpush1.bf16.msra.mxu0 %v634
        %652 = vmatprep.subr.bf16.mxu0 0
        %653 = vmatpush2.bf16.msra.mxu0 0
        %654 = vmatprep.subr.bf16.mxu0 0
        %655 = vmatpush2.bf16.msra.mxu0 0
        %656 = vmatprep.subr.bf16.mxu0 0
        %657 = vmatpush2.bf16.msra.mxu0 0
        %658 = vmatprep.subr.bf16.mxu0 0
        %659 = vmatpush2.bf16.msra.mxu0 0
        %660 = vmatprep.subr.bf16.mxu0 0
        %661 = vmatpush2.bf16.msra.mxu0 0
        %662 = vmatprep.subr.bf16.mxu0 0
        %663 = vmatpush2.bf16.msra.mxu0 0
        %664 = vmatprep.subr.bf16.mxu0 0
        %665 = vmatpush2.bf16.msra.mxu0 0
        %666 = vmatprep.subr.bf16.mxu0 0
        %667 = vmatpush2.bf16.msra.mxu0 0
        %668 = vmatprep.mubr.bf16.mxu0 0
        %669 = vmatmul.mubr.bf16.gmra.mxu0 %v630
        %v670 = vpop.f32.mrf.mxu0
        %v671 = vadd.f32 0.0, %v670
        %v672 = vpop.f32.mrf.mxu0
        %v673 = vpop.f32.mrf.mxu0
        %v674 = vpop.f32.mrf.mxu0
        %675 = vdwg.mxu0
        %v676 = vpack.c.bf16 %v671, %v671
        %vm677 = vcmask 60416
        %678 = vst.msk [vmem:[#allocation2] sm:$0xf] %vm677, %v676
        %679 = vrot.lane.b32.xlu0 %v563, 120
        %v680 = vpop.permute.xlu0 %679
        %681 = vrot.lane.b32.xlu0 %v563, 88
        %v682 = vpop.permute.xlu0 %681
        %v684 = vsel %vm568, %v680, 0
        %v687 = vsel %vm568, %v682, 0
        %689 = vmatprep.subr.bf16.mxu0 0
        %690 = vmatpush1.bf16.xpose.msra.mxu0 0
        %691 = vmatprep.subr.bf16.mxu0 0
        %692 = vmatpush1.bf16.xpose.msra.mxu0 0
        %693 = vmatprep.subr.bf16.mxu0 0
        %694 = vmatpush1.bf16.xpose.msra.mxu0 0
        %695 = vmatprep.subr.bf16.mxu0 0
        %696 = vmatpush1.bf16.xpose.msra.mxu0 0
        %697 = vmatprep.subr.bf16.mxu0 0
        %698 = vmatpush1.bf16.xpose.msra.mxu0 0
        %699 = vmatprep.subr.bf16.mxu0 0
        %700 = vmatpush1.bf16.xpose.msra.mxu0 0
        %701 = vmatprep.subr.bf16.mxu0 0
        %702 = vmatpush1.bf16.xpose.msra.mxu0 0
        %703 = vmatprep.subr.bf16.mxu0 0
        %704 = vmatpush1.bf16.xpose.msra.mxu0 %v687
        %705 = vmatprep.subr.bf16.mxu0 0
        %706 = vmatpush2.bf16.xpose.msra.mxu0 0
        %707 = vmatprep.subr.bf16.mxu0 0
        %708 = vmatpush2.bf16.xpose.msra.mxu0 0
        %709 = vmatprep.subr.bf16.mxu0 0
        %710 = vmatpush2.bf16.xpose.msra.mxu0 0
        %711 = vmatprep.subr.bf16.mxu0 0
        %712 = vmatpush2.bf16.xpose.msra.mxu0 0
        %713 = vmatprep.subr.bf16.mxu0 0
        %714 = vmatpush2.bf16.xpose.msra.mxu0 0
        %715 = vmatprep.subr.bf16.mxu0 0
        %716 = vmatpush2.bf16.xpose.msra.mxu0 0
        %717 = vmatprep.subr.bf16.mxu0 0
        %718 = vmatpush2.bf16.xpose.msra.mxu0 0
        %719 = vmatprep.subr.bf16.mxu0 0
        %720 = vmatpush2.bf16.xpose.msra.mxu0 0
        %721 = vmatprep.mubr.bf16.mxu0 0
        %722 = vmatmul.mubr.bf16.gmra.mxu0 %v684
        %v723 = vpop.f32.mrf.mxu0
        %v724 = vadd.f32 %v564, %v723
        %v725 = vpop.f32.mrf.mxu0
        %v726 = vpop.f32.mrf.mxu0
        %v727 = vpop.f32.mrf.mxu0
        %728 = vdwg.mxu0
        %v729 = vsel %vm568, %v724, -inf
        %730 = vmax.xlane.f32.xlu0 %v729
        %v731 = vpop.xlane.xlu0 %730
        %v732 = vsub.f32 %v724, %v731
        %v733 = vmul.f32 %v732, 1.442695
        %v734 = vpow.pop %v733
        %v735 = vsel %vm568, %v734, 0.0
        %736 = vadd.xlane.f32.xlu0 %v735
        %v737 = vpop.xlane.xlu0 %736
        %v738 = vrcp.pop %v737
        %v739 = vmul.f32 %v734, %v738
        %v740 = vpack.c.bf16 %v739, %v739
        %741 = vrot.lane.b32.xlu0 %v563, 56
        %v742 = vpop.permute.xlu0 %741
        %v744 = vsel %vm568, %v740, 0
        %v747 = vsel %vm632, %v742, 0
        %749 = vmatprep.subr.bf16.mxu0 0
        %750 = vmatpush1.bf16.msra.mxu0 0
        %751 = vmatprep.subr.bf16.mxu0 0
        %752 = vmatpush1.bf16.msra.mxu0 0
        %753 = vmatprep.subr.bf16.mxu0 0
        %754 = vmatpush1.bf16.msra.mxu0 0
        %755 = vmatprep.subr.bf16.mxu0 0
        %756 = vmatpush1.bf16.msra.mxu0 0
        %757 = vmatprep.subr.bf16.mxu0 0
        %758 = vmatpush1.bf16.msra.mxu0 0
        %759 = vmatprep.subr.bf16.mxu0 0
        %760 = vmatpush1.bf16.msra.mxu0 0
        %761 = vmatprep.subr.bf16.mxu0 0
        %762 = vmatpush1.bf16.msra.mxu0 0
        %763 = vmatprep.subr.bf16.mxu0 0
        %764 = vmatpush1.bf16.msra.mxu0 %v747
        %765 = vmatprep.subr.bf16.mxu0 0
        %766 = vmatpush2.bf16.msra.mxu0 0
        %767 = vmatprep.subr.bf16.mxu0 0
        %768 = vmatpush2.bf16.msra.mxu0 0
        %769 = vmatprep.subr.bf16.mxu0 0
        %770 = vmatpush2.bf16.msra.mxu0 0
        %771 = vmatprep.subr.bf16.mxu0 0
        %772 = vmatpush2.bf16.msra.mxu0 0
        %773 = vmatprep.subr.bf16.mxu0 0
        %774 = vmatpush2.bf16.msra.mxu0 0
        %775 = vmatprep.subr.bf16.mxu0 0
        %776 = vmatpush2.bf16.msra.mxu0 0
        %777 = vmatprep.subr.bf16.mxu0 0
        %778 = vmatpush2.bf16.msra.mxu0 0
        %779 = vmatprep.subr.bf16.mxu0 0
        %780 = vmatpush2.bf16.msra.mxu0 0
        %781 = vmatprep.mubr.bf16.mxu0 0
        %782 = vmatmul.mubr.bf16.gmra.mxu0 %v744
        %v783 = vpop.f32.mrf.mxu0
        %v784 = vadd.f32 0.0, %v783
        %v785 = vpop.f32.mrf.mxu0
        %v786 = vpop.f32.mrf.mxu0
        %v787 = vpop.f32.mrf.mxu0
        %788 = vdwg.mxu0
        %v789 = vpack.c.bf16 %v784, %v784
        %v791 = vunpack.c.l.b16 %v789
        %v792 = vpack.c.b16 %v791, %v791
        %793 = vrot.lane.b32.xlu0 %v792, 8
        %v794 = vpop.permute.xlu0 %793
        %vm796 = vcmask 126016
        %797 = vst.msk [vmem:[#allocation2] sm:$0xf] %vm796, %v794
        %798 = vrot.lane.b32.xlu0 %v563, 112
        %v799 = vpop.permute.xlu0 %798
        %800 = vrot.lane.b32.xlu0 %v563, 80
        %v801 = vpop.permute.xlu0 %800
        %v803 = vsel %vm568, %v799, 0
        %v806 = vsel %vm568, %v801, 0
        %808 = vmatprep.subr.bf16.mxu0 0
        %809 = vmatpush1.bf16.xpose.msra.mxu0 0
        %810 = vmatprep.subr.bf16.mxu0 0
        %811 = vmatpush1.bf16.xpose.msra.mxu0 0
        %812 = vmatprep.subr.bf16.mxu0 0
        %813 = vmatpush1.bf16.xpose.msra.mxu0 0
        %814 = vmatprep.subr.bf16.mxu0 0
        %815 = vmatpush1.bf16.xpose.msra.mxu0 0
        %816 = vmatprep.subr.bf16.mxu0 0
        %817 = vmatpush1.bf16.xpose.msra.mxu0 0
        %818 = vmatprep.subr.bf16.mxu0 0
        %819 = vmatpush1.bf16.xpose.msra.mxu0 0
        %820 = vmatprep.subr.bf16.mxu0 0
        %821 = vmatpush1.bf16.xpose.msra.mxu0 0
        %822 = vmatprep.subr.bf16.mxu0 0
        %823 = vmatpush1.bf16.xpose.msra.mxu0 %v806
        %824 = vmatprep.subr.bf16.mxu0 0
        %825 = vmatpush2.bf16.xpose.msra.mxu0 0
        %826 = vmatprep.subr.bf16.mxu0 0
        %827 = vmatpush2.bf16.xpose.msra.mxu0 0
        %828 = vmatprep.subr.bf16.mxu0 0
        %829 = vmatpush2.bf16.xpose.msra.mxu0 0
        %830 = vmatprep.subr.bf16.mxu0 0
        %831 = vmatpush2.bf16.xpose.msra.mxu0 0
        %832 = vmatprep.subr.bf16.mxu0 0
        %833 = vmatpush2.bf16.xpose.msra.mxu0 0
        %834 = vmatprep.subr.bf16.mxu0 0
        %835 = vmatpush2.bf16.xpose.msra.mxu0 0
        %836 = vmatprep.subr.bf16.mxu0 0
        %837 = vmatpush2.bf16.xpose.msra.mxu0 0
        %838 = vmatprep.subr.bf16.mxu0 0
        %839 = vmatpush2.bf16.xpose.msra.mxu0 0
        %840 = vmatprep.mubr.bf16.mxu0 0
        %841 = vmatmul.mubr.bf16.gmra.mxu0 %v803
        %v842 = vpop.f32.mrf.mxu0
        %v843 = vadd.f32 %v564, %v842
        %v844 = vpop.f32.mrf.mxu0
        %v845 = vpop.f32.mrf.mxu0
        %v846 = vpop.f32.mrf.mxu0
        %847 = vdwg.mxu0
        %v848 = vsel %vm568, %v843, -inf
        %849 = vmax.xlane.f32.xlu0 %v848
        %v850 = vpop.xlane.xlu0 %849
        %v851 = vsub.f32 %v843, %v850
        %v852 = vmul.f32 %v851, 1.442695
        %v853 = vpow.pop %v852
        %v854 = vsel %vm568, %v853, 0.0
        %855 = vadd.xlane.f32.xlu0 %v854
        %v856 = vpop.xlane.xlu0 %855
        %v857 = vrcp.pop %v856
        %v858 = vmul.f32 %v853, %v857
        %v859 = vpack.c.bf16 %v858, %v858
        %860 = vrot.lane.b32.xlu0 %v563, 48
        %v861 = vpop.permute.xlu0 %860
        %v863 = vsel %vm568, %v859, 0
        %v866 = vsel %vm632, %v861, 0
        %868 = vmatprep.subr.bf16.mxu0 0
        %869 = vmatpush1.bf16.msra.mxu0 0
        %870 = vmatprep.subr.bf16.mxu0 0
        %871 = vmatpush1.bf16.msra.mxu0 0
        %872 = vmatprep.subr.bf16.mxu0 0
        %873 = vmatpush1.bf16.msra.mxu0 0
        %874 = vmatprep.subr.bf16.mxu0 0
        %875 = vmatpush1.bf16.msra.mxu0 0
        %876 = vmatprep.subr.bf16.mxu0 0
        %877 = vmatpush1.bf16.msra.mxu0 0
        %878 = vmatprep.subr.bf16.mxu0 0
        %879 = vmatpush1.bf16.msra.mxu0 0
        %880 = vmatprep.subr.bf16.mxu0 0
        %881 = vmatpush1.bf16.msra.mxu0 0
        %882 = vmatprep.subr.bf16.mxu0 0
        %883 = vmatpush1.bf16.msra.mxu0 %v866
        %884 = vmatprep.subr.bf16.mxu0 0
        %885 = vmatpush2.bf16.msra.mxu0 0
        %886 = vmatprep.subr.bf16.mxu0 0
        %887 = vmatpush2.bf16.msra.mxu0 0
        %888 = vmatprep.subr.bf16.mxu0 0
        %889 = vmatpush2.bf16.msra.mxu0 0
        %890 = vmatprep.subr.bf16.mxu0 0
        %891 = vmatpush2.bf16.msra.mxu0 0
        %892 = vmatprep.subr.bf16.mxu0 0
        %893 = vmatpush2.bf16.msra.mxu0 0
        %894 = vmatprep.subr.bf16.mxu0 0
        %895 = vmatpush2.bf16.msra.mxu0 0
        %896 = vmatprep.subr.bf16.mxu0 0
        %897 = vmatpush2.bf16.msra.mxu0 0
        %898 = vmatprep.subr.bf16.mxu0 0
        %899 = vmatpush2.bf16.msra.mxu0 0
        %900 = vmatprep.mubr.bf16.mxu0 0
        %901 = vmatmul.mubr.bf16.gmra.mxu0 %v863
        %v902 = vpop.f32.mrf.mxu0
        %v903 = vadd.f32 0.0, %v902
        %v904 = vpop.f32.mrf.mxu0
        %v905 = vpop.f32.mrf.mxu0
        %v906 = vpop.f32.mrf.mxu0
        %907 = vdwg.mxu0
        %v908 = vpack.c.bf16 %v903, %v903
        %v910 = vunpack.c.l.b16 %v908
        %v911 = vpack.c.b16 %v910, %v910
        %912 = vrot.lane.b32.xlu0 %v911, 16
        %v913 = vpop.permute.xlu0 %912
        %vm915 = vcmask 191616
        %916 = vst.msk [vmem:[#allocation2] sm:$0xf] %vm915, %v913
        %917 = vrot.lane.b32.xlu0 %v563, 104
        %v918 = vpop.permute.xlu0 %917
        %919 = vrot.lane.b32.xlu0 %v563, 72
        %v920 = vpop.permute.xlu0 %919
        %v922 = vsel %vm568, %v918, 0
        %v925 = vsel %vm568, %v920, 0
        %927 = vmatprep.subr.bf16.mxu0 0
        %928 = vmatpush1.bf16.xpose.msra.mxu0 0
        %929 = vmatprep.subr.bf16.mxu0 0
        %930 = vmatpush1.bf16.xpose.msra.mxu0 0
        %931 = vmatprep.subr.bf16.mxu0 0
        %932 = vmatpush1.bf16.xpose.msra.mxu0 0
        %933 = vmatprep.subr.bf16.mxu0 0
        %934 = vmatpush1.bf16.xpose.msra.mxu0 0
        %935 = vmatprep.subr.bf16.mxu0 0
        %936 = vmatpush1.bf16.xpose.msra.mxu0 0
        %937 = vmatprep.subr.bf16.mxu0 0
        %938 = vmatpush1.bf16.xpose.msra.mxu0 0
        %939 = vmatprep.subr.bf16.mxu0 0
        %940 = vmatpush1.bf16.xpose.msra.mxu0 0
        %941 = vmatprep.subr.bf16.mxu0 0
        %942 = vmatpush1.bf16.xpose.msra.mxu0 %v925
        %943 = vmatprep.subr.bf16.mxu0 0
        %944 = vmatpush2.bf16.xpose.msra.mxu0 0
        %945 = vmatprep.subr.bf16.mxu0 0
        %946 = vmatpush2.bf16.xpose.msra.mxu0 0
        %947 = vmatprep.subr.bf16.mxu0 0
        %948 = vmatpush2.bf16.xpose.msra.mxu0 0
        %949 = vmatprep.subr.bf16.mxu0 0
        %950 = vmatpush2.bf16.xpose.msra.mxu0 0
        %951 = vmatprep.subr.bf16.mxu0 0
        %952 = vmatpush2.bf16.xpose.msra.mxu0 0
        %953 = vmatprep.subr.bf16.mxu0 0
        %954 = vmatpush2.bf16.xpose.msra.mxu0 0
        %955 = vmatprep.subr.bf16.mxu0 0
        %956 = vmatpush2.bf16.xpose.msra.mxu0 0
        %957 = vmatprep.subr.bf16.mxu0 0
        %958 = vmatpush2.bf16.xpose.msra.mxu0 0
        %959 = vmatprep.mubr.bf16.mxu0 0
        %960 = vmatmul.mubr.bf16.gmra.mxu0 %v922
        %v961 = vpop.f32.mrf.mxu0
        %v962 = vadd.f32 %v564, %v961
        %v963 = vpop.f32.mrf.mxu0
        %v964 = vpop.f32.mrf.mxu0
        %v965 = vpop.f32.mrf.mxu0
        %966 = vdwg.mxu0
        %v967 = vsel %vm568, %v962, -inf
        %968 = vmax.xlane.f32.xlu0 %v967
        %v969 = vpop.xlane.xlu0 %968
        %v970 = vsub.f32 %v962, %v969
        %v971 = vmul.f32 %v970, 1.442695
        %v972 = vpow.pop %v971
        %v973 = vsel %vm568, %v972, 0.0
        %974 = vadd.xlane.f32.xlu0 %v973
        %v975 = vpop.xlane.xlu0 %974
        %v976 = vrcp.pop %v975
        %v977 = vmul.f32 %v972, %v976
        %v978 = vpack.c.bf16 %v977, %v977
        %979 = vrot.lane.b32.xlu0 %v563, 40
        %v980 = vpop.permute.xlu0 %979
        %v982 = vsel %vm568, %v978, 0
        %v985 = vsel %vm632, %v980, 0
        %987 = vmatprep.subr.bf16.mxu0 0
        %988 = vmatpush1.bf16.msra.mxu0 0
        %989 = vmatprep.subr.bf16.mxu0 0
        %990 = vmatpush1.bf16.msra.mxu0 0
        %991 = vmatprep.subr.bf16.mxu0 0
        %992 = vmatpush1.bf16.msra.mxu0 0
        %993 = vmatprep.subr.bf16.mxu0 0
        %994 = vmatpush1.bf16.msra.mxu0 0
        %995 = vmatprep.subr.bf16.mxu0 0
        %996 = vmatpush1.bf16.msra.mxu0 0
        %997 = vmatprep.subr.bf16.mxu0 0
        %998 = vmatpush1.bf16.msra.mxu0 0
        %999 = vmatprep.subr.bf16.mxu0 0
        %1000 = vmatpush1.bf16.msra.mxu0 0
        %1001 = vmatprep.subr.bf16.mxu0 0
        %1002 = vmatpush1.bf16.msra.mxu0 %v985
        %1003 = vmatprep.subr.bf16.mxu0 0
        %1004 = vmatpush2.bf16.msra.mxu0 0
        %1005 = vmatprep.subr.bf16.mxu0 0
        %1006 = vmatpush2.bf16.msra.mxu0 0
        %1007 = vmatprep.subr.bf16.mxu0 0
        %1008 = vmatpush2.bf16.msra.mxu0 0
        %1009 = vmatprep.subr.bf16.mxu0 0
        %1010 = vmatpush2.bf16.msra.mxu0 0
        %1011 = vmatprep.subr.bf16.mxu0 0
        %1012 = vmatpush2.bf16.msra.mxu0 0
        %1013 = vmatprep.subr.bf16.mxu0 0
        %1014 = vmatpush2.bf16.msra.mxu0 0
        %1015 = vmatprep.subr.bf16.mxu0 0
        %1016 = vmatpush2.bf16.msra.mxu0 0
        %1017 = vmatprep.subr.bf16.mxu0 0
        %1018 = vmatpush2.bf16.msra.mxu0 0
        %1019 = vmatprep.mubr.bf16.mxu0 0
        %1020 = vmatmul.mubr.bf16.gmra.mxu0 %v982
        %v1021 = vpop.f32.mrf.mxu0
        %v1022 = vadd.f32 0.0, %v1021
        %v1023 = vpop.f32.mrf.mxu0
        %v1024 = vpop.f32.mrf.mxu0
        %v1025 = vpop.f32.mrf.mxu0
        %1026 = vdwg.mxu0
        %v1027 = vpack.c.bf16 %v1022, %v1022
        %v1029 = vunpack.c.l.b16 %v1027
        %v1030 = vpack.c.b16 %v1029, %v1029
        %1031 = vrot.lane.b32.xlu0 %v1030, 24
        %v1032 = vpop.permute.xlu0 %1031
        %vm1034 = vcmask 257216
        %1035 = vst.msk [vmem:[#allocation2] sm:$0xf] %vm1034, %v1032
        %v1036 = vld [vmem:[#allocation2] sm:$0xf]
        %v1037 = vld [vmem:[%s6] sm:$0xf]
        %v1038 = vld [vmem:[%s6 + $0x4] sm:$0xf]
        %v1039 = vld [vmem:[%s6 + $0x8] sm:$0xf]
        %v1040 = vld [vmem:[%s6 + $0xc] sm:$0xf]
        %v1041 = vld [vmem:[%s7] sm:$0x1]
        %v1043 = vlaneseq
        %v1044 = vshrl.u32 %v1043, 7
        %v1045 = vsub.s32 0, %v1044
        %v1046 = vrot.slane %v1041, %v1045
        %v1052 = vunpack.c.l.b16 %v1037
        %v1053 = vunpack.c.l.b16 %v1038
        %v1054 = vunpack.c.l.b16 %v1039
        %v1055 = vunpack.c.l.b16 %v1040
        %v1056 = vpack.c.b16 %v1053, %v1052
        %v1057 = vpack.c.b16 %v1055, %v1054
        %v1061 = vsel %vm467, %v1036, 0
        %1063 = vmatprep.subr.bf16.mxu0 0
        %1064 = vmatpush1.bf16.msra.mxu0 0
        %1065 = vmatprep.subr.bf16.mxu0 0
        %1066 = vmatpush1.bf16.msra.mxu0 0
        %1067 = vmatprep.subr.bf16.mxu0 0
        %1068 = vmatpush1.bf16.msra.mxu0 0
        %1069 = vmatprep.subr.bf16.mxu0 0
        %1070 = vmatpush1.bf16.msra.mxu0 0
        %1071 = vmatprep.subr.bf16.mxu0 0
        %1072 = vmatpush1.bf16.msra.mxu0 0
        %1073 = vmatprep.subr.bf16.mxu0 0
        %1074 = vmatpush1.bf16.msra.mxu0 0
        %1075 = vmatprep.subr.bf16.mxu0 0
        %1076 = vmatpush1.bf16.msra.mxu0 %v1057
        %1077 = vmatprep.subr.bf16.mxu0 0
        %1078 = vmatpush1.bf16.msra.mxu0 %v1056
        %1079 = vmatprep.subr.bf16.mxu0 0
        %1080 = vmatpush2.bf16.msra.mxu0 0
        %1081 = vmatprep.subr.bf16.mxu0 0
        %1082 = vmatpush2.bf16.msra.mxu0 0
        %1083 = vmatprep.subr.bf16.mxu0 0
        %1084 = vmatpush2.bf16.msra.mxu0 0
        %1085 = vmatprep.subr.bf16.mxu0 0
        %1086 = vmatpush2.bf16.msra.mxu0 0
        %1087 = vmatprep.subr.bf16.mxu0 0
        %1088 = vmatpush2.bf16.msra.mxu0 0
        %1089 = vmatprep.subr.bf16.mxu0 0
        %1090 = vmatpush2.bf16.msra.mxu0 0
        %1091 = vmatprep.subr.bf16.mxu0 0
        %1092 = vmatpush2.bf16.msra.mxu0 0
        %1093 = vmatprep.subr.bf16.mxu0 0
        %1094 = vmatpush2.bf16.msra.mxu0 0
        %1095 = vmatprep.mubr.bf16.mxu0 0
        %1096 = vmatmul.mubr.bf16.gmra.mxu0 %v1061
        %v1097 = vpop.f32.mrf.mxu0
        %v1098 = vadd.f32 %v1046, %v1097
        %v1099 = vpop.f32.mrf.mxu0
        %v1100 = vpop.f32.mrf.mxu0
        %v1101 = vpop.f32.mrf.mxu0
        %1102 = vdwg.mxu0
        %v1103 = vadd.f32 %v464, %v1098
        %v1104 = vld [vmem:[%s8] sm:$0x1]
        %v1105 = vld [vmem:[%s9] sm:$0x1]
        %v1106 = vsel %vm467, %v1103, 0.0
        %1107 = vadd.xlane.f32.xlu0 %v1106
        %v1108 = vpop.xlane.xlu0 %1107
        %v1109 = vmul.f32 %v1108, %v471
        %v1110 = vsub.f32 %v1103, %v1109
        %v1111 = vmul.f32 %v1110, %v1110
        %v1112 = vsel %vm467, %v1111, 0.0
        %1113 = vadd.xlane.f32.xlu0 %v1112
        %v1114 = vpop.xlane.xlu0 %1113
        %v1115 = vmul.f32 %v1114, %v471
        %v1116 = vadd.f32 %v1115, 1e-05
        %v1117 = vrsqrt.pop %v1116
        %v1118 = vmul.f32 %v1110, %v1117
        %v1120 = vlaneseq
        %v1121 = vshrl.u32 %v1120, 7
        %v1122 = vsub.s32 0, %v1121
        %v1123 = vrot.slane %v1104, %v1122
        %v1125 = vmul.f32 %v1118, %v1123
        %v1127 = vlaneseq
        %v1128 = vshrl.u32 %v1127, 7
        %v1129 = vsub.s32 0, %v1128
        %v1130 = vrot.slane %v1105, %v1129
        %v1132 = vadd.f32 %v1125, %v1130
        %v1133 = vpack.c.bf16 %v1132, %v1132
        %v1134 = vld [vmem:[%s10] sm:$0xf]
        %v1135 = vld [vmem:[%s10 + $0x4] sm:$0xf]
        %v1136 = vld [vmem:[%s10 + $0x8] sm:$0xf]
        %v1137 = vld [vmem:[%s10 + $0xc] sm:$0xf]
        %v1138 = vld [vmem:[%s11] sm:$0x1]
        %v1140 = vlaneseq
        %v1141 = vshrl.u32 %v1140, 7
        %v1142 = vsub.s32 0, %v1141
        %v1143 = vrot.slane %v1138, %v1142
        %v1149 = vunpack.c.l.b16 %v1134
        %v1150 = vunpack.c.l.b16 %v1135
        %v1151 = vunpack.c.l.b16 %v1136
        %v1152 = vunpack.c.l.b16 %v1137
        %v1153 = vpack.c.b16 %v1150, %v1149
        %v1154 = vpack.c.b16 %v1152, %v1151
        %v1158 = vsel %vm467, %v1133, 0
        %1160 = vmatprep.subr.bf16.mxu0 0
        %1161 = vmatpush1.bf16.msra.mxu0 0
        %1162 = vmatprep.subr.bf16.mxu0 0
        %1163 = vmatpush1.bf16.msra.mxu0 0
        %1164 = vmatprep.subr.bf16.mxu0 0
        %1165 = vmatpush1.bf16.msra.mxu0 0
        %1166 = vmatprep.subr.bf16.mxu0 0
        %1167 = vmatpush1.bf16.msra.mxu0 0
        %1168 = vmatprep.subr.bf16.mxu0 0
        %1169 = vmatpush1.bf16.msra.mxu0 0
        %1170 = vmatprep.subr.bf16.mxu0 0
        %1171 = vmatpush1.bf16.msra.mxu0 0
        %1172 = vmatprep.subr.bf16.mxu0 0
        %1173 = vmatpush1.bf16.msra.mxu0 %v1154
        %1174 = vmatprep.subr.bf16.mxu0 0
        %1175 = vmatpush1.bf16.msra.mxu0 %v1153
        %1176 = vmatprep.subr.bf16.mxu0 0
        %1177 = vmatpush2.bf16.msra.mxu0 0
        %1178 = vmatprep.subr.bf16.mxu0 0
        %1179 = vmatpush2.bf16.msra.mxu0 0
        %1180 = vmatprep.subr.bf16.mxu0 0
        %1181 = vmatpush2.bf16.msra.mxu0 0
        %1182 = vmatprep.subr.bf16.mxu0 0
        %1183 = vmatpush2.bf16.msra.mxu0 0
        %1184 = vmatprep.subr.bf16.mxu0 0
        %1185 = vmatpush2.bf16.msra.mxu0 0
        %1186 = vmatprep.subr.bf16.mxu0 0
        %1187 = vmatpush2.bf16.msra.mxu0 0
        %1188 = vmatprep.subr.bf16.mxu0 0
        %1189 = vmatpush2.bf16.msra.mxu0 0
        %1190 = vmatprep.subr.bf16.mxu0 0
        %1191 = vmatpush2.bf16.msra.mxu0 0
        %1192 = vmatprep.mubr.bf16.mxu0 0
        %1193 = vmatmul.mubr.bf16.gmra.mxu0 %v1158
        %v1194 = vpop.f32.mrf.mxu0
        %v1195 = vadd.f32 %v1143, %v1194
        %v1196 = vpop.f32.mrf.mxu0
        %v1197 = vpop.f32.mrf.mxu0
        %v1198 = vpop.f32.mrf.mxu0
        %1199 = vdwg.mxu0
        %v1200 = vmul.f32 %v1195, 1.702
        %v1201 = vxor.u32 %v1200, 2147483648
        %v1202 = vmul.f32 %v1201, 1.442695
        %v1203 = vpow.pop %v1202
        %v1204 = vadd.f32 %v1203, 1.0
        %v1205 = vrcp.pop %v1204
        %v1206 = vmul.f32 1.0, %v1205
        %v1207 = vmul.f32 %v1195, %v1206
        %v1208 = vpack.c.bf16 %v1207, %v1207
        %v1209 = vld [vmem:[%s12] sm:$0xf]
        %v1210 = vld [vmem:[%s12 + $0x4] sm:$0xf]
        %v1211 = vld [vmem:[%s12 + $0x8] sm:$0xf]
        %v1212 = vld [vmem:[%s12 + $0xc] sm:$0xf]
        %v1213 = vld [vmem:[%s12 + $0x10] sm:$0xf]
        %v1214 = vld [vmem:[%s12 + $0x14] sm:$0xf]
        %v1215 = vld [vmem:[%s12 + $0x18] sm:$0xf]
        %v1216 = vld [vmem:[%s12 + $0x1c] sm:$0xf]
        %v1217 = vld [vmem:[%s12 + $0x20] sm:$0xf]
        %v1218 = vld [vmem:[%s12 + $0x24] sm:$0xf]
        %v1219 = vld [vmem:[%s12 + $0x28] sm:$0xf]
        %v1220 = vld [vmem:[%s12 + $0x2c] sm:$0xf]
        %v1221 = vld [vmem:[%s12 + $0x30] sm:$0xf]
        %v1222 = vld [vmem:[%s12 + $0x34] sm:$0xf]
        %v1223 = vld [vmem:[%s12 + $0x38] sm:$0xf]
        %v1224 = vld [vmem:[%s12 + $0x3c] sm:$0xf]
        %v1225 = vld [vmem:[%s13] sm:$0x1]
        %v1227 = vlaneseq
        %v1228 = vshrl.u32 %v1227, 7
        %v1229 = vsub.s32 0, %v1228
        %v1230 = vrot.slane %v1225, %v1229
        %v1248 = vunpack.c.l.b16 %v1209
        %v1249 = vunpack.c.l.b16 %v1210
        %v1250 = vunpack.c.l.b16 %v1211
        %v1251 = vunpack.c.l.b16 %v1212
        %v1252 = vunpack.c.l.b16 %v1213
        %v1253 = vunpack.c.l.b16 %v1214
        %v1254 = vunpack.c.l.b16 %v1215
        %v1255 = vunpack.c.l.b16 %v1216
        %v1256 = vunpack.c.l.b16 %v1217
        %v1257 = vunpack.c.l.b16 %v1218
        %v1258 = vunpack.c.l.b16 %v1219
        %v1259 = vunpack.c.l.b16 %v1220
        %v1260 = vunpack.c.l.b16 %v1221
        %v1261 = vunpack.c.l.b16 %v1222
        %v1262 = vunpack.c.l.b16 %v1223
        %v1263 = vunpack.c.l.b16 %v1224
        %v1264 = vpack.c.b16 %v1249, %v1248
        %v1265 = vpack.c.b16 %v1251, %v1250
        %v1266 = vpack.c.b16 %v1253, %v1252
        %v1267 = vpack.c.b16 %v1255, %v1254
        %v1268 = vpack.c.b16 %v1257, %v1256
        %v1269 = vpack.c.b16 %v1259, %v1258
        %v1270 = vpack.c.b16 %v1261, %v1260
        %v1271 = vpack.c.b16 %v1263, %v1262
        %1280 = vmatprep.subr.bf16.mxu0 0
        %1281 = vmatpush1.bf16.msra.mxu0 %v1271
        %1282 = vmatprep.subr.bf16.mxu0 0
        %1283 = vmatpush1.bf16.msra.mxu0 %v1270
        %1284 = vmatprep.subr.bf16.mxu0 0
        %1285 = vmatpush1.bf16.msra.mxu0 %v1269
        %1286 = vmatprep.subr.bf16.mxu0 0
        %1287 = vmatpush1.bf16.msra.mxu0 %v1268
        %1288 = vmatprep.subr.bf16.mxu0 0
        %1289 = vmatpush1.bf16.msra.mxu0 %v1267
        %1290 = vmatprep.subr.bf16.mxu0 0
        %1291 = vmatpush1.bf16.msra.mxu0 %v1266
        %1292 = vmatprep.subr.bf16.mxu0 0
        %1293 = vmatpush1.bf16.msra.mxu0 %v1265
        %1294 = vmatprep.subr.bf16.mxu0 0
        %1295 = vmatpush1.bf16.msra.mxu0 %v1264
        %1296 = vmatprep.subr.bf16.mxu0 0
        %1297 = vmatpush2.bf16.msra.mxu0 0
        %1298 = vmatprep.subr.bf16.mxu0 0
        %1299 = vmatpush2.bf16.msra.mxu0 0
        %1300 = vmatprep.subr.bf16.mxu0 0
        %1301 = vmatpush2.bf16.msra.mxu0 0
        %1302 = vmatprep.subr.bf16.mxu0 0
        %1303 = vmatpush2.bf16.msra.mxu0 0
        %1304 = vmatprep.subr.bf16.mxu0 0
        %1305 = vmatpush2.bf16.msra.mxu0 0
        %1306 = vmatprep.subr.bf16.mxu0 0
        %1307 = vmatpush2.bf16.msra.mxu0 0
        %1308 = vmatprep.subr.bf16.mxu0 0
        %1309 = vmatpush2.bf16.msra.mxu0 0
        %1310 = vmatprep.subr.bf16.mxu0 0
        %1311 = vmatpush2.bf16.msra.mxu0 0
        %1312 = vmatprep.mubr.bf16.mxu0 0
        %1313 = vmatmul.mubr.bf16.gmra.mxu0 %v1208
        %v1314 = vpop.f32.mrf.mxu0
        %v1315 = vadd.f32 %v1230, %v1314
        %v1316 = vpop.f32.mrf.mxu0
        %v1317 = vpop.f32.mrf.mxu0
        %v1318 = vpop.f32.mrf.mxu0
        %1319 = vdwg.mxu0
        %v1320 = vadd.f32 %v1103, %v1315
        %1321 = vst.msk [vmem:[%s458] sm:$0xff] %vm467, %v1320
        %s1322 = sand.u32 %s335, 1
        %s1323 = scalar_lea.sflag [#allocation4], %s1322
        %s1324 = sand.u32 %s335, 1
        %s1325 = smul.addr %s1324, 8
        %s1326 = scalar_lea.vmem [#allocation3], %s1325
        // Predicated region
        $region77: #{tpu_custom_call.1} parent=75 // pred_check
          %p1327 = pneg %p345
        $region78: #{tpu_custom_call.1} parent=75 // pred_check_branch
          %1329 = sbr.rel (%p1327) target = $region80
        $region79: #{tpu_custom_call.1} parent=75 // pred_region
          %s1331 = ssub.s32 128, 128
          %1332 = vsyncadd %s1323, %s1331
          %s1333 = smul.addr %s28, 128
          %s1334 = scalar_lea.hbm %s14, %s1333
          %s1336 = sshll.u32 %s1326, 4
          %s1337 = int_to_ptr.vmem [resolvable:$true] %s1336
          %1339 = dma.vmem_to_hbm [thread:$0]  %s1337, 128, %s1334, %s1323
        $region80: #{tpu_custom_call.1} parent=75 // pred_fallthru
          _
      $region76: #{tpu_custom_call.1} parent=5 // pred_fallthru
        _
      %p1340 = scmp.le.s32.totalorder 2, %s23
      // Predicated region
      $region81: #{tpu_custom_call.1} parent=5 // pred_check
        %p1341 = pneg %p1340
      $region82: #{tpu_custom_call.1} parent=5 // pred_check_branch
        %1343 = sbr.rel (%p1341) target = $region84
      $region83: #{tpu_custom_call.1} parent=5 // pred_region
        %s1344 = ssub.s32 %s23, 2
        // Predicated region
        $region85: #{tpu_custom_call.1} parent=83 // pred_check
          %p1345 = pneg %p351
        $region86: #{tpu_custom_call.1} parent=83 // pred_check_branch
          %1347 = sbr.rel (%p1345) target = $region88
        $region87: #{tpu_custom_call.1} parent=83 // pred_region
          %s1348 = sand.u32 %s336, 1
          %s1349 = scalar_lea.sflag [#allocation4], %s1348
          %s1350 = sand.u32 %s336, 1
          %s1351 = smul.addr %s1350, 8
          %s1352 = scalar_lea.vmem [#allocation3], %s1351
          %1353 = dma.done %s1349, 128
        $region88: #{tpu_custom_call.1} parent=83 // pred_fallthru
          _
      $region84: #{tpu_custom_call.1} parent=5 // pred_fallthru
        _
    $region6: #{tpu_custom_call.1} parent=1 // loop_footer
      %s27 = sadd.s32 1, %s23
    $region7: #{tpu_custom_call.1} parent=1 // loop_footer_branch
      %22 = sbr.rel target = $region3
    $region8: #{tpu_custom_call.1} parent=1 // loop_exit
      _
    %1354 = vsyncpa [#allocation4], 1
    %s1355 = scalar_lea.sflag [#allocation4], 1
    %1356 = vsyncpa %s1355, 1

</llo_original>
